<compile_context>
chip_gen: v7x
topology: tpu7x:2x2x1
jax: 0.10.0
libtpu: 0.0.40
codegen_flags: <defaults>
</compile_context>

<pallas_src>
import functools

import jax
import jax.numpy as jnp
from jax.experimental import pallas as pl
from jax.experimental.pallas import tpu as pltpu


def _round_up(x, m):
    return ((x + m - 1) // m) * m


# ----------------------------------------------------------------------------
# Fused kernel: layer1 fwd+bwd, layer2 fwd+bwd, emits final layer-2 hidden.
# ----------------------------------------------------------------------------
def _bilstm_encoder_kernel(
        x_ref,          # (T*Bp, F)      bf16  time-major row blocks of Bp
        w_ih1_ref,      # (F, 4*DH1)     bf16  both dirs packed per 128-lane gate group
        b1_ref,         # (1, 4*DH1)     bf16
        w_hh1_ref,      # (DH1, 4*DH1)   bf16  block-diagonal (fwd rows->fwd cols, bwd rows->bwd cols)
        w_ih2_ref,      # (DH1, 4*DH2)   bf16  over packed bidirectional layer-1 output
        b2_ref,         # (1, 4*DH2)     bf16
        w_hh2_ref,      # (DH2, 4*DH2)   bf16
        emb_ref,        # (Bp, DH2)      f32   final layer-2 hidden: lanes [0:H2] fwd, [H2:2H2] bwd
        xw1_sc,         # (T*Bp, 4*DH1)  bf16  layer-1 gate preacts, per-direction time-combined
        out1_sc,        # (T*Bp, DH1)    bf16  layer-1 output, time-aligned [h1_f(t) | h1_b(t)]
        xw2_sc,         # (T*Bp, 4*DH2)  bf16
        *, T, Bp, H1, H2):
    f32, bf16 = jnp.float32, jnp.bfloat16
    DH1 = w_hh1_ref.shape[0]
    DH2 = w_hh2_ref.shape[0]

    # Lane masks (built once): within each DH-wide gate group, fwd occupies [0:H).
    lane1 = jax.lax.broadcasted_iota(jnp.int32, (Bp, DH1), 1)          # (Bp, DH1)
    m1 = lane1 < H1
    mask_g1 = jnp.concatenate([lane1, lane1, lane1, lane1], axis=1) < H1   # (Bp, 4*DH1)
    lane2 = jax.lax.broadcasted_iota(jnp.int32, (Bp, DH2), 1)
    mask_g2 = jnp.concatenate([lane2, lane2, lane2, lane2], axis=1) < H2   # (Bp, 4*DH2)

    def combine(p, mask, t):
        # Row-block t gets fwd gates of time t and bwd gates of time T-1-t.
        a = p[t * Bp:(t + 1) * Bp, :]
        b = p[(T - 1 - t) * Bp:(T - t) * Bp, :]
        return jnp.where(mask, a, b)

    def recurrence(xw_sc, w_hh_ref, DH):
        """Fused bidirectional LSTM chain: one MXU dot + one gate block per step."""
        w_hh = w_hh_ref[...]                       # hoisted constant RHS (not re-fetched per step)
        h = jnp.zeros((Bp, DH), f32)
        c = jnp.zeros((Bp, DH), f32)
        hs = []
        for s in range(T):                          # full static unroll (T small & static)
            gates = (xw_sc[pl.ds(s * Bp, Bp), :].astype(f32)
                     + jnp.dot(h.astype(bf16), w_hh, preferred_element_type=f32))
            i_g = jax.nn.sigmoid(gates[:, 0 * DH:1 * DH])
            f_g = jax.nn.sigmoid(gates[:, 1 * DH:2 * DH])
            g_g = jnp.tanh(gates[:, 2 * DH:3 * DH])
            o_g = jax.nn.sigmoid(gates[:, 3 * DH:4 * DH])
            c = f_g * c + i_g * g_g
            h = o_g * jnp.tanh(c)
            hs.append(h)
        return hs

    # ---- layer 1 -------------------------------------------------------------
    # ONE input-projection matmul for both directions (bias folded in).
    p1 = jnp.dot(x_ref[...], w_ih1_ref[...], preferred_element_type=f32) + b1_ref[...]
    for t in range(T):
        xw1_sc[pl.ds(t * Bp, Bp), :] = combine(p1, mask_g1, t).astype(bf16)

    hs1 = recurrence(xw1_sc, w_hh1_ref, DH1)
    # Time-align the bwd half for layer 2: row-block t = [h1_fwd(t) | h1_bwd(t)].
    for t in range(T):
        out1_sc[pl.ds(t * Bp, Bp), :] = jnp.where(m1, hs1[t], hs1[T - 1 - t]).astype(bf16)

    # ---- layer 2 -------------------------------------------------------------
    # ONE K=DH1 matmul over the packed bidirectional layer-1 output, both dirs.
    p2 = jnp.dot(out1_sc[...], w_ih2_ref[...], preferred_element_type=f32) + b2_ref[...]
    for t in range(T):
        xw2_sc[pl.ds(t * Bp, Bp), :] = combine(p2, mask_g2, t).astype(bf16)

    hs2 = recurrence(xw2_sc, w_hh2_ref, DH2)
    # After step T-1: fwd has consumed time T-1 and bwd has consumed time 0 -> both final.
    emb_ref[...] = hs2[T - 1]


def bilstm_encoder_pallas(x2d, kp, *, T, Bp):
    """x2d: (T*Bp, F) bf16, time-major row blocks of Bp (batch padded to 8 sublanes)."""
    H1, H2 = kp["H1"], kp["H2"]
    DH1 = kp["w_hh1"].shape[0]
    DH2 = kp["w_hh2"].shape[0]

    operands = (x2d, kp["w_ih1"], kp["b1"], kp["w_hh1"],
                kp["w_ih2"], kp["b2"], kp["w_hh2"])

    def full_spec(a):
        return pl.BlockSpec(a.shape, lambda *_: (0,) * a.ndim)

    kernel = functools.partial(_bilstm_encoder_kernel, T=T, Bp=Bp, H1=H1, H2=H2)

    return pl.pallas_call(
        kernel,
        out_shape=jax.ShapeDtypeStruct((Bp, DH2), jnp.float32),
        in_specs=[full_spec(a) for a in operands],
        out_specs=pl.BlockSpec((Bp, DH2), lambda *_: (0, 0)),
        scratch_shapes=[
            pltpu.VMEM((T * Bp, 4 * DH1), jnp.bfloat16),   # layer-1 gate preacts (combined)
            pltpu.VMEM((T * Bp, DH1), jnp.bfloat16),       # layer-1 bidirectional output
            pltpu.VMEM((T * Bp, 4 * DH2), jnp.bfloat16),   # layer-2 gate preacts (combined)
        ],
    )(*operands)


# ----------------------------------------------------------------------------
# Weight packing: torch layout -> transposed, direction-fused, bf16
# ----------------------------------------------------------------------------
def _pack_gate_cols(w_t, H, DH, dir_off):
    """(rows, 4*H) gate-major [i|f|g|o] -> (rows, 4*DH), gate k placed at
    columns [k*DH + dir_off : k*DH + dir_off + H]; all other columns zero."""
    rows = w_t.shape[0]
    out = jnp.zeros((rows, 4 * DH), w_t.dtype)
    for k in range(4):
        out = out.at[:, k * DH + dir_off:k * DH + dir_off + H].set(
            w_t[:, k * H:(k + 1) * H])
    return out


def pack_kernel_params(p1f, p1b, p2f, p2b, h1, h2):
    dh1 = _round_up(2 * h1, 128)      # packed layer-1 hidden width (fwd | bwd | pad)
    dh2 = _round_up(2 * h2, 128)

    def fuse_layer(pf, pb, in_rows, H, DH):
        w_ih = (_pack_gate_cols(pf["w_ih"].T, H, DH, 0)
                + _pack_gate_cols(pb["w_ih"].T, H, DH, H))            # (in_dim, 4*DH)
        w_ih = jnp.pad(w_ih, ((0, in_rows - w_ih.shape[0]), (0, 0)))
        b = (_pack_gate_cols((pf["b_ih"] + pf["b_hh"])[None, :], H, DH, 0)
             + _pack_gate_cols((pb["b_ih"] + pb["b_hh"])[None, :], H, DH, H))
        w_hh = jnp.zeros((DH, 4 * DH), jnp.float32)                   # block-diagonal
        w_hh = w_hh.at[0:H].set(_pack_gate_cols(pf["w_hh"].T, H, DH, 0))
        w_hh = w_hh.at[H:2 * H].set(_pack_gate_cols(pb["w_hh"].T, H, DH, H))
        return w_ih, b, w_hh

    n_features = p1f["w_ih"].shape[1]
    w_ih1, b1, w_hh1 = fuse_layer(p1f, p1b, in_rows=n_features, H=h1, DH=dh1)
    # layer-2 input rows follow torch's [fwd | bwd] layer-1 concat == our lane layout.
    w_ih2, b2, w_hh2 = fuse_layer(p2f, p2b, in_rows=dh1, H=h2, DH=dh2)

    bf16 = jnp.bfloat16
    return {
        "w_ih1": w_ih1.astype(bf16), "b1": b1.astype(bf16), "w_hh1": w_hh1.astype(bf16),
        "w_ih2": w_ih2.astype(bf16), "b2": b2.astype(bf16), "w_hh2": w_hh2.astype(bf16),
        "H1": h1, "H2": h2,
    }


# ----------------------------------------------------------------------------
# BiLSTMEncoder forward (batch-first input, matches the torch module)
# ----------------------------------------------------------------------------
def bilstm_encoder(x, kparams, seq_len, n_features, embedding_dim):
    B = x.shape[0]
    x = x.reshape(B, seq_len, n_features).astype(jnp.float32)
    Bp = _round_up(max(B, 1), 8)                               # pad batch to 8 sublanes
    x = jnp.pad(x, ((0, Bp - B), (0, 0), (0, 0)))
    # time-major + flatten to (T*Bp, F) in the XLA wrapper (free layout change)
    x2d = jnp.transpose(x, (1, 0, 2)).reshape(seq_len * Bp, n_features).astype(jnp.bfloat16)

    emb = bilstm_encoder_pallas(x2d, kparams, T=seq_len, Bp=Bp)   # (Bp, DH2) f32
    E = embedding_dim
    hf = emb[:B, 0:E]                                             # final fwd hidden
    hb = emb[:B, E:2 * E]                                         # final bwd hidden
    # Reproduce torch's quirky `embedding.reshape(B, 2E)` of the (2, B, E) h_n
    # exactly (mixes batch rows with directions when B > 1).
    return jnp.stack([hf, hb], axis=0).reshape(B, 2 * E)


# ----------------------------------------------------------------------------
# Deterministic parameter init (nn.LSTM layout; uniform(-1/sqrt(H), 1/sqrt(H)))
# ----------------------------------------------------------------------------
def init_lstm_dir_params(key, input_size, hidden_size):
    k = 1.0 / (hidden_size ** 0.5)
    k1, k2, k3, k4 = jax.random.split(key, 4)
    return {
        "w_ih": jax.random.uniform(k1, (4 * hidden_size, input_size), jnp.float32, -k, k),
        "w_hh": jax.random.uniform(k2, (4 * hidden_size, hidden_size), jnp.float32, -k, k),
        "b_ih": jax.random.uniform(k3, (4 * hidden_size,), jnp.float32, -k, k),
        "b_hh": jax.random.uniform(k4, (4 * hidden_size,), jnp.float32, -k, k),
    }


# ----------------------------------------------------------------------------
# Pure-JAX f32 reference (lax.scan, unpadded) for correctness check
# ----------------------------------------------------------------------------
def ref_lstm_direction(x_tbf, p):
    H = p["w_hh"].shape[1]
    B = x_tbf.shape[1]
    w_ih_t, w_hh_t = p["w_ih"].T, p["w_hh"].T
    b = p["b_ih"] + p["b_hh"]

    def step(carry, x_t):
        h, c = carry
        gates = x_t @ w_ih_t + h @ w_hh_t + b
        i_g = jax.nn.sigmoid(gates[:, :H])
        f_g = jax.nn.sigmoid(gates[:, H:2 * H])
        g_g = jnp.tanh(gates[:, 2 * H:3 * H])
        o_g = jax.nn.sigmoid(gates[:, 3 * H:])
        c = f_g * c + i_g * g_g
        h = o_g * jnp.tanh(c)
        return (h, c), h

    init = (jnp.zeros((B, H), jnp.float32), jnp.zeros((B, H), jnp.float32))
    (h, _), out = jax.lax.scan(step, init, x_tbf)
    return out, h


def ref_bilstm_encoder(x, raw, seq_len, n_features, embedding_dim):
    B = x.shape[0]
    x_tbf = jnp.transpose(x.reshape(B, seq_len, n_features), (1, 0, 2))
    of, _ = ref_lstm_direction(x_tbf, raw["rnn1_f"])
    obr, _ = ref_lstm_direction(x_tbf[::-1], raw["rnn1_b"])
    out1 = jnp.concatenate([of, obr[::-1]], axis=-1)
    _, hf = ref_lstm_direction(out1, raw["rnn2_f"])
    _, hb = ref_lstm_direction(out1[::-1], raw["rnn2_b"])
    return jnp.stack([hf, hb], axis=0).reshape(B, 2 * embedding_dim)


if __name__ == "__main__":
    SEQ_LEN = 8
    N_FEATURES = 4
    EMBEDDING_DIM = 32
    HIDDEN_DIM = 2 * EMBEDDING_DIM        # rnn1 hidden size (per direction)
    B = 2

    root = jax.random.PRNGKey(0)
    kx, k1f, k1b, k2f, k2b = jax.random.split(root, 5)
    x = jax.random.normal(kx, (B, SEQ_LEN, N_FEATURES), jnp.float32)

    raw = {
        "rnn1_f": init_lstm_dir_params(k1f, N_FEATURES, HIDDEN_DIM),
        "rnn1_b": init_lstm_dir_params(k1b, N_FEATURES, HIDDEN_DIM),
        "rnn2_f": init_lstm_dir_params(k2f, 2 * HIDDEN_DIM, EMBEDDING_DIM),
        "rnn2_b": init_lstm_dir_params(k2b, 2 * HIDDEN_DIM, EMBEDDING_DIM),
    }
    kparams = pack_kernel_params(raw["rnn1_f"], raw["rnn1_b"],
                                 raw["rnn2_f"], raw["rnn2_b"],
                                 h1=HIDDEN_DIM, h2=EMBEDDING_DIM)

    out = bilstm_encoder(x, kparams, SEQ_LEN, N_FEATURES, EMBEDDING_DIM)
    out = jax.block_until_ready(out)

    ref = ref_bilstm_encoder(x, raw, SEQ_LEN, N_FEATURES, EMBEDDING_DIM)
    assert out.shape == (B, 2 * EMBEDDING_DIM), out.shape
    # bf16 weights / scratch (per review) -> looser tolerance vs pure-f32 reference.
    assert jnp.allclose(out, ref, atol=4e-2, rtol=4e-2), \
        float(jnp.max(jnp.abs(out - ref)))
    print("KERNEL_OK")
</pallas_src>

<mosaic_0001>
module attributes {stable_mosaic.version = 11 : i64} {
  func.func @_bilstm_encoder_kernel(%arg0: memref<64x4xbf16, #tpu.memory_space<vmem>>, %arg1: memref<4x512xbf16, #tpu.memory_space<vmem>>, %arg2: memref<1x512xbf16, #tpu.memory_space<vmem>>, %arg3: memref<128x512xbf16, #tpu.memory_space<vmem>>, %arg4: memref<128x512xbf16, #tpu.memory_space<vmem>>, %arg5: memref<1x512xbf16, #tpu.memory_space<vmem>>, %arg6: memref<128x512xbf16, #tpu.memory_space<vmem>>, %arg7: memref<8x128xf32, #tpu.memory_space<vmem>>, %arg8: memref<64x512xbf16, #tpu.memory_space<vmem>>, %arg9: memref<64x128xbf16, #tpu.memory_space<vmem>>, %arg10: memref<64x512xbf16, #tpu.memory_space<vmem>>) attributes {dimension_semantics = [], scalar_prefetch = 0 : i64, scratch_operands = 3 : i64, tpu.core_type = #tpu.core_type<tc>} {
    %0 = tpu.iota {dimensions = array<i32: 1>} : vector<8x128xi32>
    %c64_i32 = arith.constant 64 : i32
    %1 = vector.broadcast %c64_i32 : i32 to vector<8x128xi32>
    %2 = arith.cmpi slt, %0, %1 : vector<8x128xi32>
    %3 = tpu.concatenate %0, %0, %0, %0 in 1 : vector<8x128xi32>, vector<8x128xi32>, vector<8x128xi32>, vector<8x128xi32> -> vector<8x512xi32>
    %c64_i32_0 = arith.constant 64 : i32
    %4 = vector.broadcast %c64_i32_0 : i32 to vector<8x512xi32>
    %5 = arith.cmpi slt, %3, %4 : vector<8x512xi32>
    %6 = tpu.iota {dimensions = array<i32: 1>} : vector<8x128xi32>
    %7 = tpu.concatenate %6, %6, %6, %6 in 1 : vector<8x128xi32>, vector<8x128xi32>, vector<8x128xi32>, vector<8x128xi32> -> vector<8x512xi32>
    %c32_i32 = arith.constant 32 : i32
    %8 = vector.broadcast %c32_i32 : i32 to vector<8x512xi32>
    %9 = arith.cmpi slt, %7, %8 : vector<8x512xi32>
    %c0 = arith.constant 0 : index
    %c0_1 = arith.constant 0 : index
    %10 = vector.load %arg0[%c0, %c0_1] : memref<64x4xbf16, #tpu.memory_space<vmem>>, vector<64x4xbf16>
    %c0_2 = arith.constant 0 : index
    %c0_3 = arith.constant 0 : index
    %11 = vector.load %arg1[%c0_2, %c0_3] : memref<4x512xbf16, #tpu.memory_space<vmem>>, vector<4x512xbf16>
    %cst = arith.constant dense<0.000000e+00> : vector<64x512xf32>
    %12 = tpu.matmul %10, %11, %cst {dimension_numbers = #tpu.dot_dimension_numbers<[1], [0], [0], [1], [0, 0, 1, 1], [], []>} : vector<64x4xbf16>, vector<4x512xbf16>, vector<64x512xf32> -> vector<64x512xf32>
    %c0_4 = arith.constant 0 : index
    %c0_5 = arith.constant 0 : index
    %13 = vector.load %arg2[%c0_4, %c0_5] : memref<1x512xbf16, #tpu.memory_space<vmem>>, vector<1x512xbf16>
    %14 = arith.extf %13 : vector<1x512xbf16> to vector<1x512xf32>
    %15 = vector.broadcast %14 : vector<1x512xf32> to vector<64x512xf32>
    %16 = arith.addf %12, %15 : vector<64x512xf32>
    %17 = vector.extract_strided_slice %16 {offsets = [0, 0], sizes = [8, 512], strides = [1, 1]} : vector<64x512xf32> to vector<8x512xf32>
    %18 = vector.extract_strided_slice %16 {offsets = [56, 0], sizes = [8, 512], strides = [1, 1]} : vector<64x512xf32> to vector<8x512xf32>
    %19 = arith.select %5, %17, %18 : vector<8x512xi1>, vector<8x512xf32>
    %20 = arith.truncf %19 : vector<8x512xf32> to vector<8x512xbf16>
    %c0_6 = arith.constant 0 : index
    %c0_7 = arith.constant 0 : index
    %21 = vector.load %arg8[%c0_6, %c0_7] : memref<64x512xbf16, #tpu.memory_space<vmem>>, vector<8x512xbf16>
    tpu.vector_store %arg8[%c0_6, %c0_7], %20 {strides = array<i32>} : memref<64x512xbf16, #tpu.memory_space<vmem>>, vector<8x512xbf16>,
    %22 = vector.extract_strided_slice %16 {offsets = [8, 0], sizes = [8, 512], strides = [1, 1]} : vector<64x512xf32> to vector<8x512xf32>
    %23 = vector.extract_strided_slice %16 {offsets = [48, 0], sizes = [8, 512], strides = [1, 1]} : vector<64x512xf32> to vector<8x512xf32>
    %24 = arith.select %5, %22, %23 : vector<8x512xi1>, vector<8x512xf32>
    %25 = arith.truncf %24 : vector<8x512xf32> to vector<8x512xbf16>
    %c8 = arith.constant 8 : index
    %c0_8 = arith.constant 0 : index
    %26 = vector.load %arg8[%c8, %c0_8] : memref<64x512xbf16, #tpu.memory_space<vmem>>, vector<8x512xbf16>
    tpu.vector_store %arg8[%c8, %c0_8], %25 {strides = array<i32>} : memref<64x512xbf16, #tpu.memory_space<vmem>>, vector<8x512xbf16>,
    %27 = vector.extract_strided_slice %16 {offsets = [16, 0], sizes = [8, 512], strides = [1, 1]} : vector<64x512xf32> to vector<8x512xf32>
    %28 = vector.extract_strided_slice %16 {offsets = [40, 0], sizes = [8, 512], strides = [1, 1]} : vector<64x512xf32> to vector<8x512xf32>
    %29 = arith.select %5, %27, %28 : vector<8x512xi1>, vector<8x512xf32>
    %30 = arith.truncf %29 : vector<8x512xf32> to vector<8x512xbf16>
    %c16 = arith.constant 16 : index
    %c0_9 = arith.constant 0 : index
    %31 = vector.load %arg8[%c16, %c0_9] : memref<64x512xbf16, #tpu.memory_space<vmem>>, vector<8x512xbf16>
    tpu.vector_store %arg8[%c16, %c0_9], %30 {strides = array<i32>} : memref<64x512xbf16, #tpu.memory_space<vmem>>, vector<8x512xbf16>,
    %32 = vector.extract_strided_slice %16 {offsets = [24, 0], sizes = [8, 512], strides = [1, 1]} : vector<64x512xf32> to vector<8x512xf32>
    %33 = vector.extract_strided_slice %16 {offsets = [32, 0], sizes = [8, 512], strides = [1, 1]} : vector<64x512xf32> to vector<8x512xf32>
    %34 = arith.select %5, %32, %33 : vector<8x512xi1>, vector<8x512xf32>
    %35 = arith.truncf %34 : vector<8x512xf32> to vector<8x512xbf16>
    %c24 = arith.constant 24 : index
    %c0_10 = arith.constant 0 : index
    %36 = vector.load %arg8[%c24, %c0_10] : memref<64x512xbf16, #tpu.memory_space<vmem>>, vector<8x512xbf16>
    tpu.vector_store %arg8[%c24, %c0_10], %35 {strides = array<i32>} : memref<64x512xbf16, #tpu.memory_space<vmem>>, vector<8x512xbf16>,
    %37 = vector.extract_strided_slice %16 {offsets = [32, 0], sizes = [8, 512], strides = [1, 1]} : vector<64x512xf32> to vector<8x512xf32>
    %38 = vector.extract_strided_slice %16 {offsets = [24, 0], sizes = [8, 512], strides = [1, 1]} : vector<64x512xf32> to vector<8x512xf32>
    %39 = arith.select %5, %37, %38 : vector<8x512xi1>, vector<8x512xf32>
    %40 = arith.truncf %39 : vector<8x512xf32> to vector<8x512xbf16>
    %c32 = arith.constant 32 : index
    %c0_11 = arith.constant 0 : index
    %41 = vector.load %arg8[%c32, %c0_11] : memref<64x512xbf16, #tpu.memory_space<vmem>>, vector<8x512xbf16>
    tpu.vector_store %arg8[%c32, %c0_11], %40 {strides = array<i32>} : memref<64x512xbf16, #tpu.memory_space<vmem>>, vector<8x512xbf16>,
    %42 = vector.extract_strided_slice %16 {offsets = [40, 0], sizes = [8, 512], strides = [1, 1]} : vector<64x512xf32> to vector<8x512xf32>
    %43 = vector.extract_strided_slice %16 {offsets = [16, 0], sizes = [8, 512], strides = [1, 1]} : vector<64x512xf32> to vector<8x512xf32>
    %44 = arith.select %5, %42, %43 : vector<8x512xi1>, vector<8x512xf32>
    %45 = arith.truncf %44 : vector<8x512xf32> to vector<8x512xbf16>
    %c40 = arith.constant 40 : index
    %c0_12 = arith.constant 0 : index
    %46 = vector.load %arg8[%c40, %c0_12] : memref<64x512xbf16, #tpu.memory_space<vmem>>, vector<8x512xbf16>
    tpu.vector_store %arg8[%c40, %c0_12], %45 {strides = array<i32>} : memref<64x512xbf16, #tpu.memory_space<vmem>>, vector<8x512xbf16>,
    %47 = vector.extract_strided_slice %16 {offsets = [48, 0], sizes = [8, 512], strides = [1, 1]} : vector<64x512xf32> to vector<8x512xf32>
    %48 = vector.extract_strided_slice %16 {offsets = [8, 0], sizes = [8, 512], strides = [1, 1]} : vector<64x512xf32> to vector<8x512xf32>
    %49 = arith.select %5, %47, %48 : vector<8x512xi1>, vector<8x512xf32>
    %50 = arith.truncf %49 : vector<8x512xf32> to vector<8x512xbf16>
    %c48 = arith.constant 48 : index
    %c0_13 = arith.constant 0 : index
    %51 = vector.load %arg8[%c48, %c0_13] : memref<64x512xbf16, #tpu.memory_space<vmem>>, vector<8x512xbf16>
    tpu.vector_store %arg8[%c48, %c0_13], %50 {strides = array<i32>} : memref<64x512xbf16, #tpu.memory_space<vmem>>, vector<8x512xbf16>,
    %52 = vector.extract_strided_slice %16 {offsets = [56, 0], sizes = [8, 512], strides = [1, 1]} : vector<64x512xf32> to vector<8x512xf32>
    %53 = vector.extract_strided_slice %16 {offsets = [0, 0], sizes = [8, 512], strides = [1, 1]} : vector<64x512xf32> to vector<8x512xf32>
    %54 = arith.select %5, %52, %53 : vector<8x512xi1>, vector<8x512xf32>
    %55 = arith.truncf %54 : vector<8x512xf32> to vector<8x512xbf16>
    %c56 = arith.constant 56 : index
    %c0_14 = arith.constant 0 : index
    %56 = vector.load %arg8[%c56, %c0_14] : memref<64x512xbf16, #tpu.memory_space<vmem>>, vector<8x512xbf16>
    tpu.vector_store %arg8[%c56, %c0_14], %55 {strides = array<i32>} : memref<64x512xbf16, #tpu.memory_space<vmem>>, vector<8x512xbf16>,
    %c0_15 = arith.constant 0 : index
    %c0_16 = arith.constant 0 : index
    %57 = vector.load %arg3[%c0_15, %c0_16] : memref<128x512xbf16, #tpu.memory_space<vmem>>, vector<128x512xbf16>
    %cst_17 = arith.constant 0.000000e+00 : f32
    %58 = vector.broadcast %cst_17 : f32 to vector<8x128xf32>
    %cst_18 = arith.constant 0.000000e+00 : f32
    %59 = vector.broadcast %cst_18 : f32 to vector<8x128xf32>
    %c0_19 = arith.constant 0 : index
    %c0_20 = arith.constant 0 : index
    %60 = vector.load %arg8[%c0_19, %c0_20] : memref<64x512xbf16, #tpu.memory_space<vmem>>, vector<8x512xbf16>
    %61 = arith.extf %60 : vector<8x512xbf16> to vector<8x512xf32>
    %62 = arith.truncf %58 : vector<8x128xf32> to vector<8x128xbf16>
    %cst_21 = arith.constant dense<0.000000e+00> : vector<8x512xf32>
    %63 = tpu.matmul %62, %57, %cst_21 {dimension_numbers = #tpu.dot_dimension_numbers<[1], [0], [0], [1], [0, 0, 1, 1], [], []>} : vector<8x128xbf16>, vector<128x512xbf16>, vector<8x512xf32> -> vector<8x512xf32>
    %64 = arith.addf %61, %63 : vector<8x512xf32>
    %65 = vector.extract_strided_slice %64 {offsets = [0, 0], sizes = [8, 128], strides = [1, 1]} : vector<8x512xf32> to vector<8x128xf32>
    %66 = arith.negf %65 : vector<8x128xf32>
    %67 = math.exp %66 : vector<8x128xf32>
    %cst_22 = arith.constant 1.000000e+00 : f32
    %68 = vector.broadcast %cst_22 : f32 to vector<8x128xf32>
    %69 = arith.addf %68, %67 : vector<8x128xf32>
    %70 = arith.divf %68, %69 : vector<8x128xf32>
    %71 = vector.extract_strided_slice %64 {offsets = [0, 128], sizes = [8, 128], strides = [1, 1]} : vector<8x512xf32> to vector<8x128xf32>
    %72 = arith.negf %71 : vector<8x128xf32>
    %73 = math.exp %72 : vector<8x128xf32>
    %cst_23 = arith.constant 1.000000e+00 : f32
    %74 = vector.broadcast %cst_23 : f32 to vector<8x128xf32>
    %75 = arith.addf %74, %73 : vector<8x128xf32>
    %76 = arith.divf %74, %75 : vector<8x128xf32>
    %77 = vector.extract_strided_slice %64 {offsets = [0, 256], sizes = [8, 128], strides = [1, 1]} : vector<8x512xf32> to vector<8x128xf32>
    %78 = math.tanh %77 : vector<8x128xf32>
    %79 = vector.extract_strided_slice %64 {offsets = [0, 384], sizes = [8, 128], strides = [1, 1]} : vector<8x512xf32> to vector<8x128xf32>
    %80 = arith.negf %79 : vector<8x128xf32>
    %81 = math.exp %80 : vector<8x128xf32>
    %cst_24 = arith.constant 1.000000e+00 : f32
    %82 = vector.broadcast %cst_24 : f32 to vector<8x128xf32>
    %83 = arith.addf %82, %81 : vector<8x128xf32>
    %84 = arith.divf %82, %83 : vector<8x128xf32>
    %85 = arith.mulf %76, %59 : vector<8x128xf32>
    %86 = arith.mulf %70, %78 : vector<8x128xf32>
    %87 = arith.addf %85, %86 : vector<8x128xf32>
    %88 = math.tanh %87 : vector<8x128xf32>
    %89 = arith.mulf %84, %88 : vector<8x128xf32>
    %c8_25 = arith.constant 8 : index
    %c0_26 = arith.constant 0 : index
    %90 = vector.load %arg8[%c8_25, %c0_26] : memref<64x512xbf16, #tpu.memory_space<vmem>>, vector<8x512xbf16>
    %91 = arith.extf %90 : vector<8x512xbf16> to vector<8x512xf32>
    %92 = arith.truncf %89 : vector<8x128xf32> to vector<8x128xbf16>
    %cst_27 = arith.constant dense<0.000000e+00> : vector<8x512xf32>
    %93 = tpu.matmul %92, %57, %cst_27 {dimension_numbers = #tpu.dot_dimension_numbers<[1], [0], [0], [1], [0, 0, 1, 1], [], []>} : vector<8x128xbf16>, vector<128x512xbf16>, vector<8x512xf32> -> vector<8x512xf32>
    %94 = arith.addf %91, %93 : vector<8x512xf32>
    %95 = vector.extract_strided_slice %94 {offsets = [0, 0], sizes = [8, 128], strides = [1, 1]} : vector<8x512xf32> to vector<8x128xf32>
    %96 = arith.negf %95 : vector<8x128xf32>
    %97 = math.exp %96 : vector<8x128xf32>
    %cst_28 = arith.constant 1.000000e+00 : f32
    %98 = vector.broadcast %cst_28 : f32 to vector<8x128xf32>
    %99 = arith.addf %98, %97 : vector<8x128xf32>
    %100 = arith.divf %98, %99 : vector<8x128xf32>
    %101 = vector.extract_strided_slice %94 {offsets = [0, 128], sizes = [8, 128], strides = [1, 1]} : vector<8x512xf32> to vector<8x128xf32>
    %102 = arith.negf %101 : vector<8x128xf32>
    %103 = math.exp %102 : vector<8x128xf32>
    %cst_29 = arith.constant 1.000000e+00 : f32
    %104 = vector.broadcast %cst_29 : f32 to vector<8x128xf32>
    %105 = arith.addf %104, %103 : vector<8x128xf32>
    %106 = arith.divf %104, %105 : vector<8x128xf32>
    %107 = vector.extract_strided_slice %94 {offsets = [0, 256], sizes = [8, 128], strides = [1, 1]} : vector<8x512xf32> to vector<8x128xf32>
    %108 = math.tanh %107 : vector<8x128xf32>
    %109 = vector.extract_strided_slice %94 {offsets = [0, 384], sizes = [8, 128], strides = [1, 1]} : vector<8x512xf32> to vector<8x128xf32>
    %110 = arith.negf %109 : vector<8x128xf32>
    %111 = math.exp %110 : vector<8x128xf32>
    %cst_30 = arith.constant 1.000000e+00 : f32
    %112 = vector.broadcast %cst_30 : f32 to vector<8x128xf32>
    %113 = arith.addf %112, %111 : vector<8x128xf32>
    %114 = arith.divf %112, %113 : vector<8x128xf32>
    %115 = arith.mulf %106, %87 : vector<8x128xf32>
    %116 = arith.mulf %100, %108 : vector<8x128xf32>
    %117 = arith.addf %115, %116 : vector<8x128xf32>
    %118 = math.tanh %117 : vector<8x128xf32>
    %119 = arith.mulf %114, %118 : vector<8x128xf32>
    %c16_31 = arith.constant 16 : index
    %c0_32 = arith.constant 0 : index
    %120 = vector.load %arg8[%c16_31, %c0_32] : memref<64x512xbf16, #tpu.memory_space<vmem>>, vector<8x512xbf16>
    %121 = arith.extf %120 : vector<8x512xbf16> to vector<8x512xf32>
    %122 = arith.truncf %119 : vector<8x128xf32> to vector<8x128xbf16>
    %cst_33 = arith.constant dense<0.000000e+00> : vector<8x512xf32>
    %123 = tpu.matmul %122, %57, %cst_33 {dimension_numbers = #tpu.dot_dimension_numbers<[1], [0], [0], [1], [0, 0, 1, 1], [], []>} : vector<8x128xbf16>, vector<128x512xbf16>, vector<8x512xf32> -> vector<8x512xf32>
    %124 = arith.addf %121, %123 : vector<8x512xf32>
    %125 = vector.extract_strided_slice %124 {offsets = [0, 0], sizes = [8, 128], strides = [1, 1]} : vector<8x512xf32> to vector<8x128xf32>
    %126 = arith.negf %125 : vector<8x128xf32>
    %127 = math.exp %126 : vector<8x128xf32>
    %cst_34 = arith.constant 1.000000e+00 : f32
    %128 = vector.broadcast %cst_34 : f32 to vector<8x128xf32>
    %129 = arith.addf %128, %127 : vector<8x128xf32>
    %130 = arith.divf %128, %129 : vector<8x128xf32>
    %131 = vector.extract_strided_slice %124 {offsets = [0, 128], sizes = [8, 128], strides = [1, 1]} : vector<8x512xf32> to vector<8x128xf32>
    %132 = arith.negf %131 : vector<8x128xf32>
    %133 = math.exp %132 : vector<8x128xf32>
    %cst_35 = arith.constant 1.000000e+00 : f32
    %134 = vector.broadcast %cst_35 : f32 to vector<8x128xf32>
    %135 = arith.addf %134, %133 : vector<8x128xf32>
    %136 = arith.divf %134, %135 : vector<8x128xf32>
    %137 = vector.extract_strided_slice %124 {offsets = [0, 256], sizes = [8, 128], strides = [1, 1]} : vector<8x512xf32> to vector<8x128xf32>
    %138 = math.tanh %137 : vector<8x128xf32>
    %139 = vector.extract_strided_slice %124 {offsets = [0, 384], sizes = [8, 128], strides = [1, 1]} : vector<8x512xf32> to vector<8x128xf32>
    %140 = arith.negf %139 : vector<8x128xf32>
    %141 = math.exp %140 : vector<8x128xf32>
    %cst_36 = arith.constant 1.000000e+00 : f32
    %142 = vector.broadcast %cst_36 : f32 to vector<8x128xf32>
    %143 = arith.addf %142, %141 : vector<8x128xf32>
    %144 = arith.divf %142, %143 : vector<8x128xf32>
    %145 = arith.mulf %136, %117 : vector<8x128xf32>
    %146 = arith.mulf %130, %138 : vector<8x128xf32>
    %147 = arith.addf %145, %146 : vector<8x128xf32>
    %148 = math.tanh %147 : vector<8x128xf32>
    %149 = arith.mulf %144, %148 : vector<8x128xf32>
    %c24_37 = arith.constant 24 : index
    %c0_38 = arith.constant 0 : index
    %150 = vector.load %arg8[%c24_37, %c0_38] : memref<64x512xbf16, #tpu.memory_space<vmem>>, vector<8x512xbf16>
    %151 = arith.extf %150 : vector<8x512xbf16> to vector<8x512xf32>
    %152 = arith.truncf %149 : vector<8x128xf32> to vector<8x128xbf16>
    %cst_39 = arith.constant dense<0.000000e+00> : vector<8x512xf32>
    %153 = tpu.matmul %152, %57, %cst_39 {dimension_numbers = #tpu.dot_dimension_numbers<[1], [0], [0], [1], [0, 0, 1, 1], [], []>} : vector<8x128xbf16>, vector<128x512xbf16>, vector<8x512xf32> -> vector<8x512xf32>
    %154 = arith.addf %151, %153 : vector<8x512xf32>
    %155 = vector.extract_strided_slice %154 {offsets = [0, 0], sizes = [8, 128], strides = [1, 1]} : vector<8x512xf32> to vector<8x128xf32>
    %156 = arith.negf %155 : vector<8x128xf32>
    %157 = math.exp %156 : vector<8x128xf32>
    %cst_40 = arith.constant 1.000000e+00 : f32
    %158 = vector.broadcast %cst_40 : f32 to vector<8x128xf32>
    %159 = arith.addf %158, %157 : vector<8x128xf32>
    %160 = arith.divf %158, %159 : vector<8x128xf32>
    %161 = vector.extract_strided_slice %154 {offsets = [0, 128], sizes = [8, 128], strides = [1, 1]} : vector<8x512xf32> to vector<8x128xf32>
    %162 = arith.negf %161 : vector<8x128xf32>
    %163 = math.exp %162 : vector<8x128xf32>
    %cst_41 = arith.constant 1.000000e+00 : f32
    %164 = vector.broadcast %cst_41 : f32 to vector<8x128xf32>
    %165 = arith.addf %164, %163 : vector<8x128xf32>
    %166 = arith.divf %164, %165 : vector<8x128xf32>
    %167 = vector.extract_strided_slice %154 {offsets = [0, 256], sizes = [8, 128], strides = [1, 1]} : vector<8x512xf32> to vector<8x128xf32>
    %168 = math.tanh %167 : vector<8x128xf32>
    %169 = vector.extract_strided_slice %154 {offsets = [0, 384], sizes = [8, 128], strides = [1, 1]} : vector<8x512xf32> to vector<8x128xf32>
    %170 = arith.negf %169 : vector<8x128xf32>
    %171 = math.exp %170 : vector<8x128xf32>
    %cst_42 = arith.constant 1.000000e+00 : f32
    %172 = vector.broadcast %cst_42 : f32 to vector<8x128xf32>
    %173 = arith.addf %172, %171 : vector<8x128xf32>
    %174 = arith.divf %172, %173 : vector<8x128xf32>
    %175 = arith.mulf %166, %147 : vector<8x128xf32>
    %176 = arith.mulf %160, %168 : vector<8x128xf32>
    %177 = arith.addf %175, %176 : vector<8x128xf32>
    %178 = math.tanh %177 : vector<8x128xf32>
    %179 = arith.mulf %174, %178 : vector<8x128xf32>
    %c32_43 = arith.constant 32 : index
    %c0_44 = arith.constant 0 : index
    %180 = vector.load %arg8[%c32_43, %c0_44] : memref<64x512xbf16, #tpu.memory_space<vmem>>, vector<8x512xbf16>
    %181 = arith.extf %180 : vector<8x512xbf16> to vector<8x512xf32>
    %182 = arith.truncf %179 : vector<8x128xf32> to vector<8x128xbf16>
    %cst_45 = arith.constant dense<0.000000e+00> : vector<8x512xf32>
    %183 = tpu.matmul %182, %57, %cst_45 {dimension_numbers = #tpu.dot_dimension_numbers<[1], [0], [0], [1], [0, 0, 1, 1], [], []>} : vector<8x128xbf16>, vector<128x512xbf16>, vector<8x512xf32> -> vector<8x512xf32>
    %184 = arith.addf %181, %183 : vector<8x512xf32>
    %185 = vector.extract_strided_slice %184 {offsets = [0, 0], sizes = [8, 128], strides = [1, 1]} : vector<8x512xf32> to vector<8x128xf32>
    %186 = arith.negf %185 : vector<8x128xf32>
    %187 = math.exp %186 : vector<8x128xf32>
    %cst_46 = arith.constant 1.000000e+00 : f32
    %188 = vector.broadcast %cst_46 : f32 to vector<8x128xf32>
    %189 = arith.addf %188, %187 : vector<8x128xf32>
    %190 = arith.divf %188, %189 : vector<8x128xf32>
    %191 = vector.extract_strided_slice %184 {offsets = [0, 128], sizes = [8, 128], strides = [1, 1]} : vector<8x512xf32> to vector<8x128xf32>
    %192 = arith.negf %191 : vector<8x128xf32>
    %193 = math.exp %192 : vector<8x128xf32>
    %cst_47 = arith.constant 1.000000e+00 : f32
    %194 = vector.broadcast %cst_47 : f32 to vector<8x128xf32>
    %195 = arith.addf %194, %193 : vector<8x128xf32>
    %196 = arith.divf %194, %195 : vector<8x128xf32>
    %197 = vector.extract_strided_slice %184 {offsets = [0, 256], sizes = [8, 128], strides = [1, 1]} : vector<8x512xf32> to vector<8x128xf32>
    %198 = math.tanh %197 : vector<8x128xf32>
    %199 = vector.extract_strided_slice %184 {offsets = [0, 384], sizes = [8, 128], strides = [1, 1]} : vector<8x512xf32> to vector<8x128xf32>
    %200 = arith.negf %199 : vector<8x128xf32>
    %201 = math.exp %200 : vector<8x128xf32>
    %cst_48 = arith.constant 1.000000e+00 : f32
    %202 = vector.broadcast %cst_48 : f32 to vector<8x128xf32>
    %203 = arith.addf %202, %201 : vector<8x128xf32>
    %204 = arith.divf %202, %203 : vector<8x128xf32>
    %205 = arith.mulf %196, %177 : vector<8x128xf32>
    %206 = arith.mulf %190, %198 : vector<8x128xf32>
    %207 = arith.addf %205, %206 : vector<8x128xf32>
    %208 = math.tanh %207 : vector<8x128xf32>
    %209 = arith.mulf %204, %208 : vector<8x128xf32>
    %c40_49 = arith.constant 40 : index
    %c0_50 = arith.constant 0 : index
    %210 = vector.load %arg8[%c40_49, %c0_50] : memref<64x512xbf16, #tpu.memory_space<vmem>>, vector<8x512xbf16>
    %211 = arith.extf %210 : vector<8x512xbf16> to vector<8x512xf32>
    %212 = arith.truncf %209 : vector<8x128xf32> to vector<8x128xbf16>
    %cst_51 = arith.constant dense<0.000000e+00> : vector<8x512xf32>
    %213 = tpu.matmul %212, %57, %cst_51 {dimension_numbers = #tpu.dot_dimension_numbers<[1], [0], [0], [1], [0, 0, 1, 1], [], []>} : vector<8x128xbf16>, vector<128x512xbf16>, vector<8x512xf32> -> vector<8x512xf32>
    %214 = arith.addf %211, %213 : vector<8x512xf32>
    %215 = vector.extract_strided_slice %214 {offsets = [0, 0], sizes = [8, 128], strides = [1, 1]} : vector<8x512xf32> to vector<8x128xf32>
    %216 = arith.negf %215 : vector<8x128xf32>
    %217 = math.exp %216 : vector<8x128xf32>
    %cst_52 = arith.constant 1.000000e+00 : f32
    %218 = vector.broadcast %cst_52 : f32 to vector<8x128xf32>
    %219 = arith.addf %218, %217 : vector<8x128xf32>
    %220 = arith.divf %218, %219 : vector<8x128xf32>
    %221 = vector.extract_strided_slice %214 {offsets = [0, 128], sizes = [8, 128], strides = [1, 1]} : vector<8x512xf32> to vector<8x128xf32>
    %222 = arith.negf %221 : vector<8x128xf32>
    %223 = math.exp %222 : vector<8x128xf32>
    %cst_53 = arith.constant 1.000000e+00 : f32
    %224 = vector.broadcast %cst_53 : f32 to vector<8x128xf32>
    %225 = arith.addf %224, %223 : vector<8x128xf32>
    %226 = arith.divf %224, %225 : vector<8x128xf32>
    %227 = vector.extract_strided_slice %214 {offsets = [0, 256], sizes = [8, 128], strides = [1, 1]} : vector<8x512xf32> to vector<8x128xf32>
    %228 = math.tanh %227 : vector<8x128xf32>
    %229 = vector.extract_strided_slice %214 {offsets = [0, 384], sizes = [8, 128], strides = [1, 1]} : vector<8x512xf32> to vector<8x128xf32>
    %230 = arith.negf %229 : vector<8x128xf32>
    %231 = math.exp %230 : vector<8x128xf32>
    %cst_54 = arith.constant 1.000000e+00 : f32
    %232 = vector.broadcast %cst_54 : f32 to vector<8x128xf32>
    %233 = arith.addf %232, %231 : vector<8x128xf32>
    %234 = arith.divf %232, %233 : vector<8x128xf32>
    %235 = arith.mulf %226, %207 : vector<8x128xf32>
    %236 = arith.mulf %220, %228 : vector<8x128xf32>
    %237 = arith.addf %235, %236 : vector<8x128xf32>
    %238 = math.tanh %237 : vector<8x128xf32>
    %239 = arith.mulf %234, %238 : vector<8x128xf32>
    %c48_55 = arith.constant 48 : index
    %c0_56 = arith.constant 0 : index
    %240 = vector.load %arg8[%c48_55, %c0_56] : memref<64x512xbf16, #tpu.memory_space<vmem>>, vector<8x512xbf16>
    %241 = arith.extf %240 : vector<8x512xbf16> to vector<8x512xf32>
    %242 = arith.truncf %239 : vector<8x128xf32> to vector<8x128xbf16>
    %cst_57 = arith.constant dense<0.000000e+00> : vector<8x512xf32>
    %243 = tpu.matmul %242, %57, %cst_57 {dimension_numbers = #tpu.dot_dimension_numbers<[1], [0], [0], [1], [0, 0, 1, 1], [], []>} : vector<8x128xbf16>, vector<128x512xbf16>, vector<8x512xf32> -> vector<8x512xf32>
    %244 = arith.addf %241, %243 : vector<8x512xf32>
    %245 = vector.extract_strided_slice %244 {offsets = [0, 0], sizes = [8, 128], strides = [1, 1]} : vector<8x512xf32> to vector<8x128xf32>
    %246 = arith.negf %245 : vector<8x128xf32>
    %247 = math.exp %246 : vector<8x128xf32>
    %cst_58 = arith.constant 1.000000e+00 : f32
    %248 = vector.broadcast %cst_58 : f32 to vector<8x128xf32>
    %249 = arith.addf %248, %247 : vector<8x128xf32>
    %250 = arith.divf %248, %249 : vector<8x128xf32>
    %251 = vector.extract_strided_slice %244 {offsets = [0, 128], sizes = [8, 128], strides = [1, 1]} : vector<8x512xf32> to vector<8x128xf32>
    %252 = arith.negf %251 : vector<8x128xf32>
    %253 = math.exp %252 : vector<8x128xf32>
    %cst_59 = arith.constant 1.000000e+00 : f32
    %254 = vector.broadcast %cst_59 : f32 to vector<8x128xf32>
    %255 = arith.addf %254, %253 : vector<8x128xf32>
    %256 = arith.divf %254, %255 : vector<8x128xf32>
    %257 = vector.extract_strided_slice %244 {offsets = [0, 256], sizes = [8, 128], strides = [1, 1]} : vector<8x512xf32> to vector<8x128xf32>
    %258 = math.tanh %257 : vector<8x128xf32>
    %259 = vector.extract_strided_slice %244 {offsets = [0, 384], sizes = [8, 128], strides = [1, 1]} : vector<8x512xf32> to vector<8x128xf32>
    %260 = arith.negf %259 : vector<8x128xf32>
    %261 = math.exp %260 : vector<8x128xf32>
    %cst_60 = arith.constant 1.000000e+00 : f32
    %262 = vector.broadcast %cst_60 : f32 to vector<8x128xf32>
    %263 = arith.addf %262, %261 : vector<8x128xf32>
    %264 = arith.divf %262, %263 : vector<8x128xf32>
    %265 = arith.mulf %256, %237 : vector<8x128xf32>
    %266 = arith.mulf %250, %258 : vector<8x128xf32>
    %267 = arith.addf %265, %266 : vector<8x128xf32>
    %268 = math.tanh %267 : vector<8x128xf32>
    %269 = arith.mulf %264, %268 : vector<8x128xf32>
    %c56_61 = arith.constant 56 : index
    %c0_62 = arith.constant 0 : index
    %270 = vector.load %arg8[%c56_61, %c0_62] : memref<64x512xbf16, #tpu.memory_space<vmem>>, vector<8x512xbf16>
    %271 = arith.extf %270 : vector<8x512xbf16> to vector<8x512xf32>
    %272 = arith.truncf %269 : vector<8x128xf32> to vector<8x128xbf16>
    %cst_63 = arith.constant dense<0.000000e+00> : vector<8x512xf32>
    %273 = tpu.matmul %272, %57, %cst_63 {dimension_numbers = #tpu.dot_dimension_numbers<[1], [0], [0], [1], [0, 0, 1, 1], [], []>} : vector<8x128xbf16>, vector<128x512xbf16>, vector<8x512xf32> -> vector<8x512xf32>
    %274 = arith.addf %271, %273 : vector<8x512xf32>
    %275 = vector.extract_strided_slice %274 {offsets = [0, 0], sizes = [8, 128], strides = [1, 1]} : vector<8x512xf32> to vector<8x128xf32>
    %276 = arith.negf %275 : vector<8x128xf32>
    %277 = math.exp %276 : vector<8x128xf32>
    %cst_64 = arith.constant 1.000000e+00 : f32
    %278 = vector.broadcast %cst_64 : f32 to vector<8x128xf32>
    %279 = arith.addf %278, %277 : vector<8x128xf32>
    %280 = arith.divf %278, %279 : vector<8x128xf32>
    %281 = vector.extract_strided_slice %274 {offsets = [0, 128], sizes = [8, 128], strides = [1, 1]} : vector<8x512xf32> to vector<8x128xf32>
    %282 = arith.negf %281 : vector<8x128xf32>
    %283 = math.exp %282 : vector<8x128xf32>
    %cst_65 = arith.constant 1.000000e+00 : f32
    %284 = vector.broadcast %cst_65 : f32 to vector<8x128xf32>
    %285 = arith.addf %284, %283 : vector<8x128xf32>
    %286 = arith.divf %284, %285 : vector<8x128xf32>
    %287 = vector.extract_strided_slice %274 {offsets = [0, 256], sizes = [8, 128], strides = [1, 1]} : vector<8x512xf32> to vector<8x128xf32>
    %288 = math.tanh %287 : vector<8x128xf32>
    %289 = vector.extract_strided_slice %274 {offsets = [0, 384], sizes = [8, 128], strides = [1, 1]} : vector<8x512xf32> to vector<8x128xf32>
    %290 = arith.negf %289 : vector<8x128xf32>
    %291 = math.exp %290 : vector<8x128xf32>
    %cst_66 = arith.constant 1.000000e+00 : f32
    %292 = vector.broadcast %cst_66 : f32 to vector<8x128xf32>
    %293 = arith.addf %292, %291 : vector<8x128xf32>
    %294 = arith.divf %292, %293 : vector<8x128xf32>
    %295 = arith.mulf %286, %267 : vector<8x128xf32>
    %296 = arith.mulf %280, %288 : vector<8x128xf32>
    %297 = arith.addf %295, %296 : vector<8x128xf32>
    %298 = math.tanh %297 : vector<8x128xf32>
    %299 = arith.mulf %294, %298 : vector<8x128xf32>
    %300 = arith.select %2, %89, %299 : vector<8x128xi1>, vector<8x128xf32>
    %301 = arith.truncf %300 : vector<8x128xf32> to vector<8x128xbf16>
    %c0_67 = arith.constant 0 : index
    %c0_68 = arith.constant 0 : index
    %302 = vector.load %arg9[%c0_67, %c0_68] : memref<64x128xbf16, #tpu.memory_space<vmem>>, vector<8x128xbf16>
    tpu.vector_store %arg9[%c0_67, %c0_68], %301 {strides = array<i32>} : memref<64x128xbf16, #tpu.memory_space<vmem>>, vector<8x128xbf16>,
    %303 = arith.select %2, %119, %269 : vector<8x128xi1>, vector<8x128xf32>
    %304 = arith.truncf %303 : vector<8x128xf32> to vector<8x128xbf16>
    %c8_69 = arith.constant 8 : index
    %c0_70 = arith.constant 0 : index
    %305 = vector.load %arg9[%c8_69, %c0_70] : memref<64x128xbf16, #tpu.memory_space<vmem>>, vector<8x128xbf16>
    tpu.vector_store %arg9[%c8_69, %c0_70], %304 {strides = array<i32>} : memref<64x128xbf16, #tpu.memory_space<vmem>>, vector<8x128xbf16>,
    %306 = arith.select %2, %149, %239 : vector<8x128xi1>, vector<8x128xf32>
    %307 = arith.truncf %306 : vector<8x128xf32> to vector<8x128xbf16>
    %c16_71 = arith.constant 16 : index
    %c0_72 = arith.constant 0 : index
    %308 = vector.load %arg9[%c16_71, %c0_72] : memref<64x128xbf16, #tpu.memory_space<vmem>>, vector<8x128xbf16>
    tpu.vector_store %arg9[%c16_71, %c0_72], %307 {strides = array<i32>} : memref<64x128xbf16, #tpu.memory_space<vmem>>, vector<8x128xbf16>,
    %309 = arith.select %2, %179, %209 : vector<8x128xi1>, vector<8x128xf32>
    %310 = arith.truncf %309 : vector<8x128xf32> to vector<8x128xbf16>
    %c24_73 = arith.constant 24 : index
    %c0_74 = arith.constant 0 : index
    %311 = vector.load %arg9[%c24_73, %c0_74] : memref<64x128xbf16, #tpu.memory_space<vmem>>, vector<8x128xbf16>
    tpu.vector_store %arg9[%c24_73, %c0_74], %310 {strides = array<i32>} : memref<64x128xbf16, #tpu.memory_space<vmem>>, vector<8x128xbf16>,
    %312 = arith.select %2, %209, %179 : vector<8x128xi1>, vector<8x128xf32>
    %313 = arith.truncf %312 : vector<8x128xf32> to vector<8x128xbf16>
    %c32_75 = arith.constant 32 : index
    %c0_76 = arith.constant 0 : index
    %314 = vector.load %arg9[%c32_75, %c0_76] : memref<64x128xbf16, #tpu.memory_space<vmem>>, vector<8x128xbf16>
    tpu.vector_store %arg9[%c32_75, %c0_76], %313 {strides = array<i32>} : memref<64x128xbf16, #tpu.memory_space<vmem>>, vector<8x128xbf16>,
    %315 = arith.select %2, %239, %149 : vector<8x128xi1>, vector<8x128xf32>
    %316 = arith.truncf %315 : vector<8x128xf32> to vector<8x128xbf16>
    %c40_77 = arith.constant 40 : index
    %c0_78 = arith.constant 0 : index
    %317 = vector.load %arg9[%c40_77, %c0_78] : memref<64x128xbf16, #tpu.memory_space<vmem>>, vector<8x128xbf16>
    tpu.vector_store %arg9[%c40_77, %c0_78], %316 {strides = array<i32>} : memref<64x128xbf16, #tpu.memory_space<vmem>>, vector<8x128xbf16>,
    %318 = arith.select %2, %269, %119 : vector<8x128xi1>, vector<8x128xf32>
    %319 = arith.truncf %318 : vector<8x128xf32> to vector<8x128xbf16>
    %c48_79 = arith.constant 48 : index
    %c0_80 = arith.constant 0 : index
    %320 = vector.load %arg9[%c48_79, %c0_80] : memref<64x128xbf16, #tpu.memory_space<vmem>>, vector<8x128xbf16>
    tpu.vector_store %arg9[%c48_79, %c0_80], %319 {strides = array<i32>} : memref<64x128xbf16, #tpu.memory_space<vmem>>, vector<8x128xbf16>,
    %321 = arith.select %2, %299, %89 : vector<8x128xi1>, vector<8x128xf32>
    %322 = arith.truncf %321 : vector<8x128xf32> to vector<8x128xbf16>
    %c56_81 = arith.constant 56 : index
    %c0_82 = arith.constant 0 : index
    %323 = vector.load %arg9[%c56_81, %c0_82] : memref<64x128xbf16, #tpu.memory_space<vmem>>, vector<8x128xbf16>
    tpu.vector_store %arg9[%c56_81, %c0_82], %322 {strides = array<i32>} : memref<64x128xbf16, #tpu.memory_space<vmem>>, vector<8x128xbf16>,
    %c0_83 = arith.constant 0 : index
    %c0_84 = arith.constant 0 : index
    %324 = vector.load %arg9[%c0_83, %c0_84] : memref<64x128xbf16, #tpu.memory_space<vmem>>, vector<64x128xbf16>
    %c0_85 = arith.constant 0 : index
    %c0_86 = arith.constant 0 : index
    %325 = vector.load %arg4[%c0_85, %c0_86] : memref<128x512xbf16, #tpu.memory_space<vmem>>, vector<128x512xbf16>
    %cst_87 = arith.constant dense<0.000000e+00> : vector<64x512xf32>
    %326 = tpu.matmul %324, %325, %cst_87 {dimension_numbers = #tpu.dot_dimension_numbers<[1], [0], [0], [1], [0, 0, 1, 1], [], []>} : vector<64x128xbf16>, vector<128x512xbf16>, vector<64x512xf32> -> vector<64x512xf32>
    %c0_88 = arith.constant 0 : index
    %c0_89 = arith.constant 0 : index
    %327 = vector.load %arg5[%c0_88, %c0_89] : memref<1x512xbf16, #tpu.memory_space<vmem>>, vector<1x512xbf16>
    %328 = arith.extf %327 : vector<1x512xbf16> to vector<1x512xf32>
    %329 = vector.broadcast %328 : vector<1x512xf32> to vector<64x512xf32>
    %330 = arith.addf %326, %329 : vector<64x512xf32>
    %331 = vector.extract_strided_slice %330 {offsets = [0, 0], sizes = [8, 512], strides = [1, 1]} : vector<64x512xf32> to vector<8x512xf32>
    %332 = vector.extract_strided_slice %330 {offsets = [56, 0], sizes = [8, 512], strides = [1, 1]} : vector<64x512xf32> to vector<8x512xf32>
    %333 = arith.select %9, %331, %332 : vector<8x512xi1>, vector<8x512xf32>
    %334 = arith.truncf %333 : vector<8x512xf32> to vector<8x512xbf16>
    %c0_90 = arith.constant 0 : index
    %c0_91 = arith.constant 0 : index
    %335 = vector.load %arg10[%c0_90, %c0_91] : memref<64x512xbf16, #tpu.memory_space<vmem>>, vector<8x512xbf16>
    tpu.vector_store %arg10[%c0_90, %c0_91], %334 {strides = array<i32>} : memref<64x512xbf16, #tpu.memory_space<vmem>>, vector<8x512xbf16>,
    %336 = vector.extract_strided_slice %330 {offsets = [8, 0], sizes = [8, 512], strides = [1, 1]} : vector<64x512xf32> to vector<8x512xf32>
    %337 = vector.extract_strided_slice %330 {offsets = [48, 0], sizes = [8, 512], strides = [1, 1]} : vector<64x512xf32> to vector<8x512xf32>
    %338 = arith.select %9, %336, %337 : vector<8x512xi1>, vector<8x512xf32>
    %339 = arith.truncf %338 : vector<8x512xf32> to vector<8x512xbf16>
    %c8_92 = arith.constant 8 : index
    %c0_93 = arith.constant 0 : index
    %340 = vector.load %arg10[%c8_92, %c0_93] : memref<64x512xbf16, #tpu.memory_space<vmem>>, vector<8x512xbf16>
    tpu.vector_store %arg10[%c8_92, %c0_93], %339 {strides = array<i32>} : memref<64x512xbf16, #tpu.memory_space<vmem>>, vector<8x512xbf16>,
    %341 = vector.extract_strided_slice %330 {offsets = [16, 0], sizes = [8, 512], strides = [1, 1]} : vector<64x512xf32> to vector<8x512xf32>
    %342 = vector.extract_strided_slice %330 {offsets = [40, 0], sizes = [8, 512], strides = [1, 1]} : vector<64x512xf32> to vector<8x512xf32>
    %343 = arith.select %9, %341, %342 : vector<8x512xi1>, vector<8x512xf32>
    %344 = arith.truncf %343 : vector<8x512xf32> to vector<8x512xbf16>
    %c16_94 = arith.constant 16 : index
    %c0_95 = arith.constant 0 : index
    %345 = vector.load %arg10[%c16_94, %c0_95] : memref<64x512xbf16, #tpu.memory_space<vmem>>, vector<8x512xbf16>
    tpu.vector_store %arg10[%c16_94, %c0_95], %344 {strides = array<i32>} : memref<64x512xbf16, #tpu.memory_space<vmem>>, vector<8x512xbf16>,
    %346 = vector.extract_strided_slice %330 {offsets = [24, 0], sizes = [8, 512], strides = [1, 1]} : vector<64x512xf32> to vector<8x512xf32>
    %347 = vector.extract_strided_slice %330 {offsets = [32, 0], sizes = [8, 512], strides = [1, 1]} : vector<64x512xf32> to vector<8x512xf32>
    %348 = arith.select %9, %346, %347 : vector<8x512xi1>, vector<8x512xf32>
    %349 = arith.truncf %348 : vector<8x512xf32> to vector<8x512xbf16>
    %c24_96 = arith.constant 24 : index
    %c0_97 = arith.constant 0 : index
    %350 = vector.load %arg10[%c24_96, %c0_97] : memref<64x512xbf16, #tpu.memory_space<vmem>>, vector<8x512xbf16>
    tpu.vector_store %arg10[%c24_96, %c0_97], %349 {strides = array<i32>} : memref<64x512xbf16, #tpu.memory_space<vmem>>, vector<8x512xbf16>,
    %351 = vector.extract_strided_slice %330 {offsets = [32, 0], sizes = [8, 512], strides = [1, 1]} : vector<64x512xf32> to vector<8x512xf32>
    %352 = vector.extract_strided_slice %330 {offsets = [24, 0], sizes = [8, 512], strides = [1, 1]} : vector<64x512xf32> to vector<8x512xf32>
    %353 = arith.select %9, %351, %352 : vector<8x512xi1>, vector<8x512xf32>
    %354 = arith.truncf %353 : vector<8x512xf32> to vector<8x512xbf16>
    %c32_98 = arith.constant 32 : index
    %c0_99 = arith.constant 0 : index
    %355 = vector.load %arg10[%c32_98, %c0_99] : memref<64x512xbf16, #tpu.memory_space<vmem>>, vector<8x512xbf16>
    tpu.vector_store %arg10[%c32_98, %c0_99], %354 {strides = array<i32>} : memref<64x512xbf16, #tpu.memory_space<vmem>>, vector<8x512xbf16>,
    %356 = vector.extract_strided_slice %330 {offsets = [40, 0], sizes = [8, 512], strides = [1, 1]} : vector<64x512xf32> to vector<8x512xf32>
    %357 = vector.extract_strided_slice %330 {offsets = [16, 0], sizes = [8, 512], strides = [1, 1]} : vector<64x512xf32> to vector<8x512xf32>
    %358 = arith.select %9, %356, %357 : vector<8x512xi1>, vector<8x512xf32>
    %359 = arith.truncf %358 : vector<8x512xf32> to vector<8x512xbf16>
    %c40_100 = arith.constant 40 : index
    %c0_101 = arith.constant 0 : index
    %360 = vector.load %arg10[%c40_100, %c0_101] : memref<64x512xbf16, #tpu.memory_space<vmem>>, vector<8x512xbf16>
    tpu.vector_store %arg10[%c40_100, %c0_101], %359 {strides = array<i32>} : memref<64x512xbf16, #tpu.memory_space<vmem>>, vector<8x512xbf16>,
    %361 = vector.extract_strided_slice %330 {offsets = [48, 0], sizes = [8, 512], strides = [1, 1]} : vector<64x512xf32> to vector<8x512xf32>
    %362 = vector.extract_strided_slice %330 {offsets = [8, 0], sizes = [8, 512], strides = [1, 1]} : vector<64x512xf32> to vector<8x512xf32>
    %363 = arith.select %9, %361, %362 : vector<8x512xi1>, vector<8x512xf32>
    %364 = arith.truncf %363 : vector<8x512xf32> to vector<8x512xbf16>
    %c48_102 = arith.constant 48 : index
    %c0_103 = arith.constant 0 : index
    %365 = vector.load %arg10[%c48_102, %c0_103] : memref<64x512xbf16, #tpu.memory_space<vmem>>, vector<8x512xbf16>
    tpu.vector_store %arg10[%c48_102, %c0_103], %364 {strides = array<i32>} : memref<64x512xbf16, #tpu.memory_space<vmem>>, vector<8x512xbf16>,
    %366 = vector.extract_strided_slice %330 {offsets = [56, 0], sizes = [8, 512], strides = [1, 1]} : vector<64x512xf32> to vector<8x512xf32>
    %367 = vector.extract_strided_slice %330 {offsets = [0, 0], sizes = [8, 512], strides = [1, 1]} : vector<64x512xf32> to vector<8x512xf32>
    %368 = arith.select %9, %366, %367 : vector<8x512xi1>, vector<8x512xf32>
    %369 = arith.truncf %368 : vector<8x512xf32> to vector<8x512xbf16>
    %c56_104 = arith.constant 56 : index
    %c0_105 = arith.constant 0 : index
    %370 = vector.load %arg10[%c56_104, %c0_105] : memref<64x512xbf16, #tpu.memory_space<vmem>>, vector<8x512xbf16>
    tpu.vector_store %arg10[%c56_104, %c0_105], %369 {strides = array<i32>} : memref<64x512xbf16, #tpu.memory_space<vmem>>, vector<8x512xbf16>,
    %c0_106 = arith.constant 0 : index
    %c0_107 = arith.constant 0 : index
    %371 = vector.load %arg6[%c0_106, %c0_107] : memref<128x512xbf16, #tpu.memory_space<vmem>>, vector<128x512xbf16>
    %cst_108 = arith.constant 0.000000e+00 : f32
    %372 = vector.broadcast %cst_108 : f32 to vector<8x128xf32>
    %cst_109 = arith.constant 0.000000e+00 : f32
    %373 = vector.broadcast %cst_109 : f32 to vector<8x128xf32>
    %c0_110 = arith.constant 0 : index
    %c0_111 = arith.constant 0 : index
    %374 = vector.load %arg10[%c0_110, %c0_111] : memref<64x512xbf16, #tpu.memory_space<vmem>>, vector<8x512xbf16>
    %375 = arith.extf %374 : vector<8x512xbf16> to vector<8x512xf32>
    %376 = arith.truncf %372 : vector<8x128xf32> to vector<8x128xbf16>
    %cst_112 = arith.constant dense<0.000000e+00> : vector<8x512xf32>
    %377 = tpu.matmul %376, %371, %cst_112 {dimension_numbers = #tpu.dot_dimension_numbers<[1], [0], [0], [1], [0, 0, 1, 1], [], []>} : vector<8x128xbf16>, vector<128x512xbf16>, vector<8x512xf32> -> vector<8x512xf32>
    %378 = arith.addf %375, %377 : vector<8x512xf32>
    %379 = vector.extract_strided_slice %378 {offsets = [0, 0], sizes = [8, 128], strides = [1, 1]} : vector<8x512xf32> to vector<8x128xf32>
    %380 = arith.negf %379 : vector<8x128xf32>
    %381 = math.exp %380 : vector<8x128xf32>
    %cst_113 = arith.constant 1.000000e+00 : f32
    %382 = vector.broadcast %cst_113 : f32 to vector<8x128xf32>
    %383 = arith.addf %382, %381 : vector<8x128xf32>
    %384 = arith.divf %382, %383 : vector<8x128xf32>
    %385 = vector.extract_strided_slice %378 {offsets = [0, 128], sizes = [8, 128], strides = [1, 1]} : vector<8x512xf32> to vector<8x128xf32>
    %386 = arith.negf %385 : vector<8x128xf32>
    %387 = math.exp %386 : vector<8x128xf32>
    %cst_114 = arith.constant 1.000000e+00 : f32
    %388 = vector.broadcast %cst_114 : f32 to vector<8x128xf32>
    %389 = arith.addf %388, %387 : vector<8x128xf32>
    %390 = arith.divf %388, %389 : vector<8x128xf32>
    %391 = vector.extract_strided_slice %378 {offsets = [0, 256], sizes = [8, 128], strides = [1, 1]} : vector<8x512xf32> to vector<8x128xf32>
    %392 = math.tanh %391 : vector<8x128xf32>
    %393 = vector.extract_strided_slice %378 {offsets = [0, 384], sizes = [8, 128], strides = [1, 1]} : vector<8x512xf32> to vector<8x128xf32>
    %394 = arith.negf %393 : vector<8x128xf32>
    %395 = math.exp %394 : vector<8x128xf32>
    %cst_115 = arith.constant 1.000000e+00 : f32
    %396 = vector.broadcast %cst_115 : f32 to vector<8x128xf32>
    %397 = arith.addf %396, %395 : vector<8x128xf32>
    %398 = arith.divf %396, %397 : vector<8x128xf32>
    %399 = arith.mulf %390, %373 : vector<8x128xf32>
    %400 = arith.mulf %384, %392 : vector<8x128xf32>
    %401 = arith.addf %399, %400 : vector<8x128xf32>
    %402 = math.tanh %401 : vector<8x128xf32>
    %403 = arith.mulf %398, %402 : vector<8x128xf32>
    %c8_116 = arith.constant 8 : index
    %c0_117 = arith.constant 0 : index
    %404 = vector.load %arg10[%c8_116, %c0_117] : memref<64x512xbf16, #tpu.memory_space<vmem>>, vector<8x512xbf16>
    %405 = arith.extf %404 : vector<8x512xbf16> to vector<8x512xf32>
    %406 = arith.truncf %403 : vector<8x128xf32> to vector<8x128xbf16>
    %cst_118 = arith.constant dense<0.000000e+00> : vector<8x512xf32>
    %407 = tpu.matmul %406, %371, %cst_118 {dimension_numbers = #tpu.dot_dimension_numbers<[1], [0], [0], [1], [0, 0, 1, 1], [], []>} : vector<8x128xbf16>, vector<128x512xbf16>, vector<8x512xf32> -> vector<8x512xf32>
    %408 = arith.addf %405, %407 : vector<8x512xf32>
    %409 = vector.extract_strided_slice %408 {offsets = [0, 0], sizes = [8, 128], strides = [1, 1]} : vector<8x512xf32> to vector<8x128xf32>
    %410 = arith.negf %409 : vector<8x128xf32>
    %411 = math.exp %410 : vector<8x128xf32>
    %cst_119 = arith.constant 1.000000e+00 : f32
    %412 = vector.broadcast %cst_119 : f32 to vector<8x128xf32>
    %413 = arith.addf %412, %411 : vector<8x128xf32>
    %414 = arith.divf %412, %413 : vector<8x128xf32>
    %415 = vector.extract_strided_slice %408 {offsets = [0, 128], sizes = [8, 128], strides = [1, 1]} : vector<8x512xf32> to vector<8x128xf32>
    %416 = arith.negf %415 : vector<8x128xf32>
    %417 = math.exp %416 : vector<8x128xf32>
    %cst_120 = arith.constant 1.000000e+00 : f32
    %418 = vector.broadcast %cst_120 : f32 to vector<8x128xf32>
    %419 = arith.addf %418, %417 : vector<8x128xf32>
    %420 = arith.divf %418, %419 : vector<8x128xf32>
    %421 = vector.extract_strided_slice %408 {offsets = [0, 256], sizes = [8, 128], strides = [1, 1]} : vector<8x512xf32> to vector<8x128xf32>
    %422 = math.tanh %421 : vector<8x128xf32>
    %423 = vector.extract_strided_slice %408 {offsets = [0, 384], sizes = [8, 128], strides = [1, 1]} : vector<8x512xf32> to vector<8x128xf32>
    %424 = arith.negf %423 : vector<8x128xf32>
    %425 = math.exp %424 : vector<8x128xf32>
    %cst_121 = arith.constant 1.000000e+00 : f32
    %426 = vector.broadcast %cst_121 : f32 to vector<8x128xf32>
    %427 = arith.addf %426, %425 : vector<8x128xf32>
    %428 = arith.divf %426, %427 : vector<8x128xf32>
    %429 = arith.mulf %420, %401 : vector<8x128xf32>
    %430 = arith.mulf %414, %422 : vector<8x128xf32>
    %431 = arith.addf %429, %430 : vector<8x128xf32>
    %432 = math.tanh %431 : vector<8x128xf32>
    %433 = arith.mulf %428, %432 : vector<8x128xf32>
    %c16_122 = arith.constant 16 : index
    %c0_123 = arith.constant 0 : index
    %434 = vector.load %arg10[%c16_122, %c0_123] : memref<64x512xbf16, #tpu.memory_space<vmem>>, vector<8x512xbf16>
    %435 = arith.extf %434 : vector<8x512xbf16> to vector<8x512xf32>
    %436 = arith.truncf %433 : vector<8x128xf32> to vector<8x128xbf16>
    %cst_124 = arith.constant dense<0.000000e+00> : vector<8x512xf32>
    %437 = tpu.matmul %436, %371, %cst_124 {dimension_numbers = #tpu.dot_dimension_numbers<[1], [0], [0], [1], [0, 0, 1, 1], [], []>} : vector<8x128xbf16>, vector<128x512xbf16>, vector<8x512xf32> -> vector<8x512xf32>
    %438 = arith.addf %435, %437 : vector<8x512xf32>
    %439 = vector.extract_strided_slice %438 {offsets = [0, 0], sizes = [8, 128], strides = [1, 1]} : vector<8x512xf32> to vector<8x128xf32>
    %440 = arith.negf %439 : vector<8x128xf32>
    %441 = math.exp %440 : vector<8x128xf32>
    %cst_125 = arith.constant 1.000000e+00 : f32
    %442 = vector.broadcast %cst_125 : f32 to vector<8x128xf32>
    %443 = arith.addf %442, %441 : vector<8x128xf32>
    %444 = arith.divf %442, %443 : vector<8x128xf32>
    %445 = vector.extract_strided_slice %438 {offsets = [0, 128], sizes = [8, 128], strides = [1, 1]} : vector<8x512xf32> to vector<8x128xf32>
    %446 = arith.negf %445 : vector<8x128xf32>
    %447 = math.exp %446 : vector<8x128xf32>
    %cst_126 = arith.constant 1.000000e+00 : f32
    %448 = vector.broadcast %cst_126 : f32 to vector<8x128xf32>
    %449 = arith.addf %448, %447 : vector<8x128xf32>
    %450 = arith.divf %448, %449 : vector<8x128xf32>
    %451 = vector.extract_strided_slice %438 {offsets = [0, 256], sizes = [8, 128], strides = [1, 1]} : vector<8x512xf32> to vector<8x128xf32>
    %452 = math.tanh %451 : vector<8x128xf32>
    %453 = vector.extract_strided_slice %438 {offsets = [0, 384], sizes = [8, 128], strides = [1, 1]} : vector<8x512xf32> to vector<8x128xf32>
    %454 = arith.negf %453 : vector<8x128xf32>
    %455 = math.exp %454 : vector<8x128xf32>
    %cst_127 = arith.constant 1.000000e+00 : f32
    %456 = vector.broadcast %cst_127 : f32 to vector<8x128xf32>
    %457 = arith.addf %456, %455 : vector<8x128xf32>
    %458 = arith.divf %456, %457 : vector<8x128xf32>
    %459 = arith.mulf %450, %431 : vector<8x128xf32>
    %460 = arith.mulf %444, %452 : vector<8x128xf32>
    %461 = arith.addf %459, %460 : vector<8x128xf32>
    %462 = math.tanh %461 : vector<8x128xf32>
    %463 = arith.mulf %458, %462 : vector<8x128xf32>
    %c24_128 = arith.constant 24 : index
    %c0_129 = arith.constant 0 : index
    %464 = vector.load %arg10[%c24_128, %c0_129] : memref<64x512xbf16, #tpu.memory_space<vmem>>, vector<8x512xbf16>
    %465 = arith.extf %464 : vector<8x512xbf16> to vector<8x512xf32>
    %466 = arith.truncf %463 : vector<8x128xf32> to vector<8x128xbf16>
    %cst_130 = arith.constant dense<0.000000e+00> : vector<8x512xf32>
    %467 = tpu.matmul %466, %371, %cst_130 {dimension_numbers = #tpu.dot_dimension_numbers<[1], [0], [0], [1], [0, 0, 1, 1], [], []>} : vector<8x128xbf16>, vector<128x512xbf16>, vector<8x512xf32> -> vector<8x512xf32>
    %468 = arith.addf %465, %467 : vector<8x512xf32>
    %469 = vector.extract_strided_slice %468 {offsets = [0, 0], sizes = [8, 128], strides = [1, 1]} : vector<8x512xf32> to vector<8x128xf32>
    %470 = arith.negf %469 : vector<8x128xf32>
    %471 = math.exp %470 : vector<8x128xf32>
    %cst_131 = arith.constant 1.000000e+00 : f32
    %472 = vector.broadcast %cst_131 : f32 to vector<8x128xf32>
    %473 = arith.addf %472, %471 : vector<8x128xf32>
    %474 = arith.divf %472, %473 : vector<8x128xf32>
    %475 = vector.extract_strided_slice %468 {offsets = [0, 128], sizes = [8, 128], strides = [1, 1]} : vector<8x512xf32> to vector<8x128xf32>
    %476 = arith.negf %475 : vector<8x128xf32>
    %477 = math.exp %476 : vector<8x128xf32>
    %cst_132 = arith.constant 1.000000e+00 : f32
    %478 = vector.broadcast %cst_132 : f32 to vector<8x128xf32>
    %479 = arith.addf %478, %477 : vector<8x128xf32>
    %480 = arith.divf %478, %479 : vector<8x128xf32>
    %481 = vector.extract_strided_slice %468 {offsets = [0, 256], sizes = [8, 128], strides = [1, 1]} : vector<8x512xf32> to vector<8x128xf32>
    %482 = math.tanh %481 : vector<8x128xf32>
    %483 = vector.extract_strided_slice %468 {offsets = [0, 384], sizes = [8, 128], strides = [1, 1]} : vector<8x512xf32> to vector<8x128xf32>
    %484 = arith.negf %483 : vector<8x128xf32>
    %485 = math.exp %484 : vector<8x128xf32>
    %cst_133 = arith.constant 1.000000e+00 : f32
    %486 = vector.broadcast %cst_133 : f32 to vector<8x128xf32>
    %487 = arith.addf %486, %485 : vector<8x128xf32>
    %488 = arith.divf %486, %487 : vector<8x128xf32>
    %489 = arith.mulf %480, %461 : vector<8x128xf32>
    %490 = arith.mulf %474, %482 : vector<8x128xf32>
    %491 = arith.addf %489, %490 : vector<8x128xf32>
    %492 = math.tanh %491 : vector<8x128xf32>
    %493 = arith.mulf %488, %492 : vector<8x128xf32>
    %c32_134 = arith.constant 32 : index
    %c0_135 = arith.constant 0 : index
    %494 = vector.load %arg10[%c32_134, %c0_135] : memref<64x512xbf16, #tpu.memory_space<vmem>>, vector<8x512xbf16>
    %495 = arith.extf %494 : vector<8x512xbf16> to vector<8x512xf32>
    %496 = arith.truncf %493 : vector<8x128xf32> to vector<8x128xbf16>
    %cst_136 = arith.constant dense<0.000000e+00> : vector<8x512xf32>
    %497 = tpu.matmul %496, %371, %cst_136 {dimension_numbers = #tpu.dot_dimension_numbers<[1], [0], [0], [1], [0, 0, 1, 1], [], []>} : vector<8x128xbf16>, vector<128x512xbf16>, vector<8x512xf32> -> vector<8x512xf32>
    %498 = arith.addf %495, %497 : vector<8x512xf32>
    %499 = vector.extract_strided_slice %498 {offsets = [0, 0], sizes = [8, 128], strides = [1, 1]} : vector<8x512xf32> to vector<8x128xf32>
    %500 = arith.negf %499 : vector<8x128xf32>
    %501 = math.exp %500 : vector<8x128xf32>
    %cst_137 = arith.constant 1.000000e+00 : f32
    %502 = vector.broadcast %cst_137 : f32 to vector<8x128xf32>
    %503 = arith.addf %502, %501 : vector<8x128xf32>
    %504 = arith.divf %502, %503 : vector<8x128xf32>
    %505 = vector.extract_strided_slice %498 {offsets = [0, 128], sizes = [8, 128], strides = [1, 1]} : vector<8x512xf32> to vector<8x128xf32>
    %506 = arith.negf %505 : vector<8x128xf32>
    %507 = math.exp %506 : vector<8x128xf32>
    %cst_138 = arith.constant 1.000000e+00 : f32
    %508 = vector.broadcast %cst_138 : f32 to vector<8x128xf32>
    %509 = arith.addf %508, %507 : vector<8x128xf32>
    %510 = arith.divf %508, %509 : vector<8x128xf32>
    %511 = vector.extract_strided_slice %498 {offsets = [0, 256], sizes = [8, 128], strides = [1, 1]} : vector<8x512xf32> to vector<8x128xf32>
    %512 = math.tanh %511 : vector<8x128xf32>
    %513 = vector.extract_strided_slice %498 {offsets = [0, 384], sizes = [8, 128], strides = [1, 1]} : vector<8x512xf32> to vector<8x128xf32>
    %514 = arith.negf %513 : vector<8x128xf32>
    %515 = math.exp %514 : vector<8x128xf32>
    %cst_139 = arith.constant 1.000000e+00 : f32
    %516 = vector.broadcast %cst_139 : f32 to vector<8x128xf32>
    %517 = arith.addf %516, %515 : vector<8x128xf32>
    %518 = arith.divf %516, %517 : vector<8x128xf32>
    %519 = arith.mulf %510, %491 : vector<8x128xf32>
    %520 = arith.mulf %504, %512 : vector<8x128xf32>
    %521 = arith.addf %519, %520 : vector<8x128xf32>
    %522 = math.tanh %521 : vector<8x128xf32>
    %523 = arith.mulf %518, %522 : vector<8x128xf32>
    %c40_140 = arith.constant 40 : index
    %c0_141 = arith.constant 0 : index
    %524 = vector.load %arg10[%c40_140, %c0_141] : memref<64x512xbf16, #tpu.memory_space<vmem>>, vector<8x512xbf16>
    %525 = arith.extf %524 : vector<8x512xbf16> to vector<8x512xf32>
    %526 = arith.truncf %523 : vector<8x128xf32> to vector<8x128xbf16>
    %cst_142 = arith.constant dense<0.000000e+00> : vector<8x512xf32>
    %527 = tpu.matmul %526, %371, %cst_142 {dimension_numbers = #tpu.dot_dimension_numbers<[1], [0], [0], [1], [0, 0, 1, 1], [], []>} : vector<8x128xbf16>, vector<128x512xbf16>, vector<8x512xf32> -> vector<8x512xf32>
    %528 = arith.addf %525, %527 : vector<8x512xf32>
    %529 = vector.extract_strided_slice %528 {offsets = [0, 0], sizes = [8, 128], strides = [1, 1]} : vector<8x512xf32> to vector<8x128xf32>
    %530 = arith.negf %529 : vector<8x128xf32>
    %531 = math.exp %530 : vector<8x128xf32>
    %cst_143 = arith.constant 1.000000e+00 : f32
    %532 = vector.broadcast %cst_143 : f32 to vector<8x128xf32>
    %533 = arith.addf %532, %531 : vector<8x128xf32>
    %534 = arith.divf %532, %533 : vector<8x128xf32>
    %535 = vector.extract_strided_slice %528 {offsets = [0, 128], sizes = [8, 128], strides = [1, 1]} : vector<8x512xf32> to vector<8x128xf32>
    %536 = arith.negf %535 : vector<8x128xf32>
    %537 = math.exp %536 : vector<8x128xf32>
    %cst_144 = arith.constant 1.000000e+00 : f32
    %538 = vector.broadcast %cst_144 : f32 to vector<8x128xf32>
    %539 = arith.addf %538, %537 : vector<8x128xf32>
    %540 = arith.divf %538, %539 : vector<8x128xf32>
    %541 = vector.extract_strided_slice %528 {offsets = [0, 256], sizes = [8, 128], strides = [1, 1]} : vector<8x512xf32> to vector<8x128xf32>
    %542 = math.tanh %541 : vector<8x128xf32>
    %543 = vector.extract_strided_slice %528 {offsets = [0, 384], sizes = [8, 128], strides = [1, 1]} : vector<8x512xf32> to vector<8x128xf32>
    %544 = arith.negf %543 : vector<8x128xf32>
    %545 = math.exp %544 : vector<8x128xf32>
    %cst_145 = arith.constant 1.000000e+00 : f32
    %546 = vector.broadcast %cst_145 : f32 to vector<8x128xf32>
    %547 = arith.addf %546, %545 : vector<8x128xf32>
    %548 = arith.divf %546, %547 : vector<8x128xf32>
    %549 = arith.mulf %540, %521 : vector<8x128xf32>
    %550 = arith.mulf %534, %542 : vector<8x128xf32>
    %551 = arith.addf %549, %550 : vector<8x128xf32>
    %552 = math.tanh %551 : vector<8x128xf32>
    %553 = arith.mulf %548, %552 : vector<8x128xf32>
    %c48_146 = arith.constant 48 : index
    %c0_147 = arith.constant 0 : index
    %554 = vector.load %arg10[%c48_146, %c0_147] : memref<64x512xbf16, #tpu.memory_space<vmem>>, vector<8x512xbf16>
    %555 = arith.extf %554 : vector<8x512xbf16> to vector<8x512xf32>
    %556 = arith.truncf %553 : vector<8x128xf32> to vector<8x128xbf16>
    %cst_148 = arith.constant dense<0.000000e+00> : vector<8x512xf32>
    %557 = tpu.matmul %556, %371, %cst_148 {dimension_numbers = #tpu.dot_dimension_numbers<[1], [0], [0], [1], [0, 0, 1, 1], [], []>} : vector<8x128xbf16>, vector<128x512xbf16>, vector<8x512xf32> -> vector<8x512xf32>
    %558 = arith.addf %555, %557 : vector<8x512xf32>
    %559 = vector.extract_strided_slice %558 {offsets = [0, 0], sizes = [8, 128], strides = [1, 1]} : vector<8x512xf32> to vector<8x128xf32>
    %560 = arith.negf %559 : vector<8x128xf32>
    %561 = math.exp %560 : vector<8x128xf32>
    %cst_149 = arith.constant 1.000000e+00 : f32
    %562 = vector.broadcast %cst_149 : f32 to vector<8x128xf32>
    %563 = arith.addf %562, %561 : vector<8x128xf32>
    %564 = arith.divf %562, %563 : vector<8x128xf32>
    %565 = vector.extract_strided_slice %558 {offsets = [0, 128], sizes = [8, 128], strides = [1, 1]} : vector<8x512xf32> to vector<8x128xf32>
    %566 = arith.negf %565 : vector<8x128xf32>
    %567 = math.exp %566 : vector<8x128xf32>
    %cst_150 = arith.constant 1.000000e+00 : f32
    %568 = vector.broadcast %cst_150 : f32 to vector<8x128xf32>
    %569 = arith.addf %568, %567 : vector<8x128xf32>
    %570 = arith.divf %568, %569 : vector<8x128xf32>
    %571 = vector.extract_strided_slice %558 {offsets = [0, 256], sizes = [8, 128], strides = [1, 1]} : vector<8x512xf32> to vector<8x128xf32>
    %572 = math.tanh %571 : vector<8x128xf32>
    %573 = vector.extract_strided_slice %558 {offsets = [0, 384], sizes = [8, 128], strides = [1, 1]} : vector<8x512xf32> to vector<8x128xf32>
    %574 = arith.negf %573 : vector<8x128xf32>
    %575 = math.exp %574 : vector<8x128xf32>
    %cst_151 = arith.constant 1.000000e+00 : f32
    %576 = vector.broadcast %cst_151 : f32 to vector<8x128xf32>
    %577 = arith.addf %576, %575 : vector<8x128xf32>
    %578 = arith.divf %576, %577 : vector<8x128xf32>
    %579 = arith.mulf %570, %551 : vector<8x128xf32>
    %580 = arith.mulf %564, %572 : vector<8x128xf32>
    %581 = arith.addf %579, %580 : vector<8x128xf32>
    %582 = math.tanh %581 : vector<8x128xf32>
    %583 = arith.mulf %578, %582 : vector<8x128xf32>
    %c56_152 = arith.constant 56 : index
    %c0_153 = arith.constant 0 : index
    %584 = vector.load %arg10[%c56_152, %c0_153] : memref<64x512xbf16, #tpu.memory_space<vmem>>, vector<8x512xbf16>
    %585 = arith.extf %584 : vector<8x512xbf16> to vector<8x512xf32>
    %586 = arith.truncf %583 : vector<8x128xf32> to vector<8x128xbf16>
    %cst_154 = arith.constant dense<0.000000e+00> : vector<8x512xf32>
    %587 = tpu.matmul %586, %371, %cst_154 {dimension_numbers = #tpu.dot_dimension_numbers<[1], [0], [0], [1], [0, 0, 1, 1], [], []>} : vector<8x128xbf16>, vector<128x512xbf16>, vector<8x512xf32> -> vector<8x512xf32>
    %588 = arith.addf %585, %587 : vector<8x512xf32>
    %589 = vector.extract_strided_slice %588 {offsets = [0, 0], sizes = [8, 128], strides = [1, 1]} : vector<8x512xf32> to vector<8x128xf32>
    %590 = arith.negf %589 : vector<8x128xf32>
    %591 = math.exp %590 : vector<8x128xf32>
    %cst_155 = arith.constant 1.000000e+00 : f32
    %592 = vector.broadcast %cst_155 : f32 to vector<8x128xf32>
    %593 = arith.addf %592, %591 : vector<8x128xf32>
    %594 = arith.divf %592, %593 : vector<8x128xf32>
    %595 = vector.extract_strided_slice %588 {offsets = [0, 128], sizes = [8, 128], strides = [1, 1]} : vector<8x512xf32> to vector<8x128xf32>
    %596 = arith.negf %595 : vector<8x128xf32>
    %597 = math.exp %596 : vector<8x128xf32>
    %cst_156 = arith.constant 1.000000e+00 : f32
    %598 = vector.broadcast %cst_156 : f32 to vector<8x128xf32>
    %599 = arith.addf %598, %597 : vector<8x128xf32>
    %600 = arith.divf %598, %599 : vector<8x128xf32>
    %601 = vector.extract_strided_slice %588 {offsets = [0, 256], sizes = [8, 128], strides = [1, 1]} : vector<8x512xf32> to vector<8x128xf32>
    %602 = math.tanh %601 : vector<8x128xf32>
    %603 = vector.extract_strided_slice %588 {offsets = [0, 384], sizes = [8, 128], strides = [1, 1]} : vector<8x512xf32> to vector<8x128xf32>
    %604 = arith.negf %603 : vector<8x128xf32>
    %605 = math.exp %604 : vector<8x128xf32>
    %cst_157 = arith.constant 1.000000e+00 : f32
    %606 = vector.broadcast %cst_157 : f32 to vector<8x128xf32>
    %607 = arith.addf %606, %605 : vector<8x128xf32>
    %608 = arith.divf %606, %607 : vector<8x128xf32>
    %609 = arith.mulf %600, %581 : vector<8x128xf32>
    %610 = arith.mulf %594, %602 : vector<8x128xf32>
    %611 = arith.addf %609, %610 : vector<8x128xf32>
    %612 = math.tanh %611 : vector<8x128xf32>
    %613 = arith.mulf %608, %612 : vector<8x128xf32>
    %c0_158 = arith.constant 0 : index
    %c0_159 = arith.constant 0 : index
    %614 = vector.load %arg7[%c0_158, %c0_159] : memref<8x128xf32, #tpu.memory_space<vmem>>, vector<8x128xf32>
    tpu.vector_store %arg7[%c0_158, %c0_159], %613 {strides = array<i32>} : memref<8x128xf32, #tpu.memory_space<vmem>>, vector<8x128xf32>,
    return
  }
}

</mosaic_0001>

<llo_original>
// kernel: tpu_custom_call.1
$region0: #{tpu_custom_call.1}
  #allocation0 [shape = 'u32[]', space=smem, size = 0x4, offset = 0x4, fixed_abs, tag = 'smem constant byte address 0x4 - core index']
  #allocation1 [shape = 'u32[144,128]{1,0:T(1,128)}', space=vmem, size = 0x12000, scoped, tag = 'internal scratch']
  #allocation2 [shape = 'bf16[64,512]{1,0:T(16,128)(2,1)}', space=vmem, size = 0x10000, scoped, tag = 'scratch operand']
  #allocation3 [shape = 'bf16[64,128]{1,0:T(16,128)(2,1)}', space=vmem, size = 0x4000, scoped, tag = 'scratch operand']
  #allocation4 [shape = 'bf16[64,512]{1,0:T(16,128)(2,1)}', space=vmem, size = 0x10000, scoped, tag = 'scratch operand']
  %s0 = inlined_call_operand.vmem [shape: bf16[64,4], index: 0, kind: input, shape index: {}]
  %s1 = inlined_call_operand.vmem [shape: bf16[4,512], index: 1, kind: input, shape index: {}]
  %s2 = inlined_call_operand.vmem [shape: bf16[1,512], index: 2, kind: input, shape index: {}]
  %s3 = inlined_call_operand.hbm [shape: bf16[128,512], index: 3, kind: input, shape index: {}]
  %s4 = inlined_call_operand.hbm [shape: bf16[128,512], index: 4, kind: input, shape index: {}]
  %s5 = inlined_call_operand.vmem [shape: bf16[1,512], index: 5, kind: input, shape index: {}]
  %s6 = inlined_call_operand.hbm [shape: bf16[128,512], index: 6, kind: input, shape index: {}]
  %s7 = inlined_call_operand.hbm [shape: f32[8,128], index: 7, kind: output, shape index: {}]
  %s8 = sld [smem:[#allocation0]]
  $region50: #{tpu_custom_call.1} parent=0
    _
  %s10 = ssub.s32 1, %s8
  %s11 = scalar_select 0, %s10, %s8
  $region1: #{tpu_custom_call.1} parent=0
    #allocation5 [shape = 'u8[131072]{0}', space=vmem, size = 0x20000, scoped, tag = 'input window, operand 3, single buffered']
    #allocation6 [shape = 's32[1]{0}', space=sflag, size = 0x4, scoped, tag = 'scoped memory for tpu_custom_call.1']
    #allocation7 [shape = 's32[1]{0}', space=sflag, size = 0x4, scoped, tag = 'scoped memory for tpu_custom_call.1']
    #allocation8 [shape = 'u8[131072]{0}', space=vmem, size = 0x20000, scoped, tag = 'input window, operand 4, single buffered']
    #allocation9 [shape = 's32[1]{0}', space=sflag, size = 0x4, scoped, tag = 'scoped memory for tpu_custom_call.1']
    #allocation10 [shape = 'u8[131072]{0}', space=vmem, size = 0x20000, scoped, tag = 'input window, operand 6, single buffered']
    #allocation11 [shape = 'u8[4096]{0}', space=vmem, size = 0x1000, scoped, tag = 'output window, operand 0, single buffered']
    %12 = vsyncpa [#allocation6], 0
    %13 = vsyncpa [#allocation9], 0
    %14 = vsyncpa [#allocation7], 0
    // Predicated region
    $region2: #{tpu_custom_call.1} parent=1 // pred_check
      _
    $region3: #{tpu_custom_call.1} parent=1 // pred_check_branch
      %16 = sbr.rel (0) target = $region5
    $region4: #{tpu_custom_call.1} parent=1 // pred_region
      _
    $region5: #{tpu_custom_call.1} parent=1 // pred_fallthru
      _
    // Predicated region
    $region6: #{tpu_custom_call.1} parent=1 // pred_check
      _
    $region7: #{tpu_custom_call.1} parent=1 // pred_check_branch
      %18 = sbr.rel (0) target = $region9
    $region8: #{tpu_custom_call.1} parent=1 // pred_region
      _
    $region9: #{tpu_custom_call.1} parent=1 // pred_fallthru
      _
    // Predicated region
    $region10: #{tpu_custom_call.1} parent=1 // pred_check
      _
    $region11: #{tpu_custom_call.1} parent=1 // pred_check_branch
      %20 = sbr.rel (0) target = $region13
    $region12: #{tpu_custom_call.1} parent=1 // pred_region
      _
    $region13: #{tpu_custom_call.1} parent=1 // pred_fallthru
      _
    // Predicated region
    $region14: #{tpu_custom_call.1} parent=1 // pred_check
      _
    $region15: #{tpu_custom_call.1} parent=1 // pred_check_branch
      %22 = sbr.rel (0) target = $region17
    $region16: #{tpu_custom_call.1} parent=1 // pred_region
      %s24 = ssub.s32 4096, 4096
      %25 = vsyncadd [#allocation6], %s24
      %s26 = sshll.u32 [#allocation5], 4
      %s27 = int_to_ptr.vmem [resolvable:$true] %s26
      %32 = dma.hbm_to_vmem [thread:$0]  %s3, 4096, %s27, [#allocation6], 256, 256, 16
    $region17: #{tpu_custom_call.1} parent=1 // pred_fallthru
      _
    // Predicated region
    $region18: #{tpu_custom_call.1} parent=1 // pred_check
      _
    $region19: #{tpu_custom_call.1} parent=1 // pred_check_branch
      %34 = sbr.rel (0) target = $region21
    $region20: #{tpu_custom_call.1} parent=1 // pred_region
      %s36 = ssub.s32 4096, 4096
      %37 = vsyncadd [#allocation9], %s36
      %s38 = sshll.u32 [#allocation8], 4
      %s39 = int_to_ptr.vmem [resolvable:$true] %s38
      %44 = dma.hbm_to_vmem [thread:$0]  %s4, 4096, %s39, [#allocation9], 256, 256, 16
    $region21: #{tpu_custom_call.1} parent=1 // pred_fallthru
      _
    // Predicated region
    $region22: #{tpu_custom_call.1} parent=1 // pred_check
      _
    $region23: #{tpu_custom_call.1} parent=1 // pred_check_branch
      %46 = sbr.rel (0) target = $region25
    $region24: #{tpu_custom_call.1} parent=1 // pred_region
      _
    $region25: #{tpu_custom_call.1} parent=1 // pred_fallthru
      _
    // Predicated region
    $region26: #{tpu_custom_call.1} parent=1 // pred_check
      _
    $region27: #{tpu_custom_call.1} parent=1 // pred_check_branch
      %48 = sbr.rel (0) target = $region29
    $region28: #{tpu_custom_call.1} parent=1 // pred_region
      %s50 = ssub.s32 4096, 4096
      %51 = vsyncadd [#allocation9], %s50
      %s52 = sshll.u32 [#allocation10], 4
      %s53 = int_to_ptr.vmem [resolvable:$true] %s52
      %58 = dma.hbm_to_vmem [thread:$0]  %s6, 4096, %s53, [#allocation9], 256, 256, 16
    $region29: #{tpu_custom_call.1} parent=1 // pred_fallthru
      _
    // Predicated region
    $region30: #{tpu_custom_call.1} parent=1 // pred_check
      _
    $region31: #{tpu_custom_call.1} parent=1 // pred_check_branch
      %60 = sbr.rel (0) target = $region33
    $region32: #{tpu_custom_call.1} parent=1 // pred_region
      %61 = dma.done [#allocation6], 4096
    $region33: #{tpu_custom_call.1} parent=1 // pred_fallthru
      _
    // Predicated region
    $region34: #{tpu_custom_call.1} parent=1 // pred_check
      _
    $region35: #{tpu_custom_call.1} parent=1 // pred_check_branch
      %63 = sbr.rel (0) target = $region37
    $region36: #{tpu_custom_call.1} parent=1 // pred_region
      %64 = dma.done [#allocation9], 4096
    $region37: #{tpu_custom_call.1} parent=1 // pred_fallthru
      _
    // Predicated region
    $region38: #{tpu_custom_call.1} parent=1 // pred_check
      _
    $region39: #{tpu_custom_call.1} parent=1 // pred_check_branch
      %66 = sbr.rel (0) target = $region41
    $region40: #{tpu_custom_call.1} parent=1 // pred_region
      %67 = dma.done [#allocation9], 4096
    $region41: #{tpu_custom_call.1} parent=1 // pred_fallthru
      _
    %v69 = vlaneseq
    %v70 = vand.u32 %v69, 127
    %vm71 = vcmp.lt.s32.totalorder %v70, 64
    %vm72 = vcmp.lt.s32.totalorder %v70, 32
    %v73 = vld [vmem:[%s0] sm:$0xf]
    %v74 = vld [vmem:[%s0 + $0x4] sm:$0xf]
    %v75 = vld [vmem:[%s0 + $0x8] sm:$0xf]
    %v76 = vld [vmem:[%s0 + $0xc] sm:$0xf]
    %v77 = vld [vmem:[%s0 + $0x10] sm:$0xf]
    %v78 = vld [vmem:[%s0 + $0x14] sm:$0xf]
    %v79 = vld [vmem:[%s0 + $0x18] sm:$0xf]
    %v80 = vld [vmem:[%s0 + $0x1c] sm:$0xf]
    %v81 = vld [vmem:[%s1] sm:$0xff]
    %v82 = vld [vmem:[%s2] sm:$0xf]
    %v83 = vunpack.c.l.bf16 %v82
    %v85 = vlaneseq
    %v86 = vshrl.u32 %v85, 7
    %v87 = vsub.s32 0, %v86
    %v88 = vrot.slane %v83, %v87
    %v89 = vlaneseq
    %v90 = vshrl.u32 %v89, 7
    %v91 = vsub.s32 2, %v90
    %v92 = vrot.slane %v83, %v91
    %v93 = vlaneseq
    %v94 = vshrl.u32 %v93, 7
    %v95 = vsub.s32 4, %v94
    %v96 = vrot.slane %v83, %v95
    %v97 = vlaneseq
    %v98 = vshrl.u32 %v97, 7
    %v99 = vsub.s32 6, %v98
    %v100 = vrot.slane %v83, %v99
    %v105 = vlaneseq
    %v106 = vshrl.u32 %v105, 7
    %v107 = vsub.s32 0, %v106
    %v108 = vrot.slane %v88, %v107
    %v109 = vlaneseq
    %v110 = vshrl.u32 %v109, 7
    %v111 = vsub.s32 0, %v110
    %v112 = vrot.slane %v92, %v111
    %v113 = vlaneseq
    %v114 = vshrl.u32 %v113, 7
    %v115 = vsub.s32 0, %v114
    %v116 = vrot.slane %v96, %v115
    %v117 = vlaneseq
    %v118 = vshrl.u32 %v117, 7
    %v119 = vsub.s32 0, %v118
    %v120 = vrot.slane %v100, %v119
    %v129 = vunpack.c.l.b16 %v73
    %v130 = vunpack.c.l.b16 %v74
    %v131 = vunpack.c.l.b16 %v75
    %v132 = vunpack.c.l.b16 %v76
    %v133 = vunpack.c.l.b16 %v77
    %v134 = vunpack.c.l.b16 %v78
    %v135 = vunpack.c.l.b16 %v79
    %v136 = vunpack.c.l.b16 %v80
    %v137 = vpack.c.b16 %v130, %v129
    %v138 = vpack.c.b16 %v132, %v131
    %v139 = vpack.c.b16 %v134, %v133
    %v140 = vpack.c.b16 %v136, %v135
    %v142 = vcombine.high %v81, %v81
    %v144 = vunpack.c.l.s4 1983009808
    %v145 = vunpack.c.0.s8 %v144
    %v146 = vlaneseq
    %v147 = vshrl.u32 %v146, 7
    %v148 = vsub.s32 %v145, %v147
    %v149 = vrot.slane %v81, %v148
    %v151 = vunpack.c.l.s4 1983009808
    %v152 = vunpack.c.0.s8 %v151
    %v153 = vlaneseq
    %v154 = vshrl.u32 %v153, 7
    %v155 = vsub.s32 %v152, %v154
    %v156 = vrot.slane %v142, %v155
    %v157 = vcombine.high %v149, %v149
    %v158 = vcombine.high %v156, %v156
    %vm159 = vcmask 31744
    %v161 = vsel %vm159, %v137, 0
    %v164 = vsel %vm159, %v138, 0
    %v167 = vsel %vm159, %v139, 0
    %v170 = vsel %vm159, %v140, 0
    %vm172 = vcmask 1041408
    %v174 = vsel %vm172, %v149, 0
    %v177 = vsel %vm172, %v157, 0
    %v180 = vsel %vm172, %v156, 0
    %v183 = vsel %vm172, %v158, 0
    %185 = vmatprep.subr.bf16.mxu0 %v177
    %186 = vmatpush1.bf16.msra.mxu0 %v174
    %187 = vmatprep.subr.bf16.mxu0 0
    %188 = vmatpush1.bf16.msra.mxu0 0
    %189 = vmatprep.subr.bf16.mxu0 0
    %190 = vmatpush1.bf16.msra.mxu0 0
    %191 = vmatprep.subr.bf16.mxu0 0
    %192 = vmatpush1.bf16.msra.mxu0 0
    %193 = vmatprep.subr.bf16.mxu0 0
    %194 = vmatpush1.bf16.msra.mxu0 0
    %195 = vmatprep.subr.bf16.mxu0 0
    %196 = vmatpush1.bf16.msra.mxu0 0
    %197 = vmatprep.subr.bf16.mxu0 0
    %198 = vmatpush1.bf16.msra.mxu0 0
    %199 = vmatprep.subr.bf16.mxu0 0
    %200 = vmatpush1.bf16.msra.mxu0 0
    %201 = vmatprep.subr.bf16.mxu0 0
    %202 = vmatpush1.bf16.msra.mxu0 0
    %203 = vmatprep.subr.bf16.mxu0 0
    %204 = vmatpush1.bf16.msra.mxu0 0
    %205 = vmatprep.subr.bf16.mxu0 0
    %206 = vmatpush1.bf16.msra.mxu0 0
    %207 = vmatprep.subr.bf16.mxu0 0
    %208 = vmatpush1.bf16.msra.mxu0 0
    %209 = vmatprep.subr.bf16.mxu0 0
    %210 = vmatpush1.bf16.msra.mxu0 0
    %211 = vmatprep.subr.bf16.mxu0 0
    %212 = vmatpush1.bf16.msra.mxu0 0
    %213 = vmatprep.subr.bf16.mxu0 0
    %214 = vmatpush1.bf16.msra.mxu0 0
    %215 = vmatprep.subr.bf16.mxu0 0
    %216 = vmatpush1.bf16.msra.mxu0 0
    %217 = vmatprep.mubr.bf16.mxu0 0
    %218 = vmatmul.mubr.bf16.gmra.mrb[0].mxu0 %v161
    %v219 = vpop.f32.mrb[0].mxu0
    %v220 = vadd.f32 %v108, %v219
    %v221 = vpop.f32.mrb[0].mxu0
    %v222 = vadd.f32 %v112, %v221
    %v223 = vpop.f32.mrb[0].mxu0
    %v224 = vadd.f32 %v108, %v223
    %v225 = vpop.f32.mrb[0].mxu0
    %v226 = vadd.f32 %v112, %v225
    %227 = vmatprep.mubr.bf16.mxu0 0
    %228 = vmatmul.mubr.bf16.gmra.mrb[0].mxu0 %v164
    %v229 = vpop.f32.mrb[0].mxu0
    %v230 = vadd.f32 %v108, %v229
    %v231 = vpop.f32.mrb[0].mxu0
    %v232 = vadd.f32 %v112, %v231
    %v233 = vpop.f32.mrb[0].mxu0
    %v234 = vadd.f32 %v108, %v233
    %v235 = vpop.f32.mrb[0].mxu0
    %v236 = vadd.f32 %v112, %v235
    %237 = vmatprep.mubr.bf16.mxu0 0
    %238 = vmatmul.mubr.bf16.gmra.mrb[0].mxu0 %v167
    %v239 = vpop.f32.mrb[0].mxu0
    %v240 = vadd.f32 %v108, %v239
    %v241 = vpop.f32.mrb[0].mxu0
    %v242 = vadd.f32 %v112, %v241
    %v243 = vpop.f32.mrb[0].mxu0
    %v244 = vadd.f32 %v108, %v243
    %v245 = vpop.f32.mrb[0].mxu0
    %v246 = vadd.f32 %v112, %v245
    %247 = vmatprep.mubr.bf16.mxu0 0
    %248 = vmatmul.mubr.bf16.gmra.mrb[0].mxu0 %v170
    %v249 = vpop.f32.mrb[0].mxu0
    %v250 = vadd.f32 %v108, %v249
    %v251 = vpop.f32.mrb[0].mxu0
    %v252 = vadd.f32 %v112, %v251
    %v253 = vpop.f32.mrb[0].mxu0
    %v254 = vadd.f32 %v108, %v253
    %v255 = vpop.f32.mrb[0].mxu0
    %v256 = vadd.f32 %v112, %v255
    %257 = vdwg.mxu0
    %258 = vmatprep.subr.bf16.mxu0 %v183
    %259 = vmatpush1.bf16.msra.mxu0 %v180
    %260 = vmatprep.subr.bf16.mxu0 0
    %261 = vmatpush1.bf16.msra.mxu0 0
    %262 = vmatprep.subr.bf16.mxu0 0
    %263 = vmatpush1.bf16.msra.mxu0 0
    %264 = vmatprep.subr.bf16.mxu0 0
    %265 = vmatpush1.bf16.msra.mxu0 0
    %266 = vmatprep.subr.bf16.mxu0 0
    %267 = vmatpush1.bf16.msra.mxu0 0
    %268 = vmatprep.subr.bf16.mxu0 0
    %269 = vmatpush1.bf16.msra.mxu0 0
    %270 = vmatprep.subr.bf16.mxu0 0
    %271 = vmatpush1.bf16.msra.mxu0 0
    %272 = vmatprep.subr.bf16.mxu0 0
    %273 = vmatpush1.bf16.msra.mxu0 0
    %274 = vmatprep.subr.bf16.mxu0 0
    %275 = vmatpush1.bf16.msra.mxu0 0
    %276 = vmatprep.subr.bf16.mxu0 0
    %277 = vmatpush1.bf16.msra.mxu0 0
    %278 = vmatprep.subr.bf16.mxu0 0
    %279 = vmatpush1.bf16.msra.mxu0 0
    %280 = vmatprep.subr.bf16.mxu0 0
    %281 = vmatpush1.bf16.msra.mxu0 0
    %282 = vmatprep.subr.bf16.mxu0 0
    %283 = vmatpush1.bf16.msra.mxu0 0
    %284 = vmatprep.subr.bf16.mxu0 0
    %285 = vmatpush1.bf16.msra.mxu0 0
    %286 = vmatprep.subr.bf16.mxu0 0
    %287 = vmatpush1.bf16.msra.mxu0 0
    %288 = vmatprep.subr.bf16.mxu0 0
    %289 = vmatpush1.bf16.msra.mxu0 0
    %290 = vmatprep.mubr.bf16.mxu0 0
    %291 = vmatmul.mubr.bf16.gmra.mrb[0].mxu0 %v161
    %v292 = vpop.f32.mrb[0].mxu0
    %v293 = vadd.f32 %v116, %v292
    %v294 = vpop.f32.mrb[0].mxu0
    %v295 = vadd.f32 %v120, %v294
    %v296 = vpop.f32.mrb[0].mxu0
    %v297 = vadd.f32 %v116, %v296
    %v298 = vpop.f32.mrb[0].mxu0
    %v299 = vadd.f32 %v120, %v298
    %300 = vmatprep.mubr.bf16.mxu0 0
    %301 = vmatmul.mubr.bf16.gmra.mrb[0].mxu0 %v164
    %v302 = vpop.f32.mrb[0].mxu0
    %v303 = vadd.f32 %v116, %v302
    %v304 = vpop.f32.mrb[0].mxu0
    %v305 = vadd.f32 %v120, %v304
    %v306 = vpop.f32.mrb[0].mxu0
    %v307 = vadd.f32 %v116, %v306
    %v308 = vpop.f32.mrb[0].mxu0
    %v309 = vadd.f32 %v120, %v308
    %310 = vmatprep.mubr.bf16.mxu0 0
    %311 = vmatmul.mubr.bf16.gmra.mrb[0].mxu0 %v167
    %v312 = vpop.f32.mrb[0].mxu0
    %v313 = vadd.f32 %v116, %v312
    %v314 = vpop.f32.mrb[0].mxu0
    %v315 = vadd.f32 %v120, %v314
    %v316 = vpop.f32.mrb[0].mxu0
    %v317 = vadd.f32 %v116, %v316
    %v318 = vpop.f32.mrb[0].mxu0
    %v319 = vadd.f32 %v120, %v318
    %320 = vmatprep.mubr.bf16.mxu0 0
    %321 = vmatmul.mubr.bf16.gmra.mrb[0].mxu0 %v170
    %v322 = vpop.f32.mrb[0].mxu0
    %v323 = vadd.f32 %v116, %v322
    %v324 = vpop.f32.mrb[0].mxu0
    %v325 = vadd.f32 %v120, %v324
    %v326 = vpop.f32.mrb[0].mxu0
    %v327 = vadd.f32 %v116, %v326
    %v328 = vpop.f32.mrb[0].mxu0
    %v329 = vadd.f32 %v120, %v328
    %330 = vdwg.mxu0
    %v331 = vsel %vm71, %v220, %v254
    %v332 = vsel %vm71, %v222, %v256
    %v333 = vsel %vm71, %v293, %v327
    %v334 = vsel %vm71, %v295, %v329
    %v335 = vpack.c.bf16 %v331, %v331
    %v336 = vpack.c.bf16 %v332, %v332
    %v337 = vpack.c.bf16 %v333, %v333
    %v338 = vpack.c.bf16 %v334, %v334
    %339 = vst [vmem:[#allocation2] sm:$0xf] %v335
    %340 = vst [vmem:[#allocation2 + $0x8] sm:$0xf] %v336
    %341 = vst [vmem:[#allocation2 + $0x10] sm:$0xf] %v337
    %342 = vst [vmem:[#allocation2 + $0x18] sm:$0xf] %v338
    %v343 = vsel %vm71, %v224, %v250
    %v344 = vsel %vm71, %v226, %v252
    %v345 = vsel %vm71, %v297, %v323
    %v346 = vsel %vm71, %v299, %v325
    %v347 = vpack.c.bf16 %v343, %v343
    %v348 = vpack.c.bf16 %v344, %v344
    %v349 = vpack.c.bf16 %v345, %v345
    %v350 = vpack.c.bf16 %v346, %v346
    %v355 = vrot.slane %v347, 4
    %v356 = vrot.slane %v348, 4
    %v357 = vrot.slane %v349, 4
    %v358 = vrot.slane %v350, 4
    %363 = vst [vmem:[#allocation2] sm:$0xf0] %v355
    %364 = vst [vmem:[#allocation2 + $0x8] sm:$0xf0] %v356
    %365 = vst [vmem:[#allocation2 + $0x10] sm:$0xf0] %v357
    %366 = vst [vmem:[#allocation2 + $0x18] sm:$0xf0] %v358
    %v367 = vsel %vm71, %v230, %v244
    %v368 = vsel %vm71, %v232, %v246
    %v369 = vsel %vm71, %v303, %v317
    %v370 = vsel %vm71, %v305, %v319
    %v371 = vpack.c.bf16 %v367, %v367
    %v372 = vpack.c.bf16 %v368, %v368
    %v373 = vpack.c.bf16 %v369, %v369
    %v374 = vpack.c.bf16 %v370, %v370
    %375 = vst [vmem:[#allocation2 + $0x20] sm:$0xf] %v371
    %376 = vst [vmem:[#allocation2 + $0x28] sm:$0xf] %v372
    %377 = vst [vmem:[#allocation2 + $0x30] sm:$0xf] %v373
    %378 = vst [vmem:[#allocation2 + $0x38] sm:$0xf] %v374
    %v379 = vsel %vm71, %v234, %v240
    %v380 = vsel %vm71, %v236, %v242
    %v381 = vsel %vm71, %v307, %v313
    %v382 = vsel %vm71, %v309, %v315
    %v383 = vpack.c.bf16 %v379, %v379
    %v384 = vpack.c.bf16 %v380, %v380
    %v385 = vpack.c.bf16 %v381, %v381
    %v386 = vpack.c.bf16 %v382, %v382
    %v391 = vrot.slane %v383, 4
    %v392 = vrot.slane %v384, 4
    %v393 = vrot.slane %v385, 4
    %v394 = vrot.slane %v386, 4
    %399 = vst [vmem:[#allocation2 + $0x20] sm:$0xf0] %v391
    %400 = vst [vmem:[#allocation2 + $0x28] sm:$0xf0] %v392
    %401 = vst [vmem:[#allocation2 + $0x30] sm:$0xf0] %v393
    %402 = vst [vmem:[#allocation2 + $0x38] sm:$0xf0] %v394
    %v403 = vsel %vm71, %v240, %v234
    %v404 = vsel %vm71, %v242, %v236
    %v405 = vsel %vm71, %v313, %v307
    %v406 = vsel %vm71, %v315, %v309
    %v407 = vpack.c.bf16 %v403, %v403
    %v408 = vpack.c.bf16 %v404, %v404
    %v409 = vpack.c.bf16 %v405, %v405
    %v410 = vpack.c.bf16 %v406, %v406
    %411 = vst [vmem:[#allocation2 + $0x40] sm:$0xf] %v407
    %412 = vst [vmem:[#allocation2 + $0x48] sm:$0xf] %v408
    %413 = vst [vmem:[#allocation2 + $0x50] sm:$0xf] %v409
    %414 = vst [vmem:[#allocation2 + $0x58] sm:$0xf] %v410
    %v415 = vsel %vm71, %v244, %v230
    %v416 = vsel %vm71, %v246, %v232
    %v417 = vsel %vm71, %v317, %v303
    %v418 = vsel %vm71, %v319, %v305
    %v419 = vpack.c.bf16 %v415, %v415
    %v420 = vpack.c.bf16 %v416, %v416
    %v421 = vpack.c.bf16 %v417, %v417
    %v422 = vpack.c.bf16 %v418, %v418
    %v427 = vrot.slane %v419, 4
    %v428 = vrot.slane %v420, 4
    %v429 = vrot.slane %v421, 4
    %v430 = vrot.slane %v422, 4
    %435 = vst [vmem:[#allocation2 + $0x40] sm:$0xf0] %v427
    %436 = vst [vmem:[#allocation2 + $0x48] sm:$0xf0] %v428
    %437 = vst [vmem:[#allocation2 + $0x50] sm:$0xf0] %v429
    %438 = vst [vmem:[#allocation2 + $0x58] sm:$0xf0] %v430
    %v439 = vsel %vm71, %v250, %v224
    %v440 = vsel %vm71, %v252, %v226
    %v441 = vsel %vm71, %v323, %v297
    %v442 = vsel %vm71, %v325, %v299
    %v443 = vpack.c.bf16 %v439, %v439
    %v444 = vpack.c.bf16 %v440, %v440
    %v445 = vpack.c.bf16 %v441, %v441
    %v446 = vpack.c.bf16 %v442, %v442
    %447 = vst [vmem:[#allocation2 + $0x60] sm:$0xf] %v443
    %448 = vst [vmem:[#allocation2 + $0x68] sm:$0xf] %v444
    %449 = vst [vmem:[#allocation2 + $0x70] sm:$0xf] %v445
    %450 = vst [vmem:[#allocation2 + $0x78] sm:$0xf] %v446
    %v451 = vsel %vm71, %v254, %v220
    %v452 = vsel %vm71, %v256, %v222
    %v453 = vsel %vm71, %v327, %v293
    %v454 = vsel %vm71, %v329, %v295
    %v455 = vpack.c.bf16 %v451, %v451
    %v456 = vpack.c.bf16 %v452, %v452
    %v457 = vpack.c.bf16 %v453, %v453
    %v458 = vpack.c.bf16 %v454, %v454
    %v463 = vrot.slane %v455, 4
    %v464 = vrot.slane %v456, 4
    %v465 = vrot.slane %v457, 4
    %v466 = vrot.slane %v458, 4
    %471 = vst [vmem:[#allocation2 + $0x60] sm:$0xf0] %v463
    %472 = vst [vmem:[#allocation2 + $0x68] sm:$0xf0] %v464
    %473 = vst [vmem:[#allocation2 + $0x70] sm:$0xf0] %v465
    %474 = vst [vmem:[#allocation2 + $0x78] sm:$0xf0] %v466
    %v475 = vld [vmem:[#allocation5] sm:$0xff]
    %v476 = vld [vmem:[#allocation5 + $0x8] sm:$0xff]
    %v477 = vld [vmem:[#allocation5 + $0x10] sm:$0xff]
    %v478 = vld [vmem:[#allocation5 + $0x18] sm:$0xff]
    %v479 = vld [vmem:[#allocation5 + $0x20] sm:$0xff]
    %v480 = vld [vmem:[#allocation5 + $0x28] sm:$0xff]
    %v481 = vld [vmem:[#allocation5 + $0x30] sm:$0xff]
    %v482 = vld [vmem:[#allocation5 + $0x38] sm:$0xff]
    %v483 = vld [vmem:[#allocation5 + $0x40] sm:$0xff]
    %v484 = vld [vmem:[#allocation5 + $0x48] sm:$0xff]
    %v485 = vld [vmem:[#allocation5 + $0x50] sm:$0xff]
    %v486 = vld [vmem:[#allocation5 + $0x58] sm:$0xff]
    %v487 = vld [vmem:[#allocation5 + $0x60] sm:$0xff]
    %v488 = vld [vmem:[#allocation5 + $0x68] sm:$0xff]
    %v489 = vld [vmem:[#allocation5 + $0x70] sm:$0xff]
    %v490 = vld [vmem:[#allocation5 + $0x78] sm:$0xff]
    %v491 = vld [vmem:[#allocation5 + $0x80] sm:$0xff]
    %v492 = vld [vmem:[#allocation5 + $0x88] sm:$0xff]
    %v493 = vld [vmem:[#allocation5 + $0x90] sm:$0xff]
    %v494 = vld [vmem:[#allocation5 + $0x98] sm:$0xff]
    %v495 = vld [vmem:[#allocation5 + $0xa0] sm:$0xff]
    %v496 = vld [vmem:[#allocation5 + $0xa8] sm:$0xff]
    %v497 = vld [vmem:[#allocation5 + $0xb0] sm:$0xff]
    %v498 = vld [vmem:[#allocation5 + $0xb8] sm:$0xff]
    %v499 = vld [vmem:[#allocation5 + $0xc0] sm:$0xff]
    %v500 = vld [vmem:[#allocation5 + $0xc8] sm:$0xff]
    %v501 = vld [vmem:[#allocation5 + $0xd0] sm:$0xff]
    %v502 = vld [vmem:[#allocation5 + $0xd8] sm:$0xff]
    %v503 = vld [vmem:[#allocation5 + $0xe0] sm:$0xff]
    %v504 = vld [vmem:[#allocation5 + $0xe8] sm:$0xff]
    %v505 = vld [vmem:[#allocation5 + $0xf0] sm:$0xff]
    %v506 = vld [vmem:[#allocation5 + $0xf8] sm:$0xff]
    %v507 = vld [vmem:[#allocation2] sm:$0xf]
    %v508 = vld [vmem:[#allocation2 + $0x8] sm:$0xf]
    %v509 = vld [vmem:[#allocation2 + $0x10] sm:$0xf]
    %v510 = vld [vmem:[#allocation2 + $0x18] sm:$0xf]
    %v511 = vunpack.c.l.bf16 %v507
    %v512 = vunpack.c.l.bf16 %v508
    %v513 = vunpack.c.l.bf16 %v509
    %v514 = vunpack.c.l.bf16 %v510
    %v547 = vunpack.c.l.b16 %v475
    %v548 = vunpack.c.h.b16 %v475
    %v549 = vunpack.c.l.b16 %v476
    %v550 = vunpack.c.h.b16 %v476
    %v551 = vunpack.c.l.b16 %v477
    %v552 = vunpack.c.h.b16 %v477
    %v553 = vunpack.c.l.b16 %v478
    %v554 = vunpack.c.h.b16 %v478
    %v555 = vunpack.c.l.b16 %v479
    %v556 = vunpack.c.h.b16 %v479
    %v557 = vunpack.c.l.b16 %v480
    %v558 = vunpack.c.h.b16 %v480
    %v559 = vunpack.c.l.b16 %v481
    %v560 = vunpack.c.h.b16 %v481
    %v561 = vunpack.c.l.b16 %v482
    %v562 = vunpack.c.h.b16 %v482
    %v563 = vunpack.c.l.b16 %v483
    %v564 = vunpack.c.h.b16 %v483
    %v565 = vunpack.c.l.b16 %v484
    %v566 = vunpack.c.h.b16 %v484
    %v567 = vunpack.c.l.b16 %v485
    %v568 = vunpack.c.h.b16 %v485
    %v569 = vunpack.c.l.b16 %v486
    %v570 = vunpack.c.h.b16 %v486
    %v571 = vunpack.c.l.b16 %v487
    %v572 = vunpack.c.h.b16 %v487
    %v573 = vunpack.c.l.b16 %v488
    %v574 = vunpack.c.h.b16 %v488
    %v575 = vunpack.c.l.b16 %v489
    %v576 = vunpack.c.h.b16 %v489
    %v577 = vunpack.c.l.b16 %v490
    %v578 = vunpack.c.h.b16 %v490
    %v579 = vunpack.c.l.b16 %v491
    %v580 = vunpack.c.h.b16 %v491
    %v581 = vunpack.c.l.b16 %v492
    %v582 = vunpack.c.h.b16 %v492
    %v583 = vunpack.c.l.b16 %v493
    %v584 = vunpack.c.h.b16 %v493
    %v585 = vunpack.c.l.b16 %v494
    %v586 = vunpack.c.h.b16 %v494
    %v587 = vunpack.c.l.b16 %v495
    %v588 = vunpack.c.h.b16 %v495
    %v589 = vunpack.c.l.b16 %v496
    %v590 = vunpack.c.h.b16 %v496
    %v591 = vunpack.c.l.b16 %v497
    %v592 = vunpack.c.h.b16 %v497
    %v593 = vunpack.c.l.b16 %v498
    %v594 = vunpack.c.h.b16 %v498
    %v595 = vunpack.c.l.b16 %v499
    %v596 = vunpack.c.h.b16 %v499
    %v597 = vunpack.c.l.b16 %v500
    %v598 = vunpack.c.h.b16 %v500
    %v599 = vunpack.c.l.b16 %v501
    %v600 = vunpack.c.h.b16 %v501
    %v601 = vunpack.c.l.b16 %v502
    %v602 = vunpack.c.h.b16 %v502
    %v603 = vunpack.c.l.b16 %v503
    %v604 = vunpack.c.h.b16 %v503
    %v605 = vunpack.c.l.b16 %v504
    %v606 = vunpack.c.h.b16 %v504
    %v607 = vunpack.c.l.b16 %v505
    %v608 = vunpack.c.h.b16 %v505
    %v609 = vunpack.c.l.b16 %v506
    %v610 = vunpack.c.h.b16 %v506
    %v611 = vpack.c.b16 %v551, %v547
    %v612 = vpack.c.b16 %v552, %v548
    %v613 = vpack.c.b16 %v553, %v549
    %v614 = vpack.c.b16 %v554, %v550
    %v615 = vpack.c.b16 %v559, %v555
    %v616 = vpack.c.b16 %v560, %v556
    %v617 = vpack.c.b16 %v561, %v557
    %v618 = vpack.c.b16 %v562, %v558
    %v619 = vpack.c.b16 %v567, %v563
    %v620 = vpack.c.b16 %v568, %v564
    %v621 = vpack.c.b16 %v569, %v565
    %v622 = vpack.c.b16 %v570, %v566
    %v623 = vpack.c.b16 %v575, %v571
    %v624 = vpack.c.b16 %v576, %v572
    %v625 = vpack.c.b16 %v577, %v573
    %v626 = vpack.c.b16 %v578, %v574
    %v627 = vpack.c.b16 %v583, %v579
    %v628 = vpack.c.b16 %v584, %v580
    %v629 = vpack.c.b16 %v585, %v581
    %v630 = vpack.c.b16 %v586, %v582
    %v631 = vpack.c.b16 %v591, %v587
    %v632 = vpack.c.b16 %v592, %v588
    %v633 = vpack.c.b16 %v593, %v589
    %v634 = vpack.c.b16 %v594, %v590
    %v635 = vpack.c.b16 %v599, %v595
    %v636 = vpack.c.b16 %v600, %v596
    %v637 = vpack.c.b16 %v601, %v597
    %v638 = vpack.c.b16 %v602, %v598
    %v639 = vpack.c.b16 %v607, %v603
    %v640 = vpack.c.b16 %v608, %v604
    %v641 = vpack.c.b16 %v609, %v605
    %v642 = vpack.c.b16 %v610, %v606
    %675 = vmatprep.subr.bf16.mxu0 %v612
    %676 = vmatpush1.bf16.msra.mxu0 %v611
    %677 = vmatprep.subr.bf16.mxu0 %v616
    %678 = vmatpush1.bf16.msra.mxu0 %v615
    %679 = vmatprep.subr.bf16.mxu0 %v620
    %680 = vmatpush1.bf16.msra.mxu0 %v619
    %681 = vmatprep.subr.bf16.mxu0 %v624
    %682 = vmatpush1.bf16.msra.mxu0 %v623
    %683 = vmatprep.subr.bf16.mxu0 %v628
    %684 = vmatpush1.bf16.msra.mxu0 %v627
    %685 = vmatprep.subr.bf16.mxu0 %v632
    %686 = vmatpush1.bf16.msra.mxu0 %v631
    %687 = vmatprep.subr.bf16.mxu0 %v636
    %688 = vmatpush1.bf16.msra.mxu0 %v635
    %689 = vmatprep.subr.bf16.mxu0 %v640
    %690 = vmatpush1.bf16.msra.mxu0 %v639
    %691 = vmatprep.subr.bf16.mxu0 0
    %692 = vmatpush1.bf16.msra.mxu0 0
    %693 = vmatprep.subr.bf16.mxu0 0
    %694 = vmatpush1.bf16.msra.mxu0 0
    %695 = vmatprep.subr.bf16.mxu0 0
    %696 = vmatpush1.bf16.msra.mxu0 0
    %697 = vmatprep.subr.bf16.mxu0 0
    %698 = vmatpush1.bf16.msra.mxu0 0
    %699 = vmatprep.subr.bf16.mxu0 0
    %700 = vmatpush1.bf16.msra.mxu0 0
    %701 = vmatprep.subr.bf16.mxu0 0
    %702 = vmatpush1.bf16.msra.mxu0 0
    %703 = vmatprep.subr.bf16.mxu0 0
    %704 = vmatpush1.bf16.msra.mxu0 0
    %705 = vmatprep.subr.bf16.mxu0 0
    %706 = vmatpush1.bf16.msra.mxu0 0
    %707 = vmatprep.mubr.bf16.mxu0 0
    %708 = vmatmul.mubr.bf16.gmra.mrb[0].mxu0 0
    %v709 = vpop.f32.mrb[0].mxu0
    %v710 = vadd.f32 0.0, %v709
    %v711 = vpop.f32.mrb[0].mxu0
    %v712 = vadd.f32 0.0, %v711
    %v713 = vpop.f32.mrb[0].mxu0
    %v714 = vpop.f32.mrb[0].mxu0
    %715 = vdwg.mxu0
    %716 = vmatprep.subr.bf16.mxu0 %v614
    %717 = vmatpush1.bf16.msra.mxu0 %v613
    %718 = vmatprep.subr.bf16.mxu0 %v618
    %719 = vmatpush1.bf16.msra.mxu0 %v617
    %720 = vmatprep.subr.bf16.mxu0 %v622
    %721 = vmatpush1.bf16.msra.mxu0 %v621
    %722 = vmatprep.subr.bf16.mxu0 %v626
    %723 = vmatpush1.bf16.msra.mxu0 %v625
    %724 = vmatprep.subr.bf16.mxu0 %v630
    %725 = vmatpush1.bf16.msra.mxu0 %v629
    %726 = vmatprep.subr.bf16.mxu0 %v634
    %727 = vmatpush1.bf16.msra.mxu0 %v633
    %728 = vmatprep.subr.bf16.mxu0 %v638
    %729 = vmatpush1.bf16.msra.mxu0 %v637
    %730 = vmatprep.subr.bf16.mxu0 %v642
    %731 = vmatpush1.bf16.msra.mxu0 %v641
    %732 = vmatprep.subr.bf16.mxu0 0
    %733 = vmatpush1.bf16.msra.mxu0 0
    %734 = vmatprep.subr.bf16.mxu0 0
    %735 = vmatpush1.bf16.msra.mxu0 0
    %736 = vmatprep.subr.bf16.mxu0 0
    %737 = vmatpush1.bf16.msra.mxu0 0
    %738 = vmatprep.subr.bf16.mxu0 0
    %739 = vmatpush1.bf16.msra.mxu0 0
    %740 = vmatprep.subr.bf16.mxu0 0
    %741 = vmatpush1.bf16.msra.mxu0 0
    %742 = vmatprep.subr.bf16.mxu0 0
    %743 = vmatpush1.bf16.msra.mxu0 0
    %744 = vmatprep.subr.bf16.mxu0 0
    %745 = vmatpush1.bf16.msra.mxu0 0
    %746 = vmatprep.subr.bf16.mxu0 0
    %747 = vmatpush1.bf16.msra.mxu0 0
    %748 = vmatprep.mubr.bf16.mxu0 0
    %749 = vmatmul.mubr.bf16.gmra.mrb[0].mxu0 0
    %v750 = vpop.f32.mrb[0].mxu0
    %v751 = vadd.f32 0.0, %v750
    %v752 = vpop.f32.mrb[0].mxu0
    %v753 = vadd.f32 0.0, %v752
    %v754 = vpop.f32.mrb[0].mxu0
    %v755 = vpop.f32.mrb[0].mxu0
    %756 = vdwg.mxu0
    %v757 = vadd.f32 %v511, %v710
    %v758 = vadd.f32 %v512, %v712
    %v759 = vadd.f32 %v513, %v751
    %v760 = vadd.f32 %v514, %v753
    %v761 = vxor.u32 %v757, 2147483648
    %v762 = vmul.f32 %v761, 1.442695
    %v763 = vpow.pop %v762
    %v764 = vadd.f32 %v763, 1.0
    %v765 = vrcp.pop %v764
    %v766 = vmul.f32 1.0, %v765
    %v767 = vxor.u32 %v758, 2147483648
    %v768 = vmul.f32 %v767, 1.442695
    %v769 = vpow.pop %v768
    %v770 = vadd.f32 %v769, 1.0
    %v771 = vrcp.pop %v770
    %v772 = vmul.f32 1.0, %v771
    %v773 = vtanh.pop %v759
    %v774 = vxor.u32 %v760, 2147483648
    %v775 = vmul.f32 %v774, 1.442695
    %v776 = vpow.pop %v775
    %v777 = vadd.f32 %v776, 1.0
    %v778 = vrcp.pop %v777
    %v779 = vmul.f32 1.0, %v778
    %v780 = vmul.f32 %v772, 0.0
    %v781 = vmul.f32 %v766, %v773
    %v782 = vadd.f32 %v780, %v781
    %v783 = vtanh.pop %v782
    %v784 = vmul.f32 %v779, %v783
    %v785 = vld [vmem:[#allocation2] sm:$0xf0]
    %v786 = vld [vmem:[#allocation2 + $0x8] sm:$0xf0]
    %v787 = vld [vmem:[#allocation2 + $0x10] sm:$0xf0]
    %v788 = vld [vmem:[#allocation2 + $0x18] sm:$0xf0]
    %v793 = vrot.slane %v785, 4
    %v794 = vrot.slane %v786, 4
    %v795 = vrot.slane %v787, 4
    %v796 = vrot.slane %v788, 4
    %v801 = vunpack.c.l.bf16 %v793
    %v802 = vunpack.c.l.bf16 %v794
    %v803 = vunpack.c.l.bf16 %v795
    %v804 = vunpack.c.l.bf16 %v796
    %v805 = vpack.c.bf16 %v784, %v784
    %806 = vmatprep.subr.bf16.mxu0 %v612
    %807 = vmatpush1.bf16.msra.mxu0 %v611
    %808 = vmatprep.subr.bf16.mxu0 %v616
    %809 = vmatpush1.bf16.msra.mxu0 %v615
    %810 = vmatprep.subr.bf16.mxu0 %v620
    %811 = vmatpush1.bf16.msra.mxu0 %v619
    %812 = vmatprep.subr.bf16.mxu0 %v624
    %813 = vmatpush1.bf16.msra.mxu0 %v623
    %814 = vmatprep.subr.bf16.mxu0 %v628
    %815 = vmatpush1.bf16.msra.mxu0 %v627
    %816 = vmatprep.subr.bf16.mxu0 %v632
    %817 = vmatpush1.bf16.msra.mxu0 %v631
    %818 = vmatprep.subr.bf16.mxu0 %v636
    %819 = vmatpush1.bf16.msra.mxu0 %v635
    %820 = vmatprep.subr.bf16.mxu0 %v640
    %821 = vmatpush1.bf16.msra.mxu0 %v639
    %822 = vmatprep.subr.bf16.mxu0 0
    %823 = vmatpush1.bf16.msra.mxu0 0
    %824 = vmatprep.subr.bf16.mxu0 0
    %825 = vmatpush1.bf16.msra.mxu0 0
    %826 = vmatprep.subr.bf16.mxu0 0
    %827 = vmatpush1.bf16.msra.mxu0 0
    %828 = vmatprep.subr.bf16.mxu0 0
    %829 = vmatpush1.bf16.msra.mxu0 0
    %830 = vmatprep.subr.bf16.mxu0 0
    %831 = vmatpush1.bf16.msra.mxu0 0
    %832 = vmatprep.subr.bf16.mxu0 0
    %833 = vmatpush1.bf16.msra.mxu0 0
    %834 = vmatprep.subr.bf16.mxu0 0
    %835 = vmatpush1.bf16.msra.mxu0 0
    %836 = vmatprep.subr.bf16.mxu0 0
    %837 = vmatpush1.bf16.msra.mxu0 0
    %838 = vmatprep.mubr.bf16.mxu0 0
    %839 = vmatmul.mubr.bf16.gmra.mrb[0].mxu0 %v805
    %v840 = vpop.f32.mrb[0].mxu0
    %v841 = vadd.f32 0.0, %v840
    %v842 = vpop.f32.mrb[0].mxu0
    %v843 = vadd.f32 0.0, %v842
    %v844 = vpop.f32.mrb[0].mxu0
    %v845 = vpop.f32.mrb[0].mxu0
    %846 = vdwg.mxu0
    %847 = vmatprep.subr.bf16.mxu0 %v614
    %848 = vmatpush1.bf16.msra.mxu0 %v613
    %849 = vmatprep.subr.bf16.mxu0 %v618
    %850 = vmatpush1.bf16.msra.mxu0 %v617
    %851 = vmatprep.subr.bf16.mxu0 %v622
    %852 = vmatpush1.bf16.msra.mxu0 %v621
    %853 = vmatprep.subr.bf16.mxu0 %v626
    %854 = vmatpush1.bf16.msra.mxu0 %v625
    %855 = vmatprep.subr.bf16.mxu0 %v630
    %856 = vmatpush1.bf16.msra.mxu0 %v629
    %857 = vmatprep.subr.bf16.mxu0 %v634
    %858 = vmatpush1.bf16.msra.mxu0 %v633
    %859 = vmatprep.subr.bf16.mxu0 %v638
    %860 = vmatpush1.bf16.msra.mxu0 %v637
    %861 = vmatprep.subr.bf16.mxu0 %v642
    %862 = vmatpush1.bf16.msra.mxu0 %v641
    %863 = vmatprep.subr.bf16.mxu0 0
    %864 = vmatpush1.bf16.msra.mxu0 0
    %865 = vmatprep.subr.bf16.mxu0 0
    %866 = vmatpush1.bf16.msra.mxu0 0
    %867 = vmatprep.subr.bf16.mxu0 0
    %868 = vmatpush1.bf16.msra.mxu0 0
    %869 = vmatprep.subr.bf16.mxu0 0
    %870 = vmatpush1.bf16.msra.mxu0 0
    %871 = vmatprep.subr.bf16.mxu0 0
    %872 = vmatpush1.bf16.msra.mxu0 0
    %873 = vmatprep.subr.bf16.mxu0 0
    %874 = vmatpush1.bf16.msra.mxu0 0
    %875 = vmatprep.subr.bf16.mxu0 0
    %876 = vmatpush1.bf16.msra.mxu0 0
    %877 = vmatprep.subr.bf16.mxu0 0
    %878 = vmatpush1.bf16.msra.mxu0 0
    %879 = vmatprep.mubr.bf16.mxu0 0
    %880 = vmatmul.mubr.bf16.gmra.mrb[0].mxu0 %v805
    %v881 = vpop.f32.mrb[0].mxu0
    %v882 = vadd.f32 0.0, %v881
    %v883 = vpop.f32.mrb[0].mxu0
    %v884 = vadd.f32 0.0, %v883
    %v885 = vpop.f32.mrb[0].mxu0
    %v886 = vpop.f32.mrb[0].mxu0
    %887 = vdwg.mxu0
    %v888 = vadd.f32 %v801, %v841
    %v889 = vadd.f32 %v802, %v843
    %v890 = vadd.f32 %v803, %v882
    %v891 = vadd.f32 %v804, %v884
    %v892 = vxor.u32 %v888, 2147483648
    %v893 = vmul.f32 %v892, 1.442695
    %v894 = vpow.pop %v893
    %v895 = vadd.f32 %v894, 1.0
    %v896 = vrcp.pop %v895
    %v897 = vmul.f32 1.0, %v896
    %v898 = vxor.u32 %v889, 2147483648
    %v899 = vmul.f32 %v898, 1.442695
    %v900 = vpow.pop %v899
    %v901 = vadd.f32 %v900, 1.0
    %v902 = vrcp.pop %v901
    %v903 = vmul.f32 1.0, %v902
    %v904 = vtanh.pop %v890
    %v905 = vxor.u32 %v891, 2147483648
    %v906 = vmul.f32 %v905, 1.442695
    %v907 = vpow.pop %v906
    %v908 = vadd.f32 %v907, 1.0
    %v909 = vrcp.pop %v908
    %v910 = vmul.f32 1.0, %v909
    %v911 = vmul.f32 %v903, %v782
    %v912 = vmul.f32 %v897, %v904
    %v913 = vadd.f32 %v911, %v912
    %v914 = vtanh.pop %v913
    %v915 = vmul.f32 %v910, %v914
    %v916 = vld [vmem:[#allocation2 + $0x20] sm:$0xf]
    %v917 = vld [vmem:[#allocation2 + $0x28] sm:$0xf]
    %v918 = vld [vmem:[#allocation2 + $0x30] sm:$0xf]
    %v919 = vld [vmem:[#allocation2 + $0x38] sm:$0xf]
    %v920 = vunpack.c.l.bf16 %v916
    %v921 = vunpack.c.l.bf16 %v917
    %v922 = vunpack.c.l.bf16 %v918
    %v923 = vunpack.c.l.bf16 %v919
    %v924 = vpack.c.bf16 %v915, %v915
    %925 = vmatprep.subr.bf16.mxu0 %v612
    %926 = vmatpush1.bf16.msra.mxu0 %v611
    %927 = vmatprep.subr.bf16.mxu0 %v616
    %928 = vmatpush1.bf16.msra.mxu0 %v615
    %929 = vmatprep.subr.bf16.mxu0 %v620
    %930 = vmatpush1.bf16.msra.mxu0 %v619
    %931 = vmatprep.subr.bf16.mxu0 %v624
    %932 = vmatpush1.bf16.msra.mxu0 %v623
    %933 = vmatprep.subr.bf16.mxu0 %v628
    %934 = vmatpush1.bf16.msra.mxu0 %v627
    %935 = vmatprep.subr.bf16.mxu0 %v632
    %936 = vmatpush1.bf16.msra.mxu0 %v631
    %937 = vmatprep.subr.bf16.mxu0 %v636
    %938 = vmatpush1.bf16.msra.mxu0 %v635
    %939 = vmatprep.subr.bf16.mxu0 %v640
    %940 = vmatpush1.bf16.msra.mxu0 %v639
    %941 = vmatprep.subr.bf16.mxu0 0
    %942 = vmatpush1.bf16.msra.mxu0 0
    %943 = vmatprep.subr.bf16.mxu0 0
    %944 = vmatpush1.bf16.msra.mxu0 0
    %945 = vmatprep.subr.bf16.mxu0 0
    %946 = vmatpush1.bf16.msra.mxu0 0
    %947 = vmatprep.subr.bf16.mxu0 0
    %948 = vmatpush1.bf16.msra.mxu0 0
    %949 = vmatprep.subr.bf16.mxu0 0
    %950 = vmatpush1.bf16.msra.mxu0 0
    %951 = vmatprep.subr.bf16.mxu0 0
    %952 = vmatpush1.bf16.msra.mxu0 0
    %953 = vmatprep.subr.bf16.mxu0 0
    %954 = vmatpush1.bf16.msra.mxu0 0
    %955 = vmatprep.subr.bf16.mxu0 0
    %956 = vmatpush1.bf16.msra.mxu0 0
    %957 = vmatprep.mubr.bf16.mxu0 0
    %958 = vmatmul.mubr.bf16.gmra.mrb[0].mxu0 %v924
    %v959 = vpop.f32.mrb[0].mxu0
    %v960 = vadd.f32 0.0, %v959
    %v961 = vpop.f32.mrb[0].mxu0
    %v962 = vadd.f32 0.0, %v961
    %v963 = vpop.f32.mrb[0].mxu0
    %v964 = vpop.f32.mrb[0].mxu0
    %965 = vdwg.mxu0
    %966 = vmatprep.subr.bf16.mxu0 %v614
    %967 = vmatpush1.bf16.msra.mxu0 %v613
    %968 = vmatprep.subr.bf16.mxu0 %v618
    %969 = vmatpush1.bf16.msra.mxu0 %v617
    %970 = vmatprep.subr.bf16.mxu0 %v622
    %971 = vmatpush1.bf16.msra.mxu0 %v621
    %972 = vmatprep.subr.bf16.mxu0 %v626
    %973 = vmatpush1.bf16.msra.mxu0 %v625
    %974 = vmatprep.subr.bf16.mxu0 %v630
    %975 = vmatpush1.bf16.msra.mxu0 %v629
    %976 = vmatprep.subr.bf16.mxu0 %v634
    %977 = vmatpush1.bf16.msra.mxu0 %v633
    %978 = vmatprep.subr.bf16.mxu0 %v638
    %979 = vmatpush1.bf16.msra.mxu0 %v637
    %980 = vmatprep.subr.bf16.mxu0 %v642
    %981 = vmatpush1.bf16.msra.mxu0 %v641
    %982 = vmatprep.subr.bf16.mxu0 0
    %983 = vmatpush1.bf16.msra.mxu0 0
    %984 = vmatprep.subr.bf16.mxu0 0
    %985 = vmatpush1.bf16.msra.mxu0 0
    %986 = vmatprep.subr.bf16.mxu0 0
    %987 = vmatpush1.bf16.msra.mxu0 0
    %988 = vmatprep.subr.bf16.mxu0 0
    %989 = vmatpush1.bf16.msra.mxu0 0
    %990 = vmatprep.subr.bf16.mxu0 0
    %991 = vmatpush1.bf16.msra.mxu0 0
    %992 = vmatprep.subr.bf16.mxu0 0
    %993 = vmatpush1.bf16.msra.mxu0 0
    %994 = vmatprep.subr.bf16.mxu0 0
    %995 = vmatpush1.bf16.msra.mxu0 0
    %996 = vmatprep.subr.bf16.mxu0 0
    %997 = vmatpush1.bf16.msra.mxu0 0
    %998 = vmatprep.mubr.bf16.mxu0 0
    %999 = vmatmul.mubr.bf16.gmra.mrb[0].mxu0 %v924
    %v1000 = vpop.f32.mrb[0].mxu0
    %v1001 = vadd.f32 0.0, %v1000
    %v1002 = vpop.f32.mrb[0].mxu0
    %v1003 = vadd.f32 0.0, %v1002
    %v1004 = vpop.f32.mrb[0].mxu0
    %v1005 = vpop.f32.mrb[0].mxu0
    %1006 = vdwg.mxu0
    %v1007 = vadd.f32 %v920, %v960
    %v1008 = vadd.f32 %v921, %v962
    %v1009 = vadd.f32 %v922, %v1001
    %v1010 = vadd.f32 %v923, %v1003
    %v1011 = vxor.u32 %v1007, 2147483648
    %v1012 = vmul.f32 %v1011, 1.442695
    %v1013 = vpow.pop %v1012
    %v1014 = vadd.f32 %v1013, 1.0
    %v1015 = vrcp.pop %v1014
    %v1016 = vmul.f32 1.0, %v1015
    %v1017 = vxor.u32 %v1008, 2147483648
    %v1018 = vmul.f32 %v1017, 1.442695
    %v1019 = vpow.pop %v1018
    %v1020 = vadd.f32 %v1019, 1.0
    %v1021 = vrcp.pop %v1020
    %v1022 = vmul.f32 1.0, %v1021
    %v1023 = vtanh.pop %v1009
    %v1024 = vxor.u32 %v1010, 2147483648
    %v1025 = vmul.f32 %v1024, 1.442695
    %v1026 = vpow.pop %v1025
    %v1027 = vadd.f32 %v1026, 1.0
    %v1028 = vrcp.pop %v1027
    %v1029 = vmul.f32 1.0, %v1028
    %v1030 = vmul.f32 %v1022, %v913
    %v1031 = vmul.f32 %v1016, %v1023
    %v1032 = vadd.f32 %v1030, %v1031
    %v1033 = vtanh.pop %v1032
    %v1034 = vmul.f32 %v1029, %v1033
    %v1035 = vld [vmem:[#allocation2 + $0x20] sm:$0xf0]
    %v1036 = vld [vmem:[#allocation2 + $0x28] sm:$0xf0]
    %v1037 = vld [vmem:[#allocation2 + $0x30] sm:$0xf0]
    %v1038 = vld [vmem:[#allocation2 + $0x38] sm:$0xf0]
    %v1043 = vrot.slane %v1035, 4
    %v1044 = vrot.slane %v1036, 4
    %v1045 = vrot.slane %v1037, 4
    %v1046 = vrot.slane %v1038, 4
    %v1051 = vunpack.c.l.bf16 %v1043
    %v1052 = vunpack.c.l.bf16 %v1044
    %v1053 = vunpack.c.l.bf16 %v1045
    %v1054 = vunpack.c.l.bf16 %v1046
    %v1055 = vpack.c.bf16 %v1034, %v1034
    %1056 = vmatprep.subr.bf16.mxu0 %v612
    %1057 = vmatpush1.bf16.msra.mxu0 %v611
    %1058 = vmatprep.subr.bf16.mxu0 %v616
    %1059 = vmatpush1.bf16.msra.mxu0 %v615
    %1060 = vmatprep.subr.bf16.mxu0 %v620
    %1061 = vmatpush1.bf16.msra.mxu0 %v619
    %1062 = vmatprep.subr.bf16.mxu0 %v624
    %1063 = vmatpush1.bf16.msra.mxu0 %v623
    %1064 = vmatprep.subr.bf16.mxu0 %v628
    %1065 = vmatpush1.bf16.msra.mxu0 %v627
    %1066 = vmatprep.subr.bf16.mxu0 %v632
    %1067 = vmatpush1.bf16.msra.mxu0 %v631
    %1068 = vmatprep.subr.bf16.mxu0 %v636
    %1069 = vmatpush1.bf16.msra.mxu0 %v635
    %1070 = vmatprep.subr.bf16.mxu0 %v640
    %1071 = vmatpush1.bf16.msra.mxu0 %v639
    %1072 = vmatprep.subr.bf16.mxu0 0
    %1073 = vmatpush1.bf16.msra.mxu0 0
    %1074 = vmatprep.subr.bf16.mxu0 0
    %1075 = vmatpush1.bf16.msra.mxu0 0
    %1076 = vmatprep.subr.bf16.mxu0 0
    %1077 = vmatpush1.bf16.msra.mxu0 0
    %1078 = vmatprep.subr.bf16.mxu0 0
    %1079 = vmatpush1.bf16.msra.mxu0 0
    %1080 = vmatprep.subr.bf16.mxu0 0
    %1081 = vmatpush1.bf16.msra.mxu0 0
    %1082 = vmatprep.subr.bf16.mxu0 0
    %1083 = vmatpush1.bf16.msra.mxu0 0
    %1084 = vmatprep.subr.bf16.mxu0 0
    %1085 = vmatpush1.bf16.msra.mxu0 0
    %1086 = vmatprep.subr.bf16.mxu0 0
    %1087 = vmatpush1.bf16.msra.mxu0 0
    %1088 = vmatprep.mubr.bf16.mxu0 0
    %1089 = vmatmul.mubr.bf16.gmra.mrb[0].mxu0 %v1055
    %v1090 = vpop.f32.mrb[0].mxu0
    %v1091 = vadd.f32 0.0, %v1090
    %v1092 = vpop.f32.mrb[0].mxu0
    %v1093 = vadd.f32 0.0, %v1092
    %v1094 = vpop.f32.mrb[0].mxu0
    %v1095 = vpop.f32.mrb[0].mxu0
    %1096 = vdwg.mxu0
    %1097 = vmatprep.subr.bf16.mxu0 %v614
    %1098 = vmatpush1.bf16.msra.mxu0 %v613
    %1099 = vmatprep.subr.bf16.mxu0 %v618
    %1100 = vmatpush1.bf16.msra.mxu0 %v617
    %1101 = vmatprep.subr.bf16.mxu0 %v622
    %1102 = vmatpush1.bf16.msra.mxu0 %v621
    %1103 = vmatprep.subr.bf16.mxu0 %v626
    %1104 = vmatpush1.bf16.msra.mxu0 %v625
    %1105 = vmatprep.subr.bf16.mxu0 %v630
    %1106 = vmatpush1.bf16.msra.mxu0 %v629
    %1107 = vmatprep.subr.bf16.mxu0 %v634
    %1108 = vmatpush1.bf16.msra.mxu0 %v633
    %1109 = vmatprep.subr.bf16.mxu0 %v638
    %1110 = vmatpush1.bf16.msra.mxu0 %v637
    %1111 = vmatprep.subr.bf16.mxu0 %v642
    %1112 = vmatpush1.bf16.msra.mxu0 %v641
    %1113 = vmatprep.subr.bf16.mxu0 0
    %1114 = vmatpush1.bf16.msra.mxu0 0
    %1115 = vmatprep.subr.bf16.mxu0 0
    %1116 = vmatpush1.bf16.msra.mxu0 0
    %1117 = vmatprep.subr.bf16.mxu0 0
    %1118 = vmatpush1.bf16.msra.mxu0 0
    %1119 = vmatprep.subr.bf16.mxu0 0
    %1120 = vmatpush1.bf16.msra.mxu0 0
    %1121 = vmatprep.subr.bf16.mxu0 0
    %1122 = vmatpush1.bf16.msra.mxu0 0
    %1123 = vmatprep.subr.bf16.mxu0 0
    %1124 = vmatpush1.bf16.msra.mxu0 0
    %1125 = vmatprep.subr.bf16.mxu0 0
    %1126 = vmatpush1.bf16.msra.mxu0 0
    %1127 = vmatprep.subr.bf16.mxu0 0
    %1128 = vmatpush1.bf16.msra.mxu0 0
    %1129 = vmatprep.mubr.bf16.mxu0 0
    %1130 = vmatmul.mubr.bf16.gmra.mrb[0].mxu0 %v1055
    %v1131 = vpop.f32.mrb[0].mxu0
    %v1132 = vadd.f32 0.0, %v1131
    %v1133 = vpop.f32.mrb[0].mxu0
    %v1134 = vadd.f32 0.0, %v1133
    %v1135 = vpop.f32.mrb[0].mxu0
    %v1136 = vpop.f32.mrb[0].mxu0
    %1137 = vdwg.mxu0
    %v1138 = vadd.f32 %v1051, %v1091
    %v1139 = vadd.f32 %v1052, %v1093
    %v1140 = vadd.f32 %v1053, %v1132
    %v1141 = vadd.f32 %v1054, %v1134
    %v1142 = vxor.u32 %v1138, 2147483648
    %v1143 = vmul.f32 %v1142, 1.442695
    %v1144 = vpow.pop %v1143
    %v1145 = vadd.f32 %v1144, 1.0
    %v1146 = vrcp.pop %v1145
    %v1147 = vmul.f32 1.0, %v1146
    %v1148 = vxor.u32 %v1139, 2147483648
    %v1149 = vmul.f32 %v1148, 1.442695
    %v1150 = vpow.pop %v1149
    %v1151 = vadd.f32 %v1150, 1.0
    %v1152 = vrcp.pop %v1151
    %v1153 = vmul.f32 1.0, %v1152
    %v1154 = vtanh.pop %v1140
    %v1155 = vxor.u32 %v1141, 2147483648
    %v1156 = vmul.f32 %v1155, 1.442695
    %v1157 = vpow.pop %v1156
    %v1158 = vadd.f32 %v1157, 1.0
    %v1159 = vrcp.pop %v1158
    %v1160 = vmul.f32 1.0, %v1159
    %v1161 = vmul.f32 %v1153, %v1032
    %v1162 = vmul.f32 %v1147, %v1154
    %v1163 = vadd.f32 %v1161, %v1162
    %v1164 = vtanh.pop %v1163
    %v1165 = vmul.f32 %v1160, %v1164
    %v1166 = vld [vmem:[#allocation2 + $0x40] sm:$0xf]
    %v1167 = vld [vmem:[#allocation2 + $0x48] sm:$0xf]
    %v1168 = vld [vmem:[#allocation2 + $0x50] sm:$0xf]
    %v1169 = vld [vmem:[#allocation2 + $0x58] sm:$0xf]
    %v1170 = vunpack.c.l.bf16 %v1166
    %v1171 = vunpack.c.l.bf16 %v1167
    %v1172 = vunpack.c.l.bf16 %v1168
    %v1173 = vunpack.c.l.bf16 %v1169
    %v1174 = vpack.c.bf16 %v1165, %v1165
    %1175 = vmatprep.subr.bf16.mxu0 %v612
    %1176 = vmatpush1.bf16.msra.mxu0 %v611
    %1177 = vmatprep.subr.bf16.mxu0 %v616
    %1178 = vmatpush1.bf16.msra.mxu0 %v615
    %1179 = vmatprep.subr.bf16.mxu0 %v620
    %1180 = vmatpush1.bf16.msra.mxu0 %v619
    %1181 = vmatprep.subr.bf16.mxu0 %v624
    %1182 = vmatpush1.bf16.msra.mxu0 %v623
    %1183 = vmatprep.subr.bf16.mxu0 %v628
    %1184 = vmatpush1.bf16.msra.mxu0 %v627
    %1185 = vmatprep.subr.bf16.mxu0 %v632
    %1186 = vmatpush1.bf16.msra.mxu0 %v631
    %1187 = vmatprep.subr.bf16.mxu0 %v636
    %1188 = vmatpush1.bf16.msra.mxu0 %v635
    %1189 = vmatprep.subr.bf16.mxu0 %v640
    %1190 = vmatpush1.bf16.msra.mxu0 %v639
    %1191 = vmatprep.subr.bf16.mxu0 0
    %1192 = vmatpush1.bf16.msra.mxu0 0
    %1193 = vmatprep.subr.bf16.mxu0 0
    %1194 = vmatpush1.bf16.msra.mxu0 0
    %1195 = vmatprep.subr.bf16.mxu0 0
    %1196 = vmatpush1.bf16.msra.mxu0 0
    %1197 = vmatprep.subr.bf16.mxu0 0
    %1198 = vmatpush1.bf16.msra.mxu0 0
    %1199 = vmatprep.subr.bf16.mxu0 0
    %1200 = vmatpush1.bf16.msra.mxu0 0
    %1201 = vmatprep.subr.bf16.mxu0 0
    %1202 = vmatpush1.bf16.msra.mxu0 0
    %1203 = vmatprep.subr.bf16.mxu0 0
    %1204 = vmatpush1.bf16.msra.mxu0 0
    %1205 = vmatprep.subr.bf16.mxu0 0
    %1206 = vmatpush1.bf16.msra.mxu0 0
    %1207 = vmatprep.mubr.bf16.mxu0 0
    %1208 = vmatmul.mubr.bf16.gmra.mrb[0].mxu0 %v1174
    %v1209 = vpop.f32.mrb[0].mxu0
    %v1210 = vadd.f32 0.0, %v1209
    %v1211 = vpop.f32.mrb[0].mxu0
    %v1212 = vadd.f32 0.0, %v1211
    %v1213 = vpop.f32.mrb[0].mxu0
    %v1214 = vpop.f32.mrb[0].mxu0
    %1215 = vdwg.mxu0
    %1216 = vmatprep.subr.bf16.mxu0 %v614
    %1217 = vmatpush1.bf16.msra.mxu0 %v613
    %1218 = vmatprep.subr.bf16.mxu0 %v618
    %1219 = vmatpush1.bf16.msra.mxu0 %v617
    %1220 = vmatprep.subr.bf16.mxu0 %v622
    %1221 = vmatpush1.bf16.msra.mxu0 %v621
    %1222 = vmatprep.subr.bf16.mxu0 %v626
    %1223 = vmatpush1.bf16.msra.mxu0 %v625
    %1224 = vmatprep.subr.bf16.mxu0 %v630
    %1225 = vmatpush1.bf16.msra.mxu0 %v629
    %1226 = vmatprep.subr.bf16.mxu0 %v634
    %1227 = vmatpush1.bf16.msra.mxu0 %v633
    %1228 = vmatprep.subr.bf16.mxu0 %v638
    %1229 = vmatpush1.bf16.msra.mxu0 %v637
    %1230 = vmatprep.subr.bf16.mxu0 %v642
    %1231 = vmatpush1.bf16.msra.mxu0 %v641
    %1232 = vmatprep.subr.bf16.mxu0 0
    %1233 = vmatpush1.bf16.msra.mxu0 0
    %1234 = vmatprep.subr.bf16.mxu0 0
    %1235 = vmatpush1.bf16.msra.mxu0 0
    %1236 = vmatprep.subr.bf16.mxu0 0
    %1237 = vmatpush1.bf16.msra.mxu0 0
    %1238 = vmatprep.subr.bf16.mxu0 0
    %1239 = vmatpush1.bf16.msra.mxu0 0
    %1240 = vmatprep.subr.bf16.mxu0 0
    %1241 = vmatpush1.bf16.msra.mxu0 0
    %1242 = vmatprep.subr.bf16.mxu0 0
    %1243 = vmatpush1.bf16.msra.mxu0 0
    %1244 = vmatprep.subr.bf16.mxu0 0
    %1245 = vmatpush1.bf16.msra.mxu0 0
    %1246 = vmatprep.subr.bf16.mxu0 0
    %1247 = vmatpush1.bf16.msra.mxu0 0
    %1248 = vmatprep.mubr.bf16.mxu0 0
    %1249 = vmatmul.mubr.bf16.gmra.mrb[0].mxu0 %v1174
    %v1250 = vpop.f32.mrb[0].mxu0
    %v1251 = vadd.f32 0.0, %v1250
    %v1252 = vpop.f32.mrb[0].mxu0
    %v1253 = vadd.f32 0.0, %v1252
    %v1254 = vpop.f32.mrb[0].mxu0
    %v1255 = vpop.f32.mrb[0].mxu0
    %1256 = vdwg.mxu0
    %v1257 = vadd.f32 %v1170, %v1210
    %v1258 = vadd.f32 %v1171, %v1212
    %v1259 = vadd.f32 %v1172, %v1251
    %v1260 = vadd.f32 %v1173, %v1253
    %v1261 = vxor.u32 %v1257, 2147483648
    %v1262 = vmul.f32 %v1261, 1.442695
    %v1263 = vpow.pop %v1262
    %v1264 = vadd.f32 %v1263, 1.0
    %v1265 = vrcp.pop %v1264
    %v1266 = vmul.f32 1.0, %v1265
    %v1267 = vxor.u32 %v1258, 2147483648
    %v1268 = vmul.f32 %v1267, 1.442695
    %v1269 = vpow.pop %v1268
    %v1270 = vadd.f32 %v1269, 1.0
    %v1271 = vrcp.pop %v1270
    %v1272 = vmul.f32 1.0, %v1271
    %v1273 = vtanh.pop %v1259
    %v1274 = vxor.u32 %v1260, 2147483648
    %v1275 = vmul.f32 %v1274, 1.442695
    %v1276 = vpow.pop %v1275
    %v1277 = vadd.f32 %v1276, 1.0
    %v1278 = vrcp.pop %v1277
    %v1279 = vmul.f32 1.0, %v1278
    %v1280 = vmul.f32 %v1272, %v1163
    %v1281 = vmul.f32 %v1266, %v1273
    %v1282 = vadd.f32 %v1280, %v1281
    %v1283 = vtanh.pop %v1282
    %v1284 = vmul.f32 %v1279, %v1283
    %v1285 = vld [vmem:[#allocation2 + $0x40] sm:$0xf0]
    %v1286 = vld [vmem:[#allocation2 + $0x48] sm:$0xf0]
    %v1287 = vld [vmem:[#allocation2 + $0x50] sm:$0xf0]
    %v1288 = vld [vmem:[#allocation2 + $0x58] sm:$0xf0]
    %v1293 = vrot.slane %v1285, 4
    %v1294 = vrot.slane %v1286, 4
    %v1295 = vrot.slane %v1287, 4
    %v1296 = vrot.slane %v1288, 4
    %v1301 = vunpack.c.l.bf16 %v1293
    %v1302 = vunpack.c.l.bf16 %v1294
    %v1303 = vunpack.c.l.bf16 %v1295
    %v1304 = vunpack.c.l.bf16 %v1296
    %v1305 = vpack.c.bf16 %v1284, %v1284
    %1306 = vmatprep.subr.bf16.mxu0 %v612
    %1307 = vmatpush1.bf16.msra.mxu0 %v611
    %1308 = vmatprep.subr.bf16.mxu0 %v616
    %1309 = vmatpush1.bf16.msra.mxu0 %v615
    %1310 = vmatprep.subr.bf16.mxu0 %v620
    %1311 = vmatpush1.bf16.msra.mxu0 %v619
    %1312 = vmatprep.subr.bf16.mxu0 %v624
    %1313 = vmatpush1.bf16.msra.mxu0 %v623
    %1314 = vmatprep.subr.bf16.mxu0 %v628
    %1315 = vmatpush1.bf16.msra.mxu0 %v627
    %1316 = vmatprep.subr.bf16.mxu0 %v632
    %1317 = vmatpush1.bf16.msra.mxu0 %v631
    %1318 = vmatprep.subr.bf16.mxu0 %v636
    %1319 = vmatpush1.bf16.msra.mxu0 %v635
    %1320 = vmatprep.subr.bf16.mxu0 %v640
    %1321 = vmatpush1.bf16.msra.mxu0 %v639
    %1322 = vmatprep.subr.bf16.mxu0 0
    %1323 = vmatpush1.bf16.msra.mxu0 0
    %1324 = vmatprep.subr.bf16.mxu0 0
    %1325 = vmatpush1.bf16.msra.mxu0 0
    %1326 = vmatprep.subr.bf16.mxu0 0
    %1327 = vmatpush1.bf16.msra.mxu0 0
    %1328 = vmatprep.subr.bf16.mxu0 0
    %1329 = vmatpush1.bf16.msra.mxu0 0
    %1330 = vmatprep.subr.bf16.mxu0 0
    %1331 = vmatpush1.bf16.msra.mxu0 0
    %1332 = vmatprep.subr.bf16.mxu0 0
    %1333 = vmatpush1.bf16.msra.mxu0 0
    %1334 = vmatprep.subr.bf16.mxu0 0
    %1335 = vmatpush1.bf16.msra.mxu0 0
    %1336 = vmatprep.subr.bf16.mxu0 0
    %1337 = vmatpush1.bf16.msra.mxu0 0
    %1338 = vmatprep.mubr.bf16.mxu0 0
    %1339 = vmatmul.mubr.bf16.gmra.mrb[0].mxu0 %v1305
    %v1340 = vpop.f32.mrb[0].mxu0
    %v1341 = vadd.f32 0.0, %v1340
    %v1342 = vpop.f32.mrb[0].mxu0
    %v1343 = vadd.f32 0.0, %v1342
    %v1344 = vpop.f32.mrb[0].mxu0
    %v1345 = vpop.f32.mrb[0].mxu0
    %1346 = vdwg.mxu0
    %1347 = vmatprep.subr.bf16.mxu0 %v614
    %1348 = vmatpush1.bf16.msra.mxu0 %v613
    %1349 = vmatprep.subr.bf16.mxu0 %v618
    %1350 = vmatpush1.bf16.msra.mxu0 %v617
    %1351 = vmatprep.subr.bf16.mxu0 %v622
    %1352 = vmatpush1.bf16.msra.mxu0 %v621
    %1353 = vmatprep.subr.bf16.mxu0 %v626
    %1354 = vmatpush1.bf16.msra.mxu0 %v625
    %1355 = vmatprep.subr.bf16.mxu0 %v630
    %1356 = vmatpush1.bf16.msra.mxu0 %v629
    %1357 = vmatprep.subr.bf16.mxu0 %v634
    %1358 = vmatpush1.bf16.msra.mxu0 %v633
    %1359 = vmatprep.subr.bf16.mxu0 %v638
    %1360 = vmatpush1.bf16.msra.mxu0 %v637
    %1361 = vmatprep.subr.bf16.mxu0 %v642
    %1362 = vmatpush1.bf16.msra.mxu0 %v641
    %1363 = vmatprep.subr.bf16.mxu0 0
    %1364 = vmatpush1.bf16.msra.mxu0 0
    %1365 = vmatprep.subr.bf16.mxu0 0
    %1366 = vmatpush1.bf16.msra.mxu0 0
    %1367 = vmatprep.subr.bf16.mxu0 0
    %1368 = vmatpush1.bf16.msra.mxu0 0
    %1369 = vmatprep.subr.bf16.mxu0 0
    %1370 = vmatpush1.bf16.msra.mxu0 0
    %1371 = vmatprep.subr.bf16.mxu0 0
    %1372 = vmatpush1.bf16.msra.mxu0 0
    %1373 = vmatprep.subr.bf16.mxu0 0
    %1374 = vmatpush1.bf16.msra.mxu0 0
    %1375 = vmatprep.subr.bf16.mxu0 0
    %1376 = vmatpush1.bf16.msra.mxu0 0
    %1377 = vmatprep.subr.bf16.mxu0 0
    %1378 = vmatpush1.bf16.msra.mxu0 0
    %1379 = vmatprep.mubr.bf16.mxu0 0
    %1380 = vmatmul.mubr.bf16.gmra.mrb[0].mxu0 %v1305
    %v1381 = vpop.f32.mrb[0].mxu0
    %v1382 = vadd.f32 0.0, %v1381
    %v1383 = vpop.f32.mrb[0].mxu0
    %v1384 = vadd.f32 0.0, %v1383
    %v1385 = vpop.f32.mrb[0].mxu0
    %v1386 = vpop.f32.mrb[0].mxu0
    %1387 = vdwg.mxu0
    %v1388 = vadd.f32 %v1301, %v1341
    %v1389 = vadd.f32 %v1302, %v1343
    %v1390 = vadd.f32 %v1303, %v1382
    %v1391 = vadd.f32 %v1304, %v1384
    %v1392 = vxor.u32 %v1388, 2147483648
    %v1393 = vmul.f32 %v1392, 1.442695
    %v1394 = vpow.pop %v1393
    %v1395 = vadd.f32 %v1394, 1.0
    %v1396 = vrcp.pop %v1395
    %v1397 = vmul.f32 1.0, %v1396
    %v1398 = vxor.u32 %v1389, 2147483648
    %v1399 = vmul.f32 %v1398, 1.442695
    %v1400 = vpow.pop %v1399
    %v1401 = vadd.f32 %v1400, 1.0
    %v1402 = vrcp.pop %v1401
    %v1403 = vmul.f32 1.0, %v1402
    %v1404 = vtanh.pop %v1390
    %v1405 = vxor.u32 %v1391, 2147483648
    %v1406 = vmul.f32 %v1405, 1.442695
    %v1407 = vpow.pop %v1406
    %v1408 = vadd.f32 %v1407, 1.0
    %v1409 = vrcp.pop %v1408
    %v1410 = vmul.f32 1.0, %v1409
    %v1411 = vmul.f32 %v1403, %v1282
    %v1412 = vmul.f32 %v1397, %v1404
    %v1413 = vadd.f32 %v1411, %v1412
    %v1414 = vtanh.pop %v1413
    %v1415 = vmul.f32 %v1410, %v1414
    %v1416 = vld [vmem:[#allocation2 + $0x60] sm:$0xf]
    %v1417 = vld [vmem:[#allocation2 + $0x68] sm:$0xf]
    %v1418 = vld [vmem:[#allocation2 + $0x70] sm:$0xf]
    %v1419 = vld [vmem:[#allocation2 + $0x78] sm:$0xf]
    %v1420 = vunpack.c.l.bf16 %v1416
    %v1421 = vunpack.c.l.bf16 %v1417
    %v1422 = vunpack.c.l.bf16 %v1418
    %v1423 = vunpack.c.l.bf16 %v1419
    %v1424 = vpack.c.bf16 %v1415, %v1415
    %1425 = vmatprep.subr.bf16.mxu0 %v612
    %1426 = vmatpush1.bf16.msra.mxu0 %v611
    %1427 = vmatprep.subr.bf16.mxu0 %v616
    %1428 = vmatpush1.bf16.msra.mxu0 %v615
    %1429 = vmatprep.subr.bf16.mxu0 %v620
    %1430 = vmatpush1.bf16.msra.mxu0 %v619
    %1431 = vmatprep.subr.bf16.mxu0 %v624
    %1432 = vmatpush1.bf16.msra.mxu0 %v623
    %1433 = vmatprep.subr.bf16.mxu0 %v628
    %1434 = vmatpush1.bf16.msra.mxu0 %v627
    %1435 = vmatprep.subr.bf16.mxu0 %v632
    %1436 = vmatpush1.bf16.msra.mxu0 %v631
    %1437 = vmatprep.subr.bf16.mxu0 %v636
    %1438 = vmatpush1.bf16.msra.mxu0 %v635
    %1439 = vmatprep.subr.bf16.mxu0 %v640
    %1440 = vmatpush1.bf16.msra.mxu0 %v639
    %1441 = vmatprep.subr.bf16.mxu0 0
    %1442 = vmatpush1.bf16.msra.mxu0 0
    %1443 = vmatprep.subr.bf16.mxu0 0
    %1444 = vmatpush1.bf16.msra.mxu0 0
    %1445 = vmatprep.subr.bf16.mxu0 0
    %1446 = vmatpush1.bf16.msra.mxu0 0
    %1447 = vmatprep.subr.bf16.mxu0 0
    %1448 = vmatpush1.bf16.msra.mxu0 0
    %1449 = vmatprep.subr.bf16.mxu0 0
    %1450 = vmatpush1.bf16.msra.mxu0 0
    %1451 = vmatprep.subr.bf16.mxu0 0
    %1452 = vmatpush1.bf16.msra.mxu0 0
    %1453 = vmatprep.subr.bf16.mxu0 0
    %1454 = vmatpush1.bf16.msra.mxu0 0
    %1455 = vmatprep.subr.bf16.mxu0 0
    %1456 = vmatpush1.bf16.msra.mxu0 0
    %1457 = vmatprep.mubr.bf16.mxu0 0
    %1458 = vmatmul.mubr.bf16.gmra.mrb[0].mxu0 %v1424
    %v1459 = vpop.f32.mrb[0].mxu0
    %v1460 = vadd.f32 0.0, %v1459
    %v1461 = vpop.f32.mrb[0].mxu0
    %v1462 = vadd.f32 0.0, %v1461
    %v1463 = vpop.f32.mrb[0].mxu0
    %v1464 = vpop.f32.mrb[0].mxu0
    %1465 = vdwg.mxu0
    %1466 = vmatprep.subr.bf16.mxu0 %v614
    %1467 = vmatpush1.bf16.msra.mxu0 %v613
    %1468 = vmatprep.subr.bf16.mxu0 %v618
    %1469 = vmatpush1.bf16.msra.mxu0 %v617
    %1470 = vmatprep.subr.bf16.mxu0 %v622
    %1471 = vmatpush1.bf16.msra.mxu0 %v621
    %1472 = vmatprep.subr.bf16.mxu0 %v626
    %1473 = vmatpush1.bf16.msra.mxu0 %v625
    %1474 = vmatprep.subr.bf16.mxu0 %v630
    %1475 = vmatpush1.bf16.msra.mxu0 %v629
    %1476 = vmatprep.subr.bf16.mxu0 %v634
    %1477 = vmatpush1.bf16.msra.mxu0 %v633
    %1478 = vmatprep.subr.bf16.mxu0 %v638
    %1479 = vmatpush1.bf16.msra.mxu0 %v637
    %1480 = vmatprep.subr.bf16.mxu0 %v642
    %1481 = vmatpush1.bf16.msra.mxu0 %v641
    %1482 = vmatprep.subr.bf16.mxu0 0
    %1483 = vmatpush1.bf16.msra.mxu0 0
    %1484 = vmatprep.subr.bf16.mxu0 0
    %1485 = vmatpush1.bf16.msra.mxu0 0
    %1486 = vmatprep.subr.bf16.mxu0 0
    %1487 = vmatpush1.bf16.msra.mxu0 0
    %1488 = vmatprep.subr.bf16.mxu0 0
    %1489 = vmatpush1.bf16.msra.mxu0 0
    %1490 = vmatprep.subr.bf16.mxu0 0
    %1491 = vmatpush1.bf16.msra.mxu0 0
    %1492 = vmatprep.subr.bf16.mxu0 0
    %1493 = vmatpush1.bf16.msra.mxu0 0
    %1494 = vmatprep.subr.bf16.mxu0 0
    %1495 = vmatpush1.bf16.msra.mxu0 0
    %1496 = vmatprep.subr.bf16.mxu0 0
    %1497 = vmatpush1.bf16.msra.mxu0 0
    %1498 = vmatprep.mubr.bf16.mxu0 0
    %1499 = vmatmul.mubr.bf16.gmra.mrb[0].mxu0 %v1424
    %v1500 = vpop.f32.mrb[0].mxu0
    %v1501 = vadd.f32 0.0, %v1500
    %v1502 = vpop.f32.mrb[0].mxu0
    %v1503 = vadd.f32 0.0, %v1502
    %v1504 = vpop.f32.mrb[0].mxu0
    %v1505 = vpop.f32.mrb[0].mxu0
    %1506 = vdwg.mxu0
    %v1507 = vadd.f32 %v1420, %v1460
    %v1508 = vadd.f32 %v1421, %v1462
    %v1509 = vadd.f32 %v1422, %v1501
    %v1510 = vadd.f32 %v1423, %v1503
    %v1511 = vxor.u32 %v1507, 2147483648
    %v1512 = vmul.f32 %v1511, 1.442695
    %v1513 = vpow.pop %v1512
    %v1514 = vadd.f32 %v1513, 1.0
    %v1515 = vrcp.pop %v1514
    %v1516 = vmul.f32 1.0, %v1515
    %v1517 = vxor.u32 %v1508, 2147483648
    %v1518 = vmul.f32 %v1517, 1.442695
    %v1519 = vpow.pop %v1518
    %v1520 = vadd.f32 %v1519, 1.0
    %v1521 = vrcp.pop %v1520
    %v1522 = vmul.f32 1.0, %v1521
    %v1523 = vtanh.pop %v1509
    %v1524 = vxor.u32 %v1510, 2147483648
    %v1525 = vmul.f32 %v1524, 1.442695
    %v1526 = vpow.pop %v1525
    %v1527 = vadd.f32 %v1526, 1.0
    %v1528 = vrcp.pop %v1527
    %v1529 = vmul.f32 1.0, %v1528
    %v1530 = vmul.f32 %v1522, %v1413
    %v1531 = vmul.f32 %v1516, %v1523
    %v1532 = vadd.f32 %v1530, %v1531
    %v1533 = vtanh.pop %v1532
    %v1534 = vmul.f32 %v1529, %v1533
    %v1535 = vld [vmem:[#allocation2 + $0x60] sm:$0xf0]
    %v1536 = vld [vmem:[#allocation2 + $0x68] sm:$0xf0]
    %v1537 = vld [vmem:[#allocation2 + $0x70] sm:$0xf0]
    %v1538 = vld [vmem:[#allocation2 + $0x78] sm:$0xf0]
    %v1543 = vrot.slane %v1535, 4
    %v1544 = vrot.slane %v1536, 4
    %v1545 = vrot.slane %v1537, 4
    %v1546 = vrot.slane %v1538, 4
    %v1551 = vunpack.c.l.bf16 %v1543
    %v1552 = vunpack.c.l.bf16 %v1544
    %v1553 = vunpack.c.l.bf16 %v1545
    %v1554 = vunpack.c.l.bf16 %v1546
    %v1555 = vpack.c.bf16 %v1534, %v1534
    %1556 = vmatprep.subr.bf16.mxu0 %v612
    %1557 = vmatpush1.bf16.msra.mxu0 %v611
    %1558 = vmatprep.subr.bf16.mxu0 %v616
    %1559 = vmatpush1.bf16.msra.mxu0 %v615
    %1560 = vmatprep.subr.bf16.mxu0 %v620
    %1561 = vmatpush1.bf16.msra.mxu0 %v619
    %1562 = vmatprep.subr.bf16.mxu0 %v624
    %1563 = vmatpush1.bf16.msra.mxu0 %v623
    %1564 = vmatprep.subr.bf16.mxu0 %v628
    %1565 = vmatpush1.bf16.msra.mxu0 %v627
    %1566 = vmatprep.subr.bf16.mxu0 %v632
    %1567 = vmatpush1.bf16.msra.mxu0 %v631
    %1568 = vmatprep.subr.bf16.mxu0 %v636
    %1569 = vmatpush1.bf16.msra.mxu0 %v635
    %1570 = vmatprep.subr.bf16.mxu0 %v640
    %1571 = vmatpush1.bf16.msra.mxu0 %v639
    %1572 = vmatprep.subr.bf16.mxu0 0
    %1573 = vmatpush1.bf16.msra.mxu0 0
    %1574 = vmatprep.subr.bf16.mxu0 0
    %1575 = vmatpush1.bf16.msra.mxu0 0
    %1576 = vmatprep.subr.bf16.mxu0 0
    %1577 = vmatpush1.bf16.msra.mxu0 0
    %1578 = vmatprep.subr.bf16.mxu0 0
    %1579 = vmatpush1.bf16.msra.mxu0 0
    %1580 = vmatprep.subr.bf16.mxu0 0
    %1581 = vmatpush1.bf16.msra.mxu0 0
    %1582 = vmatprep.subr.bf16.mxu0 0
    %1583 = vmatpush1.bf16.msra.mxu0 0
    %1584 = vmatprep.subr.bf16.mxu0 0
    %1585 = vmatpush1.bf16.msra.mxu0 0
    %1586 = vmatprep.subr.bf16.mxu0 0
    %1587 = vmatpush1.bf16.msra.mxu0 0
    %1588 = vmatprep.mubr.bf16.mxu0 0
    %1589 = vmatmul.mubr.bf16.gmra.mrb[0].mxu0 %v1555
    %v1590 = vpop.f32.mrb[0].mxu0
    %v1591 = vadd.f32 0.0, %v1590
    %v1592 = vpop.f32.mrb[0].mxu0
    %v1593 = vadd.f32 0.0, %v1592
    %v1594 = vpop.f32.mrb[0].mxu0
    %v1595 = vpop.f32.mrb[0].mxu0
    %1596 = vdwg.mxu0
    %1597 = vmatprep.subr.bf16.mxu0 %v614
    %1598 = vmatpush1.bf16.msra.mxu0 %v613
    %1599 = vmatprep.subr.bf16.mxu0 %v618
    %1600 = vmatpush1.bf16.msra.mxu0 %v617
    %1601 = vmatprep.subr.bf16.mxu0 %v622
    %1602 = vmatpush1.bf16.msra.mxu0 %v621
    %1603 = vmatprep.subr.bf16.mxu0 %v626
    %1604 = vmatpush1.bf16.msra.mxu0 %v625
    %1605 = vmatprep.subr.bf16.mxu0 %v630
    %1606 = vmatpush1.bf16.msra.mxu0 %v629
    %1607 = vmatprep.subr.bf16.mxu0 %v634
    %1608 = vmatpush1.bf16.msra.mxu0 %v633
    %1609 = vmatprep.subr.bf16.mxu0 %v638
    %1610 = vmatpush1.bf16.msra.mxu0 %v637
    %1611 = vmatprep.subr.bf16.mxu0 %v642
    %1612 = vmatpush1.bf16.msra.mxu0 %v641
    %1613 = vmatprep.subr.bf16.mxu0 0
    %1614 = vmatpush1.bf16.msra.mxu0 0
    %1615 = vmatprep.subr.bf16.mxu0 0
    %1616 = vmatpush1.bf16.msra.mxu0 0
    %1617 = vmatprep.subr.bf16.mxu0 0
    %1618 = vmatpush1.bf16.msra.mxu0 0
    %1619 = vmatprep.subr.bf16.mxu0 0
    %1620 = vmatpush1.bf16.msra.mxu0 0
    %1621 = vmatprep.subr.bf16.mxu0 0
    %1622 = vmatpush1.bf16.msra.mxu0 0
    %1623 = vmatprep.subr.bf16.mxu0 0
    %1624 = vmatpush1.bf16.msra.mxu0 0
    %1625 = vmatprep.subr.bf16.mxu0 0
    %1626 = vmatpush1.bf16.msra.mxu0 0
    %1627 = vmatprep.subr.bf16.mxu0 0
    %1628 = vmatpush1.bf16.msra.mxu0 0
    %1629 = vmatprep.mubr.bf16.mxu0 0
    %1630 = vmatmul.mubr.bf16.gmra.mrb[0].mxu0 %v1555
    %v1631 = vpop.f32.mrb[0].mxu0
    %v1632 = vadd.f32 0.0, %v1631
    %v1633 = vpop.f32.mrb[0].mxu0
    %v1634 = vadd.f32 0.0, %v1633
    %v1635 = vpop.f32.mrb[0].mxu0
    %v1636 = vpop.f32.mrb[0].mxu0
    %1637 = vdwg.mxu0
    %v1638 = vadd.f32 %v1551, %v1591
    %v1639 = vadd.f32 %v1552, %v1593
    %v1640 = vadd.f32 %v1553, %v1632
    %v1641 = vadd.f32 %v1554, %v1634
    %v1642 = vxor.u32 %v1638, 2147483648
    %v1643 = vmul.f32 %v1642, 1.442695
    %v1644 = vpow.pop %v1643
    %v1645 = vadd.f32 %v1644, 1.0
    %v1646 = vrcp.pop %v1645
    %v1647 = vmul.f32 1.0, %v1646
    %v1648 = vxor.u32 %v1639, 2147483648
    %v1649 = vmul.f32 %v1648, 1.442695
    %v1650 = vpow.pop %v1649
    %v1651 = vadd.f32 %v1650, 1.0
    %v1652 = vrcp.pop %v1651
    %v1653 = vmul.f32 1.0, %v1652
    %v1654 = vtanh.pop %v1640
    %v1655 = vxor.u32 %v1641, 2147483648
    %v1656 = vmul.f32 %v1655, 1.442695
    %v1657 = vpow.pop %v1656
    %v1658 = vadd.f32 %v1657, 1.0
    %v1659 = vrcp.pop %v1658
    %v1660 = vmul.f32 1.0, %v1659
    %v1661 = vmul.f32 %v1653, %v1532
    %v1662 = vmul.f32 %v1647, %v1654
    %v1663 = vadd.f32 %v1661, %v1662
    %v1664 = vtanh.pop %v1663
    %v1665 = vmul.f32 %v1660, %v1664
    %v1666 = vsel %vm71, %v784, %v1665
    %v1667 = vpack.c.bf16 %v1666, %v1666
    %1668 = vst [vmem:[#allocation3] sm:$0xf] %v1667
    %v1669 = vsel %vm71, %v915, %v1534
    %v1670 = vpack.c.bf16 %v1669, %v1669
    %v1672 = vrot.slane %v1670, 4
    %1674 = vst [vmem:[#allocation3] sm:$0xf0] %v1672
    %v1675 = vsel %vm71, %v1034, %v1415
    %v1676 = vpack.c.bf16 %v1675, %v1675
    %1677 = vst [vmem:[#allocation3 + $0x8] sm:$0xf] %v1676
    %v1678 = vsel %vm71, %v1165, %v1284
    %v1679 = vpack.c.bf16 %v1678, %v1678
    %v1681 = vrot.slane %v1679, 4
    %1683 = vst [vmem:[#allocation3 + $0x8] sm:$0xf0] %v1681
    %v1684 = vsel %vm71, %v1284, %v1165
    %v1685 = vpack.c.bf16 %v1684, %v1684
    %1686 = vst [vmem:[#allocation3 + $0x10] sm:$0xf] %v1685
    %v1687 = vsel %vm71, %v1415, %v1034
    %v1688 = vpack.c.bf16 %v1687, %v1687
    %v1690 = vrot.slane %v1688, 4
    %1692 = vst [vmem:[#allocation3 + $0x10] sm:$0xf0] %v1690
    %v1693 = vsel %vm71, %v1534, %v915
    %v1694 = vpack.c.bf16 %v1693, %v1693
    %1695 = vst [vmem:[#allocation3 + $0x18] sm:$0xf] %v1694
    %v1696 = vsel %vm71, %v1665, %v784
    %v1697 = vpack.c.bf16 %v1696, %v1696
    %v1699 = vrot.slane %v1697, 4
    %1701 = vst [vmem:[#allocation3 + $0x18] sm:$0xf0] %v1699
    %v1702 = vld [vmem:[#allocation3] sm:$0xff]
    %v1703 = vld [vmem:[#allocation3 + $0x8] sm:$0xff]
    %v1704 = vld [vmem:[#allocation3 + $0x10] sm:$0xff]
    %v1705 = vld [vmem:[#allocation3 + $0x18] sm:$0xff]
    %v1706 = vld [vmem:[#allocation8] sm:$0xff]
    %v1707 = vld [vmem:[#allocation8 + $0x8] sm:$0xff]
    %v1708 = vld [vmem:[#allocation8 + $0x10] sm:$0xff]
    %v1709 = vld [vmem:[#allocation8 + $0x18] sm:$0xff]
    %v1710 = vld [vmem:[#allocation8 + $0x20] sm:$0xff]
    %v1711 = vld [vmem:[#allocation8 + $0x28] sm:$0xff]
    %v1712 = vld [vmem:[#allocation8 + $0x30] sm:$0xff]
    %v1713 = vld [vmem:[#allocation8 + $0x38] sm:$0xff]
    %v1714 = vld [vmem:[#allocation8 + $0x40] sm:$0xff]
    %v1715 = vld [vmem:[#allocation8 + $0x48] sm:$0xff]
    %v1716 = vld [vmem:[#allocation8 + $0x50] sm:$0xff]
    %v1717 = vld [vmem:[#allocation8 + $0x58] sm:$0xff]
    %v1718 = vld [vmem:[#allocation8 + $0x60] sm:$0xff]
    %v1719 = vld [vmem:[#allocation8 + $0x68] sm:$0xff]
    %v1720 = vld [vmem:[#allocation8 + $0x70] sm:$0xff]
    %v1721 = vld [vmem:[#allocation8 + $0x78] sm:$0xff]
    %v1722 = vld [vmem:[#allocation8 + $0x80] sm:$0xff]
    %v1723 = vld [vmem:[#allocation8 + $0x88] sm:$0xff]
    %v1724 = vld [vmem:[#allocation8 + $0x90] sm:$0xff]
    %v1725 = vld [vmem:[#allocation8 + $0x98] sm:$0xff]
    %v1726 = vld [vmem:[#allocation8 + $0xa0] sm:$0xff]
    %v1727 = vld [vmem:[#allocation8 + $0xa8] sm:$0xff]
    %v1728 = vld [vmem:[#allocation8 + $0xb0] sm:$0xff]
    %v1729 = vld [vmem:[#allocation8 + $0xb8] sm:$0xff]
    %v1730 = vld [vmem:[#allocation8 + $0xc0] sm:$0xff]
    %v1731 = vld [vmem:[#allocation8 + $0xc8] sm:$0xff]
    %v1732 = vld [vmem:[#allocation8 + $0xd0] sm:$0xff]
    %v1733 = vld [vmem:[#allocation8 + $0xd8] sm:$0xff]
    %v1734 = vld [vmem:[#allocation8 + $0xe0] sm:$0xff]
    %v1735 = vld [vmem:[#allocation8 + $0xe8] sm:$0xff]
    %v1736 = vld [vmem:[#allocation8 + $0xf0] sm:$0xff]
    %v1737 = vld [vmem:[#allocation8 + $0xf8] sm:$0xff]
    %v1738 = vld [vmem:[%s5] sm:$0xf]
    %v1739 = vunpack.c.l.bf16 %v1738
    %v1741 = vlaneseq
    %v1742 = vshrl.u32 %v1741, 7
    %v1743 = vsub.s32 0, %v1742
    %v1744 = vrot.slane %v1739, %v1743
    %v1745 = vlaneseq
    %v1746 = vshrl.u32 %v1745, 7
    %v1747 = vsub.s32 2, %v1746
    %v1748 = vrot.slane %v1739, %v1747
    %v1749 = vlaneseq
    %v1750 = vshrl.u32 %v1749, 7
    %v1751 = vsub.s32 4, %v1750
    %v1752 = vrot.slane %v1739, %v1751
    %v1753 = vlaneseq
    %v1754 = vshrl.u32 %v1753, 7
    %v1755 = vsub.s32 6, %v1754
    %v1756 = vrot.slane %v1739, %v1755
    %v1761 = vlaneseq
    %v1762 = vshrl.u32 %v1761, 7
    %v1763 = vsub.s32 0, %v1762
    %v1764 = vrot.slane %v1744, %v1763
    %v1765 = vlaneseq
    %v1766 = vshrl.u32 %v1765, 7
    %v1767 = vsub.s32 0, %v1766
    %v1768 = vrot.slane %v1748, %v1767
    %v1769 = vlaneseq
    %v1770 = vshrl.u32 %v1769, 7
    %v1771 = vsub.s32 0, %v1770
    %v1772 = vrot.slane %v1752, %v1771
    %v1773 = vlaneseq
    %v1774 = vshrl.u32 %v1773, 7
    %v1775 = vsub.s32 0, %v1774
    %v1776 = vrot.slane %v1756, %v1775
    %v1809 = vunpack.c.l.b16 %v1706
    %v1810 = vunpack.c.h.b16 %v1706
    %v1811 = vunpack.c.l.b16 %v1707
    %v1812 = vunpack.c.h.b16 %v1707
    %v1813 = vunpack.c.l.b16 %v1708
    %v1814 = vunpack.c.h.b16 %v1708
    %v1815 = vunpack.c.l.b16 %v1709
    %v1816 = vunpack.c.h.b16 %v1709
    %v1817 = vunpack.c.l.b16 %v1710
    %v1818 = vunpack.c.h.b16 %v1710
    %v1819 = vunpack.c.l.b16 %v1711
    %v1820 = vunpack.c.h.b16 %v1711
    %v1821 = vunpack.c.l.b16 %v1712
    %v1822 = vunpack.c.h.b16 %v1712
    %v1823 = vunpack.c.l.b16 %v1713
    %v1824 = vunpack.c.h.b16 %v1713
    %v1825 = vunpack.c.l.b16 %v1714
    %v1826 = vunpack.c.h.b16 %v1714
    %v1827 = vunpack.c.l.b16 %v1715
    %v1828 = vunpack.c.h.b16 %v1715
    %v1829 = vunpack.c.l.b16 %v1716
    %v1830 = vunpack.c.h.b16 %v1716
    %v1831 = vunpack.c.l.b16 %v1717
    %v1832 = vunpack.c.h.b16 %v1717
    %v1833 = vunpack.c.l.b16 %v1718
    %v1834 = vunpack.c.h.b16 %v1718
    %v1835 = vunpack.c.l.b16 %v1719
    %v1836 = vunpack.c.h.b16 %v1719
    %v1837 = vunpack.c.l.b16 %v1720
    %v1838 = vunpack.c.h.b16 %v1720
    %v1839 = vunpack.c.l.b16 %v1721
    %v1840 = vunpack.c.h.b16 %v1721
    %v1841 = vunpack.c.l.b16 %v1722
    %v1842 = vunpack.c.h.b16 %v1722
    %v1843 = vunpack.c.l.b16 %v1723
    %v1844 = vunpack.c.h.b16 %v1723
    %v1845 = vunpack.c.l.b16 %v1724
    %v1846 = vunpack.c.h.b16 %v1724
    %v1847 = vunpack.c.l.b16 %v1725
    %v1848 = vunpack.c.h.b16 %v1725
    %v1849 = vunpack.c.l.b16 %v1726
    %v1850 = vunpack.c.h.b16 %v1726
    %v1851 = vunpack.c.l.b16 %v1727
    %v1852 = vunpack.c.h.b16 %v1727
    %v1853 = vunpack.c.l.b16 %v1728
    %v1854 = vunpack.c.h.b16 %v1728
    %v1855 = vunpack.c.l.b16 %v1729
    %v1856 = vunpack.c.h.b16 %v1729
    %v1857 = vunpack.c.l.b16 %v1730
    %v1858 = vunpack.c.h.b16 %v1730
    %v1859 = vunpack.c.l.b16 %v1731
    %v1860 = vunpack.c.h.b16 %v1731
    %v1861 = vunpack.c.l.b16 %v1732
    %v1862 = vunpack.c.h.b16 %v1732
    %v1863 = vunpack.c.l.b16 %v1733
    %v1864 = vunpack.c.h.b16 %v1733
    %v1865 = vunpack.c.l.b16 %v1734
    %v1866 = vunpack.c.h.b16 %v1734
    %v1867 = vunpack.c.l.b16 %v1735
    %v1868 = vunpack.c.h.b16 %v1735
    %v1869 = vunpack.c.l.b16 %v1736
    %v1870 = vunpack.c.h.b16 %v1736
    %v1871 = vunpack.c.l.b16 %v1737
    %v1872 = vunpack.c.h.b16 %v1737
    %v1873 = vpack.c.b16 %v1813, %v1809
    %v1874 = vpack.c.b16 %v1814, %v1810
    %v1875 = vpack.c.b16 %v1815, %v1811
    %v1876 = vpack.c.b16 %v1816, %v1812
    %v1877 = vpack.c.b16 %v1821, %v1817
    %v1878 = vpack.c.b16 %v1822, %v1818
    %v1879 = vpack.c.b16 %v1823, %v1819
    %v1880 = vpack.c.b16 %v1824, %v1820
    %v1881 = vpack.c.b16 %v1829, %v1825
    %v1882 = vpack.c.b16 %v1830, %v1826
    %v1883 = vpack.c.b16 %v1831, %v1827
    %v1884 = vpack.c.b16 %v1832, %v1828
    %v1885 = vpack.c.b16 %v1837, %v1833
    %v1886 = vpack.c.b16 %v1838, %v1834
    %v1887 = vpack.c.b16 %v1839, %v1835
    %v1888 = vpack.c.b16 %v1840, %v1836
    %v1889 = vpack.c.b16 %v1845, %v1841
    %v1890 = vpack.c.b16 %v1846, %v1842
    %v1891 = vpack.c.b16 %v1847, %v1843
    %v1892 = vpack.c.b16 %v1848, %v1844
    %v1893 = vpack.c.b16 %v1853, %v1849
    %v1894 = vpack.c.b16 %v1854, %v1850
    %v1895 = vpack.c.b16 %v1855, %v1851
    %v1896 = vpack.c.b16 %v1856, %v1852
    %v1897 = vpack.c.b16 %v1861, %v1857
    %v1898 = vpack.c.b16 %v1862, %v1858
    %v1899 = vpack.c.b16 %v1863, %v1859
    %v1900 = vpack.c.b16 %v1864, %v1860
    %v1901 = vpack.c.b16 %v1869, %v1865
    %v1902 = vpack.c.b16 %v1870, %v1866
    %v1903 = vpack.c.b16 %v1871, %v1867
    %v1904 = vpack.c.b16 %v1872, %v1868
    %1937 = vmatprep.subr.bf16.mxu0 %v1874
    %1938 = vmatpush1.bf16.msra.mxu0 %v1873
    %1939 = vmatprep.subr.bf16.mxu0 %v1878
    %1940 = vmatpush1.bf16.msra.mxu0 %v1877
    %1941 = vmatprep.subr.bf16.mxu0 %v1882
    %1942 = vmatpush1.bf16.msra.mxu0 %v1881
    %1943 = vmatprep.subr.bf16.mxu0 %v1886
    %1944 = vmatpush1.bf16.msra.mxu0 %v1885
    %1945 = vmatprep.subr.bf16.mxu0 %v1890
    %1946 = vmatpush1.bf16.msra.mxu0 %v1889
    %1947 = vmatprep.subr.bf16.mxu0 %v1894
    %1948 = vmatpush1.bf16.msra.mxu0 %v1893
    %1949 = vmatprep.subr.bf16.mxu0 %v1898
    %1950 = vmatpush1.bf16.msra.mxu0 %v1897
    %1951 = vmatprep.subr.bf16.mxu0 %v1902
    %1952 = vmatpush1.bf16.msra.mxu0 %v1901
    %1953 = vmatprep.subr.bf16.mxu0 0
    %1954 = vmatpush1.bf16.msra.mxu0 0
    %1955 = vmatprep.subr.bf16.mxu0 0
    %1956 = vmatpush1.bf16.msra.mxu0 0
    %1957 = vmatprep.subr.bf16.mxu0 0
    %1958 = vmatpush1.bf16.msra.mxu0 0
    %1959 = vmatprep.subr.bf16.mxu0 0
    %1960 = vmatpush1.bf16.msra.mxu0 0
    %1961 = vmatprep.subr.bf16.mxu0 0
    %1962 = vmatpush1.bf16.msra.mxu0 0
    %1963 = vmatprep.subr.bf16.mxu0 0
    %1964 = vmatpush1.bf16.msra.mxu0 0
    %1965 = vmatprep.subr.bf16.mxu0 0
    %1966 = vmatpush1.bf16.msra.mxu0 0
    %1967 = vmatprep.subr.bf16.mxu0 0
    %1968 = vmatpush1.bf16.msra.mxu0 0
    %1969 = vmatprep.mubr.bf16.mxu0 0
    %1970 = vmatmul.mubr.bf16.gmra.mrb[0].mxu0 %v1702
    %v1971 = vpop.f32.mrb[0].mxu0
    %v1972 = vadd.f32 %v1764, %v1971
    %v1973 = vpop.f32.mrb[0].mxu0
    %v1974 = vadd.f32 %v1768, %v1973
    %v1975 = vpop.f32.mrb[0].mxu0
    %v1976 = vadd.f32 %v1764, %v1975
    %v1977 = vpop.f32.mrb[0].mxu0
    %v1978 = vadd.f32 %v1768, %v1977
    %1979 = vmatprep.mubr.bf16.mxu0 0
    %1980 = vmatmul.mubr.bf16.gmra.mrb[0].mxu0 %v1703
    %v1981 = vpop.f32.mrb[0].mxu0
    %v1982 = vadd.f32 %v1764, %v1981
    %v1983 = vpop.f32.mrb[0].mxu0
    %v1984 = vadd.f32 %v1768, %v1983
    %v1985 = vpop.f32.mrb[0].mxu0
    %v1986 = vadd.f32 %v1764, %v1985
    %v1987 = vpop.f32.mrb[0].mxu0
    %v1988 = vadd.f32 %v1768, %v1987
    %1989 = vmatprep.mubr.bf16.mxu0 0
    %1990 = vmatmul.mubr.bf16.gmra.mrb[0].mxu0 %v1704
    %v1991 = vpop.f32.mrb[0].mxu0
    %v1992 = vadd.f32 %v1764, %v1991
    %v1993 = vpop.f32.mrb[0].mxu0
    %v1994 = vadd.f32 %v1768, %v1993
    %v1995 = vpop.f32.mrb[0].mxu0
    %v1996 = vadd.f32 %v1764, %v1995
    %v1997 = vpop.f32.mrb[0].mxu0
    %v1998 = vadd.f32 %v1768, %v1997
    %1999 = vmatprep.mubr.bf16.mxu0 0
    %2000 = vmatmul.mubr.bf16.gmra.mrb[0].mxu0 %v1705
    %v2001 = vpop.f32.mrb[0].mxu0
    %v2002 = vadd.f32 %v1764, %v2001
    %v2003 = vpop.f32.mrb[0].mxu0
    %v2004 = vadd.f32 %v1768, %v2003
    %v2005 = vpop.f32.mrb[0].mxu0
    %v2006 = vadd.f32 %v1764, %v2005
    %v2007 = vpop.f32.mrb[0].mxu0
    %v2008 = vadd.f32 %v1768, %v2007
    %2009 = vdwg.mxu0
    %2010 = vmatprep.subr.bf16.mxu0 %v1876
    %2011 = vmatpush1.bf16.msra.mxu0 %v1875
    %2012 = vmatprep.subr.bf16.mxu0 %v1880
    %2013 = vmatpush1.bf16.msra.mxu0 %v1879
    %2014 = vmatprep.subr.bf16.mxu0 %v1884
    %2015 = vmatpush1.bf16.msra.mxu0 %v1883
    %2016 = vmatprep.subr.bf16.mxu0 %v1888
    %2017 = vmatpush1.bf16.msra.mxu0 %v1887
    %2018 = vmatprep.subr.bf16.mxu0 %v1892
    %2019 = vmatpush1.bf16.msra.mxu0 %v1891
    %2020 = vmatprep.subr.bf16.mxu0 %v1896
    %2021 = vmatpush1.bf16.msra.mxu0 %v1895
    %2022 = vmatprep.subr.bf16.mxu0 %v1900
    %2023 = vmatpush1.bf16.msra.mxu0 %v1899
    %2024 = vmatprep.subr.bf16.mxu0 %v1904
    %2025 = vmatpush1.bf16.msra.mxu0 %v1903
    %2026 = vmatprep.subr.bf16.mxu0 0
    %2027 = vmatpush1.bf16.msra.mxu0 0
    %2028 = vmatprep.subr.bf16.mxu0 0
    %2029 = vmatpush1.bf16.msra.mxu0 0
    %2030 = vmatprep.subr.bf16.mxu0 0
    %2031 = vmatpush1.bf16.msra.mxu0 0
    %2032 = vmatprep.subr.bf16.mxu0 0
    %2033 = vmatpush1.bf16.msra.mxu0 0
    %2034 = vmatprep.subr.bf16.mxu0 0
    %2035 = vmatpush1.bf16.msra.mxu0 0
    %2036 = vmatprep.subr.bf16.mxu0 0
    %2037 = vmatpush1.bf16.msra.mxu0 0
    %2038 = vmatprep.subr.bf16.mxu0 0
    %2039 = vmatpush1.bf16.msra.mxu0 0
    %2040 = vmatprep.subr.bf16.mxu0 0
    %2041 = vmatpush1.bf16.msra.mxu0 0
    %2042 = vmatprep.mubr.bf16.mxu0 0
    %2043 = vmatmul.mubr.bf16.gmra.mrb[0].mxu0 %v1702
    %v2044 = vpop.f32.mrb[0].mxu0
    %v2045 = vadd.f32 %v1772, %v2044
    %v2046 = vpop.f32.mrb[0].mxu0
    %v2047 = vadd.f32 %v1776, %v2046
    %v2048 = vpop.f32.mrb[0].mxu0
    %v2049 = vadd.f32 %v1772, %v2048
    %v2050 = vpop.f32.mrb[0].mxu0
    %v2051 = vadd.f32 %v1776, %v2050
    %2052 = vmatprep.mubr.bf16.mxu0 0
    %2053 = vmatmul.mubr.bf16.gmra.mrb[0].mxu0 %v1703
    %v2054 = vpop.f32.mrb[0].mxu0
    %v2055 = vadd.f32 %v1772, %v2054
    %v2056 = vpop.f32.mrb[0].mxu0
    %v2057 = vadd.f32 %v1776, %v2056
    %v2058 = vpop.f32.mrb[0].mxu0
    %v2059 = vadd.f32 %v1772, %v2058
    %v2060 = vpop.f32.mrb[0].mxu0
    %v2061 = vadd.f32 %v1776, %v2060
    %2062 = vmatprep.mubr.bf16.mxu0 0
    %2063 = vmatmul.mubr.bf16.gmra.mrb[0].mxu0 %v1704
    %v2064 = vpop.f32.mrb[0].mxu0
    %v2065 = vadd.f32 %v1772, %v2064
    %v2066 = vpop.f32.mrb[0].mxu0
    %v2067 = vadd.f32 %v1776, %v2066
    %v2068 = vpop.f32.mrb[0].mxu0
    %v2069 = vadd.f32 %v1772, %v2068
    %v2070 = vpop.f32.mrb[0].mxu0
    %v2071 = vadd.f32 %v1776, %v2070
    %2072 = vmatprep.mubr.bf16.mxu0 0
    %2073 = vmatmul.mubr.bf16.gmra.mrb[0].mxu0 %v1705
    %v2074 = vpop.f32.mrb[0].mxu0
    %v2075 = vadd.f32 %v1772, %v2074
    %v2076 = vpop.f32.mrb[0].mxu0
    %v2077 = vadd.f32 %v1776, %v2076
    %v2078 = vpop.f32.mrb[0].mxu0
    %v2079 = vadd.f32 %v1772, %v2078
    %v2080 = vpop.f32.mrb[0].mxu0
    %v2081 = vadd.f32 %v1776, %v2080
    %2082 = vdwg.mxu0
    %v2083 = vsel %vm72, %v1972, %v2006
    %v2084 = vsel %vm72, %v1974, %v2008
    %v2085 = vsel %vm72, %v2045, %v2079
    %v2086 = vsel %vm72, %v2047, %v2081
    %v2087 = vpack.c.bf16 %v2083, %v2083
    %v2088 = vpack.c.bf16 %v2084, %v2084
    %v2089 = vpack.c.bf16 %v2085, %v2085
    %v2090 = vpack.c.bf16 %v2086, %v2086
    %2091 = vst [vmem:[#allocation4] sm:$0xf] %v2087
    %2092 = vst [vmem:[#allocation4 + $0x8] sm:$0xf] %v2088
    %2093 = vst [vmem:[#allocation4 + $0x10] sm:$0xf] %v2089
    %2094 = vst [vmem:[#allocation4 + $0x18] sm:$0xf] %v2090
    %v2095 = vsel %vm72, %v1976, %v2002
    %v2096 = vsel %vm72, %v1978, %v2004
    %v2097 = vsel %vm72, %v2049, %v2075
    %v2098 = vsel %vm72, %v2051, %v2077
    %v2099 = vpack.c.bf16 %v2095, %v2095
    %v2100 = vpack.c.bf16 %v2096, %v2096
    %v2101 = vpack.c.bf16 %v2097, %v2097
    %v2102 = vpack.c.bf16 %v2098, %v2098
    %v2107 = vrot.slane %v2099, 4
    %v2108 = vrot.slane %v2100, 4
    %v2109 = vrot.slane %v2101, 4
    %v2110 = vrot.slane %v2102, 4
    %2115 = vst [vmem:[#allocation4] sm:$0xf0] %v2107
    %2116 = vst [vmem:[#allocation4 + $0x8] sm:$0xf0] %v2108
    %2117 = vst [vmem:[#allocation4 + $0x10] sm:$0xf0] %v2109
    %2118 = vst [vmem:[#allocation4 + $0x18] sm:$0xf0] %v2110
    %v2119 = vsel %vm72, %v1982, %v1996
    %v2120 = vsel %vm72, %v1984, %v1998
    %v2121 = vsel %vm72, %v2055, %v2069
    %v2122 = vsel %vm72, %v2057, %v2071
    %v2123 = vpack.c.bf16 %v2119, %v2119
    %v2124 = vpack.c.bf16 %v2120, %v2120
    %v2125 = vpack.c.bf16 %v2121, %v2121
    %v2126 = vpack.c.bf16 %v2122, %v2122
    %2127 = vst [vmem:[#allocation4 + $0x20] sm:$0xf] %v2123
    %2128 = vst [vmem:[#allocation4 + $0x28] sm:$0xf] %v2124
    %2129 = vst [vmem:[#allocation4 + $0x30] sm:$0xf] %v2125
    %2130 = vst [vmem:[#allocation4 + $0x38] sm:$0xf] %v2126
    %v2131 = vsel %vm72, %v1986, %v1992
    %v2132 = vsel %vm72, %v1988, %v1994
    %v2133 = vsel %vm72, %v2059, %v2065
    %v2134 = vsel %vm72, %v2061, %v2067
    %v2135 = vpack.c.bf16 %v2131, %v2131
    %v2136 = vpack.c.bf16 %v2132, %v2132
    %v2137 = vpack.c.bf16 %v2133, %v2133
    %v2138 = vpack.c.bf16 %v2134, %v2134
    %v2143 = vrot.slane %v2135, 4
    %v2144 = vrot.slane %v2136, 4
    %v2145 = vrot.slane %v2137, 4
    %v2146 = vrot.slane %v2138, 4
    %2151 = vst [vmem:[#allocation4 + $0x20] sm:$0xf0] %v2143
    %2152 = vst [vmem:[#allocation4 + $0x28] sm:$0xf0] %v2144
    %2153 = vst [vmem:[#allocation4 + $0x30] sm:$0xf0] %v2145
    %2154 = vst [vmem:[#allocation4 + $0x38] sm:$0xf0] %v2146
    %v2155 = vsel %vm72, %v1992, %v1986
    %v2156 = vsel %vm72, %v1994, %v1988
    %v2157 = vsel %vm72, %v2065, %v2059
    %v2158 = vsel %vm72, %v2067, %v2061
    %v2159 = vpack.c.bf16 %v2155, %v2155
    %v2160 = vpack.c.bf16 %v2156, %v2156
    %v2161 = vpack.c.bf16 %v2157, %v2157
    %v2162 = vpack.c.bf16 %v2158, %v2158
    %2163 = vst [vmem:[#allocation4 + $0x40] sm:$0xf] %v2159
    %2164 = vst [vmem:[#allocation4 + $0x48] sm:$0xf] %v2160
    %2165 = vst [vmem:[#allocation4 + $0x50] sm:$0xf] %v2161
    %2166 = vst [vmem:[#allocation4 + $0x58] sm:$0xf] %v2162
    %v2167 = vsel %vm72, %v1996, %v1982
    %v2168 = vsel %vm72, %v1998, %v1984
    %v2169 = vsel %vm72, %v2069, %v2055
    %v2170 = vsel %vm72, %v2071, %v2057
    %v2171 = vpack.c.bf16 %v2167, %v2167
    %v2172 = vpack.c.bf16 %v2168, %v2168
    %v2173 = vpack.c.bf16 %v2169, %v2169
    %v2174 = vpack.c.bf16 %v2170, %v2170
    %v2179 = vrot.slane %v2171, 4
    %v2180 = vrot.slane %v2172, 4
    %v2181 = vrot.slane %v2173, 4
    %v2182 = vrot.slane %v2174, 4
    %2187 = vst [vmem:[#allocation4 + $0x40] sm:$0xf0] %v2179
    %2188 = vst [vmem:[#allocation4 + $0x48] sm:$0xf0] %v2180
    %2189 = vst [vmem:[#allocation4 + $0x50] sm:$0xf0] %v2181
    %2190 = vst [vmem:[#allocation4 + $0x58] sm:$0xf0] %v2182
    %v2191 = vsel %vm72, %v2002, %v1976
    %v2192 = vsel %vm72, %v2004, %v1978
    %v2193 = vsel %vm72, %v2075, %v2049
    %v2194 = vsel %vm72, %v2077, %v2051
    %v2195 = vpack.c.bf16 %v2191, %v2191
    %v2196 = vpack.c.bf16 %v2192, %v2192
    %v2197 = vpack.c.bf16 %v2193, %v2193
    %v2198 = vpack.c.bf16 %v2194, %v2194
    %2199 = vst [vmem:[#allocation4 + $0x60] sm:$0xf] %v2195
    %2200 = vst [vmem:[#allocation4 + $0x68] sm:$0xf] %v2196
    %2201 = vst [vmem:[#allocation4 + $0x70] sm:$0xf] %v2197
    %2202 = vst [vmem:[#allocation4 + $0x78] sm:$0xf] %v2198
    %v2203 = vsel %vm72, %v2006, %v1972
    %v2204 = vsel %vm72, %v2008, %v1974
    %v2205 = vsel %vm72, %v2079, %v2045
    %v2206 = vsel %vm72, %v2081, %v2047
    %v2207 = vpack.c.bf16 %v2203, %v2203
    %v2208 = vpack.c.bf16 %v2204, %v2204
    %v2209 = vpack.c.bf16 %v2205, %v2205
    %v2210 = vpack.c.bf16 %v2206, %v2206
    %v2215 = vrot.slane %v2207, 4
    %v2216 = vrot.slane %v2208, 4
    %v2217 = vrot.slane %v2209, 4
    %v2218 = vrot.slane %v2210, 4
    %2223 = vst [vmem:[#allocation4 + $0x60] sm:$0xf0] %v2215
    %2224 = vst [vmem:[#allocation4 + $0x68] sm:$0xf0] %v2216
    %2225 = vst [vmem:[#allocation4 + $0x70] sm:$0xf0] %v2217
    %2226 = vst [vmem:[#allocation4 + $0x78] sm:$0xf0] %v2218
    %v2227 = vld [vmem:[#allocation10] sm:$0xff]
    %v2228 = vld [vmem:[#allocation10 + $0x8] sm:$0xff]
    %v2229 = vld [vmem:[#allocation10 + $0x10] sm:$0xff]
    %v2230 = vld [vmem:[#allocation10 + $0x18] sm:$0xff]
    %v2231 = vld [vmem:[#allocation10 + $0x20] sm:$0xff]
    %v2232 = vld [vmem:[#allocation10 + $0x28] sm:$0xff]
    %v2233 = vld [vmem:[#allocation10 + $0x30] sm:$0xff]
    %v2234 = vld [vmem:[#allocation10 + $0x38] sm:$0xff]
    %v2235 = vld [vmem:[#allocation10 + $0x40] sm:$0xff]
    %v2236 = vld [vmem:[#allocation10 + $0x48] sm:$0xff]
    %v2237 = vld [vmem:[#allocation10 + $0x50] sm:$0xff]
    %v2238 = vld [vmem:[#allocation10 + $0x58] sm:$0xff]
    %v2239 = vld [vmem:[#allocation10 + $0x60] sm:$0xff]
    %v2240 = vld [vmem:[#allocation10 + $0x68] sm:$0xff]
    %v2241 = vld [vmem:[#allocation10 + $0x70] sm:$0xff]
    %v2242 = vld [vmem:[#allocation10 + $0x78] sm:$0xff]
    %v2243 = vld [vmem:[#allocation10 + $0x80] sm:$0xff]
    %v2244 = vld [vmem:[#allocation10 + $0x88] sm:$0xff]
    %v2245 = vld [vmem:[#allocation10 + $0x90] sm:$0xff]
    %v2246 = vld [vmem:[#allocation10 + $0x98] sm:$0xff]
    %v2247 = vld [vmem:[#allocation10 + $0xa0] sm:$0xff]
    %v2248 = vld [vmem:[#allocation10 + $0xa8] sm:$0xff]
    %v2249 = vld [vmem:[#allocation10 + $0xb0] sm:$0xff]
    %v2250 = vld [vmem:[#allocation10 + $0xb8] sm:$0xff]
    %v2251 = vld [vmem:[#allocation10 + $0xc0] sm:$0xff]
    %v2252 = vld [vmem:[#allocation10 + $0xc8] sm:$0xff]
    %v2253 = vld [vmem:[#allocation10 + $0xd0] sm:$0xff]
    %v2254 = vld [vmem:[#allocation10 + $0xd8] sm:$0xff]
    %v2255 = vld [vmem:[#allocation10 + $0xe0] sm:$0xff]
    %v2256 = vld [vmem:[#allocation10 + $0xe8] sm:$0xff]
    %v2257 = vld [vmem:[#allocation10 + $0xf0] sm:$0xff]
    %v2258 = vld [vmem:[#allocation10 + $0xf8] sm:$0xff]
    %v2259 = vld [vmem:[#allocation4] sm:$0xf]
    %v2260 = vld [vmem:[#allocation4 + $0x8] sm:$0xf]
    %v2261 = vld [vmem:[#allocation4 + $0x10] sm:$0xf]
    %v2262 = vld [vmem:[#allocation4 + $0x18] sm:$0xf]
    %v2263 = vunpack.c.l.bf16 %v2259
    %v2264 = vunpack.c.l.bf16 %v2260
    %v2265 = vunpack.c.l.bf16 %v2261
    %v2266 = vunpack.c.l.bf16 %v2262
    %v2299 = vunpack.c.l.b16 %v2227
    %v2300 = vunpack.c.h.b16 %v2227
    %v2301 = vunpack.c.l.b16 %v2228
    %v2302 = vunpack.c.h.b16 %v2228
    %v2303 = vunpack.c.l.b16 %v2229
    %v2304 = vunpack.c.h.b16 %v2229
    %v2305 = vunpack.c.l.b16 %v2230
    %v2306 = vunpack.c.h.b16 %v2230
    %v2307 = vunpack.c.l.b16 %v2231
    %v2308 = vunpack.c.h.b16 %v2231
    %v2309 = vunpack.c.l.b16 %v2232
    %v2310 = vunpack.c.h.b16 %v2232
    %v2311 = vunpack.c.l.b16 %v2233
    %v2312 = vunpack.c.h.b16 %v2233
    %v2313 = vunpack.c.l.b16 %v2234
    %v2314 = vunpack.c.h.b16 %v2234
    %v2315 = vunpack.c.l.b16 %v2235
    %v2316 = vunpack.c.h.b16 %v2235
    %v2317 = vunpack.c.l.b16 %v2236
    %v2318 = vunpack.c.h.b16 %v2236
    %v2319 = vunpack.c.l.b16 %v2237
    %v2320 = vunpack.c.h.b16 %v2237
    %v2321 = vunpack.c.l.b16 %v2238
    %v2322 = vunpack.c.h.b16 %v2238
    %v2323 = vunpack.c.l.b16 %v2239
    %v2324 = vunpack.c.h.b16 %v2239
    %v2325 = vunpack.c.l.b16 %v2240
    %v2326 = vunpack.c.h.b16 %v2240
    %v2327 = vunpack.c.l.b16 %v2241
    %v2328 = vunpack.c.h.b16 %v2241
    %v2329 = vunpack.c.l.b16 %v2242
    %v2330 = vunpack.c.h.b16 %v2242
    %v2331 = vunpack.c.l.b16 %v2243
    %v2332 = vunpack.c.h.b16 %v2243
    %v2333 = vunpack.c.l.b16 %v2244
    %v2334 = vunpack.c.h.b16 %v2244
    %v2335 = vunpack.c.l.b16 %v2245
    %v2336 = vunpack.c.h.b16 %v2245
    %v2337 = vunpack.c.l.b16 %v2246
    %v2338 = vunpack.c.h.b16 %v2246
    %v2339 = vunpack.c.l.b16 %v2247
    %v2340 = vunpack.c.h.b16 %v2247
    %v2341 = vunpack.c.l.b16 %v2248
    %v2342 = vunpack.c.h.b16 %v2248
    %v2343 = vunpack.c.l.b16 %v2249
    %v2344 = vunpack.c.h.b16 %v2249
    %v2345 = vunpack.c.l.b16 %v2250
    %v2346 = vunpack.c.h.b16 %v2250
    %v2347 = vunpack.c.l.b16 %v2251
    %v2348 = vunpack.c.h.b16 %v2251
    %v2349 = vunpack.c.l.b16 %v2252
    %v2350 = vunpack.c.h.b16 %v2252
    %v2351 = vunpack.c.l.b16 %v2253
    %v2352 = vunpack.c.h.b16 %v2253
    %v2353 = vunpack.c.l.b16 %v2254
    %v2354 = vunpack.c.h.b16 %v2254
    %v2355 = vunpack.c.l.b16 %v2255
    %v2356 = vunpack.c.h.b16 %v2255
    %v2357 = vunpack.c.l.b16 %v2256
    %v2358 = vunpack.c.h.b16 %v2256
    %v2359 = vunpack.c.l.b16 %v2257
    %v2360 = vunpack.c.h.b16 %v2257
    %v2361 = vunpack.c.l.b16 %v2258
    %v2362 = vunpack.c.h.b16 %v2258
    %v2363 = vpack.c.b16 %v2303, %v2299
    %v2364 = vpack.c.b16 %v2304, %v2300
    %v2365 = vpack.c.b16 %v2305, %v2301
    %v2366 = vpack.c.b16 %v2306, %v2302
    %v2367 = vpack.c.b16 %v2311, %v2307
    %v2368 = vpack.c.b16 %v2312, %v2308
    %v2369 = vpack.c.b16 %v2313, %v2309
    %v2370 = vpack.c.b16 %v2314, %v2310
    %v2371 = vpack.c.b16 %v2319, %v2315
    %v2372 = vpack.c.b16 %v2320, %v2316
    %v2373 = vpack.c.b16 %v2321, %v2317
    %v2374 = vpack.c.b16 %v2322, %v2318
    %v2375 = vpack.c.b16 %v2327, %v2323
    %v2376 = vpack.c.b16 %v2328, %v2324
    %v2377 = vpack.c.b16 %v2329, %v2325
    %v2378 = vpack.c.b16 %v2330, %v2326
    %v2379 = vpack.c.b16 %v2335, %v2331
    %v2380 = vpack.c.b16 %v2336, %v2332
    %v2381 = vpack.c.b16 %v2337, %v2333
    %v2382 = vpack.c.b16 %v2338, %v2334
    %v2383 = vpack.c.b16 %v2343, %v2339
    %v2384 = vpack.c.b16 %v2344, %v2340
    %v2385 = vpack.c.b16 %v2345, %v2341
    %v2386 = vpack.c.b16 %v2346, %v2342
    %v2387 = vpack.c.b16 %v2351, %v2347
    %v2388 = vpack.c.b16 %v2352, %v2348
    %v2389 = vpack.c.b16 %v2353, %v2349
    %v2390 = vpack.c.b16 %v2354, %v2350
    %v2391 = vpack.c.b16 %v2359, %v2355
    %v2392 = vpack.c.b16 %v2360, %v2356
    %v2393 = vpack.c.b16 %v2361, %v2357
    %v2394 = vpack.c.b16 %v2362, %v2358
    %2427 = vmatprep.subr.bf16.mxu0 %v2364
    %2428 = vmatpush1.bf16.msra.mxu0 %v2363
    %2429 = vmatprep.subr.bf16.mxu0 %v2368
    %2430 = vmatpush1.bf16.msra.mxu0 %v2367
    %2431 = vmatprep.subr.bf16.mxu0 %v2372
    %2432 = vmatpush1.bf16.msra.mxu0 %v2371
    %2433 = vmatprep.subr.bf16.mxu0 %v2376
    %2434 = vmatpush1.bf16.msra.mxu0 %v2375
    %2435 = vmatprep.subr.bf16.mxu0 %v2380
    %2436 = vmatpush1.bf16.msra.mxu0 %v2379
    %2437 = vmatprep.subr.bf16.mxu0 %v2384
    %2438 = vmatpush1.bf16.msra.mxu0 %v2383
    %2439 = vmatprep.subr.bf16.mxu0 %v2388
    %2440 = vmatpush1.bf16.msra.mxu0 %v2387
    %2441 = vmatprep.subr.bf16.mxu0 %v2392
    %2442 = vmatpush1.bf16.msra.mxu0 %v2391
    %2443 = vmatprep.subr.bf16.mxu0 0
    %2444 = vmatpush1.bf16.msra.mxu0 0
    %2445 = vmatprep.subr.bf16.mxu0 0
    %2446 = vmatpush1.bf16.msra.mxu0 0
    %2447 = vmatprep.subr.bf16.mxu0 0
    %2448 = vmatpush1.bf16.msra.mxu0 0
    %2449 = vmatprep.subr.bf16.mxu0 0
    %2450 = vmatpush1.bf16.msra.mxu0 0
    %2451 = vmatprep.subr.bf16.mxu0 0
    %2452 = vmatpush1.bf16.msra.mxu0 0
    %2453 = vmatprep.subr.bf16.mxu0 0
    %2454 = vmatpush1.bf16.msra.mxu0 0
    %2455 = vmatprep.subr.bf16.mxu0 0
    %2456 = vmatpush1.bf16.msra.mxu0 0
    %2457 = vmatprep.subr.bf16.mxu0 0
    %2458 = vmatpush1.bf16.msra.mxu0 0
    %2459 = vmatprep.mubr.bf16.mxu0 0
    %2460 = vmatmul.mubr.bf16.gmra.mrb[0].mxu0 0
    %v2461 = vpop.f32.mrb[0].mxu0
    %v2462 = vadd.f32 0.0, %v2461
    %v2463 = vpop.f32.mrb[0].mxu0
    %v2464 = vadd.f32 0.0, %v2463
    %v2465 = vpop.f32.mrb[0].mxu0
    %v2466 = vpop.f32.mrb[0].mxu0
    %2467 = vdwg.mxu0
    %2468 = vmatprep.subr.bf16.mxu0 %v2366
    %2469 = vmatpush1.bf16.msra.mxu0 %v2365
    %2470 = vmatprep.subr.bf16.mxu0 %v2370
    %2471 = vmatpush1.bf16.msra.mxu0 %v2369
    %2472 = vmatprep.subr.bf16.mxu0 %v2374
    %2473 = vmatpush1.bf16.msra.mxu0 %v2373
    %2474 = vmatprep.subr.bf16.mxu0 %v2378
    %2475 = vmatpush1.bf16.msra.mxu0 %v2377
    %2476 = vmatprep.subr.bf16.mxu0 %v2382
    %2477 = vmatpush1.bf16.msra.mxu0 %v2381
    %2478 = vmatprep.subr.bf16.mxu0 %v2386
    %2479 = vmatpush1.bf16.msra.mxu0 %v2385
    %2480 = vmatprep.subr.bf16.mxu0 %v2390
    %2481 = vmatpush1.bf16.msra.mxu0 %v2389
    %2482 = vmatprep.subr.bf16.mxu0 %v2394
    %2483 = vmatpush1.bf16.msra.mxu0 %v2393
    %2484 = vmatprep.subr.bf16.mxu0 0
    %2485 = vmatpush1.bf16.msra.mxu0 0
    %2486 = vmatprep.subr.bf16.mxu0 0
    %2487 = vmatpush1.bf16.msra.mxu0 0
    %2488 = vmatprep.subr.bf16.mxu0 0
    %2489 = vmatpush1.bf16.msra.mxu0 0
    %2490 = vmatprep.subr.bf16.mxu0 0
    %2491 = vmatpush1.bf16.msra.mxu0 0
    %2492 = vmatprep.subr.bf16.mxu0 0
    %2493 = vmatpush1.bf16.msra.mxu0 0
    %2494 = vmatprep.subr.bf16.mxu0 0
    %2495 = vmatpush1.bf16.msra.mxu0 0
    %2496 = vmatprep.subr.bf16.mxu0 0
    %2497 = vmatpush1.bf16.msra.mxu0 0
    %2498 = vmatprep.subr.bf16.mxu0 0
    %2499 = vmatpush1.bf16.msra.mxu0 0
    %2500 = vmatprep.mubr.bf16.mxu0 0
    %2501 = vmatmul.mubr.bf16.gmra.mrb[0].mxu0 0
    %v2502 = vpop.f32.mrb[0].mxu0
    %v2503 = vadd.f32 0.0, %v2502
    %v2504 = vpop.f32.mrb[0].mxu0
    %v2505 = vadd.f32 0.0, %v2504
    %v2506 = vpop.f32.mrb[0].mxu0
    %v2507 = vpop.f32.mrb[0].mxu0
    %2508 = vdwg.mxu0
    %v2509 = vadd.f32 %v2263, %v2462
    %v2510 = vadd.f32 %v2264, %v2464
    %v2511 = vadd.f32 %v2265, %v2503
    %v2512 = vadd.f32 %v2266, %v2505
    %v2513 = vxor.u32 %v2509, 2147483648
    %v2514 = vmul.f32 %v2513, 1.442695
    %v2515 = vpow.pop %v2514
    %v2516 = vadd.f32 %v2515, 1.0
    %v2517 = vrcp.pop %v2516
    %v2518 = vmul.f32 1.0, %v2517
    %v2519 = vxor.u32 %v2510, 2147483648
    %v2520 = vmul.f32 %v2519, 1.442695
    %v2521 = vpow.pop %v2520
    %v2522 = vadd.f32 %v2521, 1.0
    %v2523 = vrcp.pop %v2522
    %v2524 = vmul.f32 1.0, %v2523
    %v2525 = vtanh.pop %v2511
    %v2526 = vxor.u32 %v2512, 2147483648
    %v2527 = vmul.f32 %v2526, 1.442695
    %v2528 = vpow.pop %v2527
    %v2529 = vadd.f32 %v2528, 1.0
    %v2530 = vrcp.pop %v2529
    %v2531 = vmul.f32 1.0, %v2530
    %v2532 = vmul.f32 %v2524, 0.0
    %v2533 = vmul.f32 %v2518, %v2525
    %v2534 = vadd.f32 %v2532, %v2533
    %v2535 = vtanh.pop %v2534
    %v2536 = vmul.f32 %v2531, %v2535
    %v2537 = vld [vmem:[#allocation4] sm:$0xf0]
    %v2538 = vld [vmem:[#allocation4 + $0x8] sm:$0xf0]
    %v2539 = vld [vmem:[#allocation4 + $0x10] sm:$0xf0]
    %v2540 = vld [vmem:[#allocation4 + $0x18] sm:$0xf0]
    %v2545 = vrot.slane %v2537, 4
    %v2546 = vrot.slane %v2538, 4
    %v2547 = vrot.slane %v2539, 4
    %v2548 = vrot.slane %v2540, 4
    %v2553 = vunpack.c.l.bf16 %v2545
    %v2554 = vunpack.c.l.bf16 %v2546
    %v2555 = vunpack.c.l.bf16 %v2547
    %v2556 = vunpack.c.l.bf16 %v2548
    %v2557 = vpack.c.bf16 %v2536, %v2536
    %2558 = vmatprep.subr.bf16.mxu0 %v2364
    %2559 = vmatpush1.bf16.msra.mxu0 %v2363
    %2560 = vmatprep.subr.bf16.mxu0 %v2368
    %2561 = vmatpush1.bf16.msra.mxu0 %v2367
    %2562 = vmatprep.subr.bf16.mxu0 %v2372
    %2563 = vmatpush1.bf16.msra.mxu0 %v2371
    %2564 = vmatprep.subr.bf16.mxu0 %v2376
    %2565 = vmatpush1.bf16.msra.mxu0 %v2375
    %2566 = vmatprep.subr.bf16.mxu0 %v2380
    %2567 = vmatpush1.bf16.msra.mxu0 %v2379
    %2568 = vmatprep.subr.bf16.mxu0 %v2384
    %2569 = vmatpush1.bf16.msra.mxu0 %v2383
    %2570 = vmatprep.subr.bf16.mxu0 %v2388
    %2571 = vmatpush1.bf16.msra.mxu0 %v2387
    %2572 = vmatprep.subr.bf16.mxu0 %v2392
    %2573 = vmatpush1.bf16.msra.mxu0 %v2391
    %2574 = vmatprep.subr.bf16.mxu0 0
    %2575 = vmatpush1.bf16.msra.mxu0 0
    %2576 = vmatprep.subr.bf16.mxu0 0
    %2577 = vmatpush1.bf16.msra.mxu0 0
    %2578 = vmatprep.subr.bf16.mxu0 0
    %2579 = vmatpush1.bf16.msra.mxu0 0
    %2580 = vmatprep.subr.bf16.mxu0 0
    %2581 = vmatpush1.bf16.msra.mxu0 0
    %2582 = vmatprep.subr.bf16.mxu0 0
    %2583 = vmatpush1.bf16.msra.mxu0 0
    %2584 = vmatprep.subr.bf16.mxu0 0
    %2585 = vmatpush1.bf16.msra.mxu0 0
    %2586 = vmatprep.subr.bf16.mxu0 0
    %2587 = vmatpush1.bf16.msra.mxu0 0
    %2588 = vmatprep.subr.bf16.mxu0 0
    %2589 = vmatpush1.bf16.msra.mxu0 0
    %2590 = vmatprep.mubr.bf16.mxu0 0
    %2591 = vmatmul.mubr.bf16.gmra.mrb[0].mxu0 %v2557
    %v2592 = vpop.f32.mrb[0].mxu0
    %v2593 = vadd.f32 0.0, %v2592
    %v2594 = vpop.f32.mrb[0].mxu0
    %v2595 = vadd.f32 0.0, %v2594
    %v2596 = vpop.f32.mrb[0].mxu0
    %v2597 = vpop.f32.mrb[0].mxu0
    %2598 = vdwg.mxu0
    %2599 = vmatprep.subr.bf16.mxu0 %v2366
    %2600 = vmatpush1.bf16.msra.mxu0 %v2365
    %2601 = vmatprep.subr.bf16.mxu0 %v2370
    %2602 = vmatpush1.bf16.msra.mxu0 %v2369
    %2603 = vmatprep.subr.bf16.mxu0 %v2374
    %2604 = vmatpush1.bf16.msra.mxu0 %v2373
    %2605 = vmatprep.subr.bf16.mxu0 %v2378
    %2606 = vmatpush1.bf16.msra.mxu0 %v2377
    %2607 = vmatprep.subr.bf16.mxu0 %v2382
    %2608 = vmatpush1.bf16.msra.mxu0 %v2381
    %2609 = vmatprep.subr.bf16.mxu0 %v2386
    %2610 = vmatpush1.bf16.msra.mxu0 %v2385
    %2611 = vmatprep.subr.bf16.mxu0 %v2390
    %2612 = vmatpush1.bf16.msra.mxu0 %v2389
    %2613 = vmatprep.subr.bf16.mxu0 %v2394
    %2614 = vmatpush1.bf16.msra.mxu0 %v2393
    %2615 = vmatprep.subr.bf16.mxu0 0
    %2616 = vmatpush1.bf16.msra.mxu0 0
    %2617 = vmatprep.subr.bf16.mxu0 0
    %2618 = vmatpush1.bf16.msra.mxu0 0
    %2619 = vmatprep.subr.bf16.mxu0 0
    %2620 = vmatpush1.bf16.msra.mxu0 0
    %2621 = vmatprep.subr.bf16.mxu0 0
    %2622 = vmatpush1.bf16.msra.mxu0 0
    %2623 = vmatprep.subr.bf16.mxu0 0
    %2624 = vmatpush1.bf16.msra.mxu0 0
    %2625 = vmatprep.subr.bf16.mxu0 0
    %2626 = vmatpush1.bf16.msra.mxu0 0
    %2627 = vmatprep.subr.bf16.mxu0 0
    %2628 = vmatpush1.bf16.msra.mxu0 0
    %2629 = vmatprep.subr.bf16.mxu0 0
    %2630 = vmatpush1.bf16.msra.mxu0 0
    %2631 = vmatprep.mubr.bf16.mxu0 0
    %2632 = vmatmul.mubr.bf16.gmra.mrb[0].mxu0 %v2557
    %v2633 = vpop.f32.mrb[0].mxu0
    %v2634 = vadd.f32 0.0, %v2633
    %v2635 = vpop.f32.mrb[0].mxu0
    %v2636 = vadd.f32 0.0, %v2635
    %v2637 = vpop.f32.mrb[0].mxu0
    %v2638 = vpop.f32.mrb[0].mxu0
    %2639 = vdwg.mxu0
    %v2640 = vadd.f32 %v2553, %v2593
    %v2641 = vadd.f32 %v2554, %v2595
    %v2642 = vadd.f32 %v2555, %v2634
    %v2643 = vadd.f32 %v2556, %v2636
    %v2644 = vxor.u32 %v2640, 2147483648
    %v2645 = vmul.f32 %v2644, 1.442695
    %v2646 = vpow.pop %v2645
    %v2647 = vadd.f32 %v2646, 1.0
    %v2648 = vrcp.pop %v2647
    %v2649 = vmul.f32 1.0, %v2648
    %v2650 = vxor.u32 %v2641, 2147483648
    %v2651 = vmul.f32 %v2650, 1.442695
    %v2652 = vpow.pop %v2651
    %v2653 = vadd.f32 %v2652, 1.0
    %v2654 = vrcp.pop %v2653
    %v2655 = vmul.f32 1.0, %v2654
    %v2656 = vtanh.pop %v2642
    %v2657 = vxor.u32 %v2643, 2147483648
    %v2658 = vmul.f32 %v2657, 1.442695
    %v2659 = vpow.pop %v2658
    %v2660 = vadd.f32 %v2659, 1.0
    %v2661 = vrcp.pop %v2660
    %v2662 = vmul.f32 1.0, %v2661
    %v2663 = vmul.f32 %v2655, %v2534
    %v2664 = vmul.f32 %v2649, %v2656
    %v2665 = vadd.f32 %v2663, %v2664
    %v2666 = vtanh.pop %v2665
    %v2667 = vmul.f32 %v2662, %v2666
    %v2668 = vld [vmem:[#allocation4 + $0x20] sm:$0xf]
    %v2669 = vld [vmem:[#allocation4 + $0x28] sm:$0xf]
    %v2670 = vld [vmem:[#allocation4 + $0x30] sm:$0xf]
    %v2671 = vld [vmem:[#allocation4 + $0x38] sm:$0xf]
    %v2672 = vunpack.c.l.bf16 %v2668
    %v2673 = vunpack.c.l.bf16 %v2669
    %v2674 = vunpack.c.l.bf16 %v2670
    %v2675 = vunpack.c.l.bf16 %v2671
    %v2676 = vpack.c.bf16 %v2667, %v2667
    %2677 = vmatprep.subr.bf16.mxu0 %v2364
    %2678 = vmatpush1.bf16.msra.mxu0 %v2363
    %2679 = vmatprep.subr.bf16.mxu0 %v2368
    %2680 = vmatpush1.bf16.msra.mxu0 %v2367
    %2681 = vmatprep.subr.bf16.mxu0 %v2372
    %2682 = vmatpush1.bf16.msra.mxu0 %v2371
    %2683 = vmatprep.subr.bf16.mxu0 %v2376
    %2684 = vmatpush1.bf16.msra.mxu0 %v2375
    %2685 = vmatprep.subr.bf16.mxu0 %v2380
    %2686 = vmatpush1.bf16.msra.mxu0 %v2379
    %2687 = vmatprep.subr.bf16.mxu0 %v2384
    %2688 = vmatpush1.bf16.msra.mxu0 %v2383
    %2689 = vmatprep.subr.bf16.mxu0 %v2388
    %2690 = vmatpush1.bf16.msra.mxu0 %v2387
    %2691 = vmatprep.subr.bf16.mxu0 %v2392
    %2692 = vmatpush1.bf16.msra.mxu0 %v2391
    %2693 = vmatprep.subr.bf16.mxu0 0
    %2694 = vmatpush1.bf16.msra.mxu0 0
    %2695 = vmatprep.subr.bf16.mxu0 0
    %2696 = vmatpush1.bf16.msra.mxu0 0
    %2697 = vmatprep.subr.bf16.mxu0 0
    %2698 = vmatpush1.bf16.msra.mxu0 0
    %2699 = vmatprep.subr.bf16.mxu0 0
    %2700 = vmatpush1.bf16.msra.mxu0 0
    %2701 = vmatprep.subr.bf16.mxu0 0
    %2702 = vmatpush1.bf16.msra.mxu0 0
    %2703 = vmatprep.subr.bf16.mxu0 0
    %2704 = vmatpush1.bf16.msra.mxu0 0
    %2705 = vmatprep.subr.bf16.mxu0 0
    %2706 = vmatpush1.bf16.msra.mxu0 0
    %2707 = vmatprep.subr.bf16.mxu0 0
    %2708 = vmatpush1.bf16.msra.mxu0 0
    %2709 = vmatprep.mubr.bf16.mxu0 0
    %2710 = vmatmul.mubr.bf16.gmra.mrb[0].mxu0 %v2676
    %v2711 = vpop.f32.mrb[0].mxu0
    %v2712 = vadd.f32 0.0, %v2711
    %v2713 = vpop.f32.mrb[0].mxu0
    %v2714 = vadd.f32 0.0, %v2713
    %v2715 = vpop.f32.mrb[0].mxu0
    %v2716 = vpop.f32.mrb[0].mxu0
    %2717 = vdwg.mxu0
    %2718 = vmatprep.subr.bf16.mxu0 %v2366
    %2719 = vmatpush1.bf16.msra.mxu0 %v2365
    %2720 = vmatprep.subr.bf16.mxu0 %v2370
    %2721 = vmatpush1.bf16.msra.mxu0 %v2369
    %2722 = vmatprep.subr.bf16.mxu0 %v2374
    %2723 = vmatpush1.bf16.msra.mxu0 %v2373
    %2724 = vmatprep.subr.bf16.mxu0 %v2378
    %2725 = vmatpush1.bf16.msra.mxu0 %v2377
    %2726 = vmatprep.subr.bf16.mxu0 %v2382
    %2727 = vmatpush1.bf16.msra.mxu0 %v2381
    %2728 = vmatprep.subr.bf16.mxu0 %v2386
    %2729 = vmatpush1.bf16.msra.mxu0 %v2385
    %2730 = vmatprep.subr.bf16.mxu0 %v2390
    %2731 = vmatpush1.bf16.msra.mxu0 %v2389
    %2732 = vmatprep.subr.bf16.mxu0 %v2394
    %2733 = vmatpush1.bf16.msra.mxu0 %v2393
    %2734 = vmatprep.subr.bf16.mxu0 0
    %2735 = vmatpush1.bf16.msra.mxu0 0
    %2736 = vmatprep.subr.bf16.mxu0 0
    %2737 = vmatpush1.bf16.msra.mxu0 0
    %2738 = vmatprep.subr.bf16.mxu0 0
    %2739 = vmatpush1.bf16.msra.mxu0 0
    %2740 = vmatprep.subr.bf16.mxu0 0
    %2741 = vmatpush1.bf16.msra.mxu0 0
    %2742 = vmatprep.subr.bf16.mxu0 0
    %2743 = vmatpush1.bf16.msra.mxu0 0
    %2744 = vmatprep.subr.bf16.mxu0 0
    %2745 = vmatpush1.bf16.msra.mxu0 0
    %2746 = vmatprep.subr.bf16.mxu0 0
    %2747 = vmatpush1.bf16.msra.mxu0 0
    %2748 = vmatprep.subr.bf16.mxu0 0
    %2749 = vmatpush1.bf16.msra.mxu0 0
    %2750 = vmatprep.mubr.bf16.mxu0 0
    %2751 = vmatmul.mubr.bf16.gmra.mrb[0].mxu0 %v2676
    %v2752 = vpop.f32.mrb[0].mxu0
    %v2753 = vadd.f32 0.0, %v2752
    %v2754 = vpop.f32.mrb[0].mxu0
    %v2755 = vadd.f32 0.0, %v2754
    %v2756 = vpop.f32.mrb[0].mxu0
    %v2757 = vpop.f32.mrb[0].mxu0
    %2758 = vdwg.mxu0
    %v2759 = vadd.f32 %v2672, %v2712
    %v2760 = vadd.f32 %v2673, %v2714
    %v2761 = vadd.f32 %v2674, %v2753
    %v2762 = vadd.f32 %v2675, %v2755
    %v2763 = vxor.u32 %v2759, 2147483648
    %v2764 = vmul.f32 %v2763, 1.442695
    %v2765 = vpow.pop %v2764
    %v2766 = vadd.f32 %v2765, 1.0
    %v2767 = vrcp.pop %v2766
    %v2768 = vmul.f32 1.0, %v2767
    %v2769 = vxor.u32 %v2760, 2147483648
    %v2770 = vmul.f32 %v2769, 1.442695
    %v2771 = vpow.pop %v2770
    %v2772 = vadd.f32 %v2771, 1.0
    %v2773 = vrcp.pop %v2772
    %v2774 = vmul.f32 1.0, %v2773
    %v2775 = vtanh.pop %v2761
    %v2776 = vxor.u32 %v2762, 2147483648
    %v2777 = vmul.f32 %v2776, 1.442695
    %v2778 = vpow.pop %v2777
    %v2779 = vadd.f32 %v2778, 1.0
    %v2780 = vrcp.pop %v2779
    %v2781 = vmul.f32 1.0, %v2780
    %v2782 = vmul.f32 %v2774, %v2665
    %v2783 = vmul.f32 %v2768, %v2775
    %v2784 = vadd.f32 %v2782, %v2783
    %v2785 = vtanh.pop %v2784
    %v2786 = vmul.f32 %v2781, %v2785
    %v2787 = vld [vmem:[#allocation4 + $0x20] sm:$0xf0]
    %v2788 = vld [vmem:[#allocation4 + $0x28] sm:$0xf0]
    %v2789 = vld [vmem:[#allocation4 + $0x30] sm:$0xf0]
    %v2790 = vld [vmem:[#allocation4 + $0x38] sm:$0xf0]
    %v2795 = vrot.slane %v2787, 4
    %v2796 = vrot.slane %v2788, 4
    %v2797 = vrot.slane %v2789, 4
    %v2798 = vrot.slane %v2790, 4
    %v2803 = vunpack.c.l.bf16 %v2795
    %v2804 = vunpack.c.l.bf16 %v2796
    %v2805 = vunpack.c.l.bf16 %v2797
    %v2806 = vunpack.c.l.bf16 %v2798
    %v2807 = vpack.c.bf16 %v2786, %v2786
    %2808 = vmatprep.subr.bf16.mxu0 %v2364
    %2809 = vmatpush1.bf16.msra.mxu0 %v2363
    %2810 = vmatprep.subr.bf16.mxu0 %v2368
    %2811 = vmatpush1.bf16.msra.mxu0 %v2367
    %2812 = vmatprep.subr.bf16.mxu0 %v2372
    %2813 = vmatpush1.bf16.msra.mxu0 %v2371
    %2814 = vmatprep.subr.bf16.mxu0 %v2376
    %2815 = vmatpush1.bf16.msra.mxu0 %v2375
    %2816 = vmatprep.subr.bf16.mxu0 %v2380
    %2817 = vmatpush1.bf16.msra.mxu0 %v2379
    %2818 = vmatprep.subr.bf16.mxu0 %v2384
    %2819 = vmatpush1.bf16.msra.mxu0 %v2383
    %2820 = vmatprep.subr.bf16.mxu0 %v2388
    %2821 = vmatpush1.bf16.msra.mxu0 %v2387
    %2822 = vmatprep.subr.bf16.mxu0 %v2392
    %2823 = vmatpush1.bf16.msra.mxu0 %v2391
    %2824 = vmatprep.subr.bf16.mxu0 0
    %2825 = vmatpush1.bf16.msra.mxu0 0
    %2826 = vmatprep.subr.bf16.mxu0 0
    %2827 = vmatpush1.bf16.msra.mxu0 0
    %2828 = vmatprep.subr.bf16.mxu0 0
    %2829 = vmatpush1.bf16.msra.mxu0 0
    %2830 = vmatprep.subr.bf16.mxu0 0
    %2831 = vmatpush1.bf16.msra.mxu0 0
    %2832 = vmatprep.subr.bf16.mxu0 0
    %2833 = vmatpush1.bf16.msra.mxu0 0
    %2834 = vmatprep.subr.bf16.mxu0 0
    %2835 = vmatpush1.bf16.msra.mxu0 0
    %2836 = vmatprep.subr.bf16.mxu0 0
    %2837 = vmatpush1.bf16.msra.mxu0 0
    %2838 = vmatprep.subr.bf16.mxu0 0
    %2839 = vmatpush1.bf16.msra.mxu0 0
    %2840 = vmatprep.mubr.bf16.mxu0 0
    %2841 = vmatmul.mubr.bf16.gmra.mrb[0].mxu0 %v2807
    %v2842 = vpop.f32.mrb[0].mxu0
    %v2843 = vadd.f32 0.0, %v2842
    %v2844 = vpop.f32.mrb[0].mxu0
    %v2845 = vadd.f32 0.0, %v2844
    %v2846 = vpop.f32.mrb[0].mxu0
    %v2847 = vpop.f32.mrb[0].mxu0
    %2848 = vdwg.mxu0
    %2849 = vmatprep.subr.bf16.mxu0 %v2366
    %2850 = vmatpush1.bf16.msra.mxu0 %v2365
    %2851 = vmatprep.subr.bf16.mxu0 %v2370
    %2852 = vmatpush1.bf16.msra.mxu0 %v2369
    %2853 = vmatprep.subr.bf16.mxu0 %v2374
    %2854 = vmatpush1.bf16.msra.mxu0 %v2373
    %2855 = vmatprep.subr.bf16.mxu0 %v2378
    %2856 = vmatpush1.bf16.msra.mxu0 %v2377
    %2857 = vmatprep.subr.bf16.mxu0 %v2382
    %2858 = vmatpush1.bf16.msra.mxu0 %v2381
    %2859 = vmatprep.subr.bf16.mxu0 %v2386
    %2860 = vmatpush1.bf16.msra.mxu0 %v2385
    %2861 = vmatprep.subr.bf16.mxu0 %v2390
    %2862 = vmatpush1.bf16.msra.mxu0 %v2389
    %2863 = vmatprep.subr.bf16.mxu0 %v2394
    %2864 = vmatpush1.bf16.msra.mxu0 %v2393
    %2865 = vmatprep.subr.bf16.mxu0 0
    %2866 = vmatpush1.bf16.msra.mxu0 0
    %2867 = vmatprep.subr.bf16.mxu0 0
    %2868 = vmatpush1.bf16.msra.mxu0 0
    %2869 = vmatprep.subr.bf16.mxu0 0
    %2870 = vmatpush1.bf16.msra.mxu0 0
    %2871 = vmatprep.subr.bf16.mxu0 0
    %2872 = vmatpush1.bf16.msra.mxu0 0
    %2873 = vmatprep.subr.bf16.mxu0 0
    %2874 = vmatpush1.bf16.msra.mxu0 0
    %2875 = vmatprep.subr.bf16.mxu0 0
    %2876 = vmatpush1.bf16.msra.mxu0 0
    %2877 = vmatprep.subr.bf16.mxu0 0
    %2878 = vmatpush1.bf16.msra.mxu0 0
    %2879 = vmatprep.subr.bf16.mxu0 0
    %2880 = vmatpush1.bf16.msra.mxu0 0
    %2881 = vmatprep.mubr.bf16.mxu0 0
    %2882 = vmatmul.mubr.bf16.gmra.mrb[0].mxu0 %v2807
    %v2883 = vpop.f32.mrb[0].mxu0
    %v2884 = vadd.f32 0.0, %v2883
    %v2885 = vpop.f32.mrb[0].mxu0
    %v2886 = vadd.f32 0.0, %v2885
    %v2887 = vpop.f32.mrb[0].mxu0
    %v2888 = vpop.f32.mrb[0].mxu0
    %2889 = vdwg.mxu0
    %v2890 = vadd.f32 %v2803, %v2843
    %v2891 = vadd.f32 %v2804, %v2845
    %v2892 = vadd.f32 %v2805, %v2884
    %v2893 = vadd.f32 %v2806, %v2886
    %v2894 = vxor.u32 %v2890, 2147483648
    %v2895 = vmul.f32 %v2894, 1.442695
    %v2896 = vpow.pop %v2895
    %v2897 = vadd.f32 %v2896, 1.0
    %v2898 = vrcp.pop %v2897
    %v2899 = vmul.f32 1.0, %v2898
    %v2900 = vxor.u32 %v2891, 2147483648
    %v2901 = vmul.f32 %v2900, 1.442695
    %v2902 = vpow.pop %v2901
    %v2903 = vadd.f32 %v2902, 1.0
    %v2904 = vrcp.pop %v2903
    %v2905 = vmul.f32 1.0, %v2904
    %v2906 = vtanh.pop %v2892
    %v2907 = vxor.u32 %v2893, 2147483648
    %v2908 = vmul.f32 %v2907, 1.442695
    %v2909 = vpow.pop %v2908
    %v2910 = vadd.f32 %v2909, 1.0
    %v2911 = vrcp.pop %v2910
    %v2912 = vmul.f32 1.0, %v2911
    %v2913 = vmul.f32 %v2905, %v2784
    %v2914 = vmul.f32 %v2899, %v2906
    %v2915 = vadd.f32 %v2913, %v2914
    %v2916 = vtanh.pop %v2915
    %v2917 = vmul.f32 %v2912, %v2916
    %v2918 = vld [vmem:[#allocation4 + $0x40] sm:$0xf]
    %v2919 = vld [vmem:[#allocation4 + $0x48] sm:$0xf]
    %v2920 = vld [vmem:[#allocation4 + $0x50] sm:$0xf]
    %v2921 = vld [vmem:[#allocation4 + $0x58] sm:$0xf]
    %v2922 = vunpack.c.l.bf16 %v2918
    %v2923 = vunpack.c.l.bf16 %v2919
    %v2924 = vunpack.c.l.bf16 %v2920
    %v2925 = vunpack.c.l.bf16 %v2921
    %v2926 = vpack.c.bf16 %v2917, %v2917
    %2927 = vmatprep.subr.bf16.mxu0 %v2364
    %2928 = vmatpush1.bf16.msra.mxu0 %v2363
    %2929 = vmatprep.subr.bf16.mxu0 %v2368
    %2930 = vmatpush1.bf16.msra.mxu0 %v2367
    %2931 = vmatprep.subr.bf16.mxu0 %v2372
    %2932 = vmatpush1.bf16.msra.mxu0 %v2371
    %2933 = vmatprep.subr.bf16.mxu0 %v2376
    %2934 = vmatpush1.bf16.msra.mxu0 %v2375
    %2935 = vmatprep.subr.bf16.mxu0 %v2380
    %2936 = vmatpush1.bf16.msra.mxu0 %v2379
    %2937 = vmatprep.subr.bf16.mxu0 %v2384
    %2938 = vmatpush1.bf16.msra.mxu0 %v2383
    %2939 = vmatprep.subr.bf16.mxu0 %v2388
    %2940 = vmatpush1.bf16.msra.mxu0 %v2387
    %2941 = vmatprep.subr.bf16.mxu0 %v2392
    %2942 = vmatpush1.bf16.msra.mxu0 %v2391
    %2943 = vmatprep.subr.bf16.mxu0 0
    %2944 = vmatpush1.bf16.msra.mxu0 0
    %2945 = vmatprep.subr.bf16.mxu0 0
    %2946 = vmatpush1.bf16.msra.mxu0 0
    %2947 = vmatprep.subr.bf16.mxu0 0
    %2948 = vmatpush1.bf16.msra.mxu0 0
    %2949 = vmatprep.subr.bf16.mxu0 0
    %2950 = vmatpush1.bf16.msra.mxu0 0
    %2951 = vmatprep.subr.bf16.mxu0 0
    %2952 = vmatpush1.bf16.msra.mxu0 0
    %2953 = vmatprep.subr.bf16.mxu0 0
    %2954 = vmatpush1.bf16.msra.mxu0 0
    %2955 = vmatprep.subr.bf16.mxu0 0
    %2956 = vmatpush1.bf16.msra.mxu0 0
    %2957 = vmatprep.subr.bf16.mxu0 0
    %2958 = vmatpush1.bf16.msra.mxu0 0
    %2959 = vmatprep.mubr.bf16.mxu0 0
    %2960 = vmatmul.mubr.bf16.gmra.mrb[0].mxu0 %v2926
    %v2961 = vpop.f32.mrb[0].mxu0
    %v2962 = vadd.f32 0.0, %v2961
    %v2963 = vpop.f32.mrb[0].mxu0
    %v2964 = vadd.f32 0.0, %v2963
    %v2965 = vpop.f32.mrb[0].mxu0
    %v2966 = vpop.f32.mrb[0].mxu0
    %2967 = vdwg.mxu0
    %2968 = vmatprep.subr.bf16.mxu0 %v2366
    %2969 = vmatpush1.bf16.msra.mxu0 %v2365
    %2970 = vmatprep.subr.bf16.mxu0 %v2370
    %2971 = vmatpush1.bf16.msra.mxu0 %v2369
    %2972 = vmatprep.subr.bf16.mxu0 %v2374
    %2973 = vmatpush1.bf16.msra.mxu0 %v2373
    %2974 = vmatprep.subr.bf16.mxu0 %v2378
    %2975 = vmatpush1.bf16.msra.mxu0 %v2377
    %2976 = vmatprep.subr.bf16.mxu0 %v2382
    %2977 = vmatpush1.bf16.msra.mxu0 %v2381
    %2978 = vmatprep.subr.bf16.mxu0 %v2386
    %2979 = vmatpush1.bf16.msra.mxu0 %v2385
    %2980 = vmatprep.subr.bf16.mxu0 %v2390
    %2981 = vmatpush1.bf16.msra.mxu0 %v2389
    %2982 = vmatprep.subr.bf16.mxu0 %v2394
    %2983 = vmatpush1.bf16.msra.mxu0 %v2393
    %2984 = vmatprep.subr.bf16.mxu0 0
    %2985 = vmatpush1.bf16.msra.mxu0 0
    %2986 = vmatprep.subr.bf16.mxu0 0
    %2987 = vmatpush1.bf16.msra.mxu0 0
    %2988 = vmatprep.subr.bf16.mxu0 0
    %2989 = vmatpush1.bf16.msra.mxu0 0
    %2990 = vmatprep.subr.bf16.mxu0 0
    %2991 = vmatpush1.bf16.msra.mxu0 0
    %2992 = vmatprep.subr.bf16.mxu0 0
    %2993 = vmatpush1.bf16.msra.mxu0 0
    %2994 = vmatprep.subr.bf16.mxu0 0
    %2995 = vmatpush1.bf16.msra.mxu0 0
    %2996 = vmatprep.subr.bf16.mxu0 0
    %2997 = vmatpush1.bf16.msra.mxu0 0
    %2998 = vmatprep.subr.bf16.mxu0 0
    %2999 = vmatpush1.bf16.msra.mxu0 0
    %3000 = vmatprep.mubr.bf16.mxu0 0
    %3001 = vmatmul.mubr.bf16.gmra.mrb[0].mxu0 %v2926
    %v3002 = vpop.f32.mrb[0].mxu0
    %v3003 = vadd.f32 0.0, %v3002
    %v3004 = vpop.f32.mrb[0].mxu0
    %v3005 = vadd.f32 0.0, %v3004
    %v3006 = vpop.f32.mrb[0].mxu0
    %v3007 = vpop.f32.mrb[0].mxu0
    %3008 = vdwg.mxu0
    %v3009 = vadd.f32 %v2922, %v2962
    %v3010 = vadd.f32 %v2923, %v2964
    %v3011 = vadd.f32 %v2924, %v3003
    %v3012 = vadd.f32 %v2925, %v3005
    %v3013 = vxor.u32 %v3009, 2147483648
    %v3014 = vmul.f32 %v3013, 1.442695
    %v3015 = vpow.pop %v3014
    %v3016 = vadd.f32 %v3015, 1.0
    %v3017 = vrcp.pop %v3016
    %v3018 = vmul.f32 1.0, %v3017
    %v3019 = vxor.u32 %v3010, 2147483648
    %v3020 = vmul.f32 %v3019, 1.442695
    %v3021 = vpow.pop %v3020
    %v3022 = vadd.f32 %v3021, 1.0
    %v3023 = vrcp.pop %v3022
    %v3024 = vmul.f32 1.0, %v3023
    %v3025 = vtanh.pop %v3011
    %v3026 = vxor.u32 %v3012, 2147483648
    %v3027 = vmul.f32 %v3026, 1.442695
    %v3028 = vpow.pop %v3027
    %v3029 = vadd.f32 %v3028, 1.0
    %v3030 = vrcp.pop %v3029
    %v3031 = vmul.f32 1.0, %v3030
    %v3032 = vmul.f32 %v3024, %v2915
    %v3033 = vmul.f32 %v3018, %v3025
    %v3034 = vadd.f32 %v3032, %v3033
    %v3035 = vtanh.pop %v3034
    %v3036 = vmul.f32 %v3031, %v3035
    %v3037 = vld [vmem:[#allocation4 + $0x40] sm:$0xf0]
    %v3038 = vld [vmem:[#allocation4 + $0x48] sm:$0xf0]
    %v3039 = vld [vmem:[#allocation4 + $0x50] sm:$0xf0]
    %v3040 = vld [vmem:[#allocation4 + $0x58] sm:$0xf0]
    %v3045 = vrot.slane %v3037, 4
    %v3046 = vrot.slane %v3038, 4
    %v3047 = vrot.slane %v3039, 4
    %v3048 = vrot.slane %v3040, 4
    %v3053 = vunpack.c.l.bf16 %v3045
    %v3054 = vunpack.c.l.bf16 %v3046
    %v3055 = vunpack.c.l.bf16 %v3047
    %v3056 = vunpack.c.l.bf16 %v3048
    %v3057 = vpack.c.bf16 %v3036, %v3036
    %3058 = vmatprep.subr.bf16.mxu0 %v2364
    %3059 = vmatpush1.bf16.msra.mxu0 %v2363
    %3060 = vmatprep.subr.bf16.mxu0 %v2368
    %3061 = vmatpush1.bf16.msra.mxu0 %v2367
    %3062 = vmatprep.subr.bf16.mxu0 %v2372
    %3063 = vmatpush1.bf16.msra.mxu0 %v2371
    %3064 = vmatprep.subr.bf16.mxu0 %v2376
    %3065 = vmatpush1.bf16.msra.mxu0 %v2375
    %3066 = vmatprep.subr.bf16.mxu0 %v2380
    %3067 = vmatpush1.bf16.msra.mxu0 %v2379
    %3068 = vmatprep.subr.bf16.mxu0 %v2384
    %3069 = vmatpush1.bf16.msra.mxu0 %v2383
    %3070 = vmatprep.subr.bf16.mxu0 %v2388
    %3071 = vmatpush1.bf16.msra.mxu0 %v2387
    %3072 = vmatprep.subr.bf16.mxu0 %v2392
    %3073 = vmatpush1.bf16.msra.mxu0 %v2391
    %3074 = vmatprep.subr.bf16.mxu0 0
    %3075 = vmatpush1.bf16.msra.mxu0 0
    %3076 = vmatprep.subr.bf16.mxu0 0
    %3077 = vmatpush1.bf16.msra.mxu0 0
    %3078 = vmatprep.subr.bf16.mxu0 0
    %3079 = vmatpush1.bf16.msra.mxu0 0
    %3080 = vmatprep.subr.bf16.mxu0 0
    %3081 = vmatpush1.bf16.msra.mxu0 0
    %3082 = vmatprep.subr.bf16.mxu0 0
    %3083 = vmatpush1.bf16.msra.mxu0 0
    %3084 = vmatprep.subr.bf16.mxu0 0
    %3085 = vmatpush1.bf16.msra.mxu0 0
    %3086 = vmatprep.subr.bf16.mxu0 0
    %3087 = vmatpush1.bf16.msra.mxu0 0
    %3088 = vmatprep.subr.bf16.mxu0 0
    %3089 = vmatpush1.bf16.msra.mxu0 0
    %3090 = vmatprep.mubr.bf16.mxu0 0
    %3091 = vmatmul.mubr.bf16.gmra.mrb[0].mxu0 %v3057
    %v3092 = vpop.f32.mrb[0].mxu0
    %v3093 = vadd.f32 0.0, %v3092
    %v3094 = vpop.f32.mrb[0].mxu0
    %v3095 = vadd.f32 0.0, %v3094
    %v3096 = vpop.f32.mrb[0].mxu0
    %v3097 = vpop.f32.mrb[0].mxu0
    %3098 = vdwg.mxu0
    %3099 = vmatprep.subr.bf16.mxu0 %v2366
    %3100 = vmatpush1.bf16.msra.mxu0 %v2365
    %3101 = vmatprep.subr.bf16.mxu0 %v2370
    %3102 = vmatpush1.bf16.msra.mxu0 %v2369
    %3103 = vmatprep.subr.bf16.mxu0 %v2374
    %3104 = vmatpush1.bf16.msra.mxu0 %v2373
    %3105 = vmatprep.subr.bf16.mxu0 %v2378
    %3106 = vmatpush1.bf16.msra.mxu0 %v2377
    %3107 = vmatprep.subr.bf16.mxu0 %v2382
    %3108 = vmatpush1.bf16.msra.mxu0 %v2381
    %3109 = vmatprep.subr.bf16.mxu0 %v2386
    %3110 = vmatpush1.bf16.msra.mxu0 %v2385
    %3111 = vmatprep.subr.bf16.mxu0 %v2390
    %3112 = vmatpush1.bf16.msra.mxu0 %v2389
    %3113 = vmatprep.subr.bf16.mxu0 %v2394
    %3114 = vmatpush1.bf16.msra.mxu0 %v2393
    %3115 = vmatprep.subr.bf16.mxu0 0
    %3116 = vmatpush1.bf16.msra.mxu0 0
    %3117 = vmatprep.subr.bf16.mxu0 0
    %3118 = vmatpush1.bf16.msra.mxu0 0
    %3119 = vmatprep.subr.bf16.mxu0 0
    %3120 = vmatpush1.bf16.msra.mxu0 0
    %3121 = vmatprep.subr.bf16.mxu0 0
    %3122 = vmatpush1.bf16.msra.mxu0 0
    %3123 = vmatprep.subr.bf16.mxu0 0
    %3124 = vmatpush1.bf16.msra.mxu0 0
    %3125 = vmatprep.subr.bf16.mxu0 0
    %3126 = vmatpush1.bf16.msra.mxu0 0
    %3127 = vmatprep.subr.bf16.mxu0 0
    %3128 = vmatpush1.bf16.msra.mxu0 0
    %3129 = vmatprep.subr.bf16.mxu0 0
    %3130 = vmatpush1.bf16.msra.mxu0 0
    %3131 = vmatprep.mubr.bf16.mxu0 0
    %3132 = vmatmul.mubr.bf16.gmra.mrb[0].mxu0 %v3057
    %v3133 = vpop.f32.mrb[0].mxu0
    %v3134 = vadd.f32 0.0, %v3133
    %v3135 = vpop.f32.mrb[0].mxu0
    %v3136 = vadd.f32 0.0, %v3135
    %v3137 = vpop.f32.mrb[0].mxu0
    %v3138 = vpop.f32.mrb[0].mxu0
    %3139 = vdwg.mxu0
    %v3140 = vadd.f32 %v3053, %v3093
    %v3141 = vadd.f32 %v3054, %v3095
    %v3142 = vadd.f32 %v3055, %v3134
    %v3143 = vadd.f32 %v3056, %v3136
    %v3144 = vxor.u32 %v3140, 2147483648
    %v3145 = vmul.f32 %v3144, 1.442695
    %v3146 = vpow.pop %v3145
    %v3147 = vadd.f32 %v3146, 1.0
    %v3148 = vrcp.pop %v3147
    %v3149 = vmul.f32 1.0, %v3148
    %v3150 = vxor.u32 %v3141, 2147483648
    %v3151 = vmul.f32 %v3150, 1.442695
    %v3152 = vpow.pop %v3151
    %v3153 = vadd.f32 %v3152, 1.0
    %v3154 = vrcp.pop %v3153
    %v3155 = vmul.f32 1.0, %v3154
    %v3156 = vtanh.pop %v3142
    %v3157 = vxor.u32 %v3143, 2147483648
    %v3158 = vmul.f32 %v3157, 1.442695
    %v3159 = vpow.pop %v3158
    %v3160 = vadd.f32 %v3159, 1.0
    %v3161 = vrcp.pop %v3160
    %v3162 = vmul.f32 1.0, %v3161
    %v3163 = vmul.f32 %v3155, %v3034
    %v3164 = vmul.f32 %v3149, %v3156
    %v3165 = vadd.f32 %v3163, %v3164
    %v3166 = vtanh.pop %v3165
    %v3167 = vmul.f32 %v3162, %v3166
    %v3168 = vld [vmem:[#allocation4 + $0x60] sm:$0xf]
    %v3169 = vld [vmem:[#allocation4 + $0x68] sm:$0xf]
    %v3170 = vld [vmem:[#allocation4 + $0x70] sm:$0xf]
    %v3171 = vld [vmem:[#allocation4 + $0x78] sm:$0xf]
    %v3172 = vunpack.c.l.bf16 %v3168
    %v3173 = vunpack.c.l.bf16 %v3169
    %v3174 = vunpack.c.l.bf16 %v3170
    %v3175 = vunpack.c.l.bf16 %v3171
    %v3176 = vpack.c.bf16 %v3167, %v3167
    %3177 = vmatprep.subr.bf16.mxu0 %v2364
    %3178 = vmatpush1.bf16.msra.mxu0 %v2363
    %3179 = vmatprep.subr.bf16.mxu0 %v2368
    %3180 = vmatpush1.bf16.msra.mxu0 %v2367
    %3181 = vmatprep.subr.bf16.mxu0 %v2372
    %3182 = vmatpush1.bf16.msra.mxu0 %v2371
    %3183 = vmatprep.subr.bf16.mxu0 %v2376
    %3184 = vmatpush1.bf16.msra.mxu0 %v2375
    %3185 = vmatprep.subr.bf16.mxu0 %v2380
    %3186 = vmatpush1.bf16.msra.mxu0 %v2379
    %3187 = vmatprep.subr.bf16.mxu0 %v2384
    %3188 = vmatpush1.bf16.msra.mxu0 %v2383
    %3189 = vmatprep.subr.bf16.mxu0 %v2388
    %3190 = vmatpush1.bf16.msra.mxu0 %v2387
    %3191 = vmatprep.subr.bf16.mxu0 %v2392
    %3192 = vmatpush1.bf16.msra.mxu0 %v2391
    %3193 = vmatprep.subr.bf16.mxu0 0
    %3194 = vmatpush1.bf16.msra.mxu0 0
    %3195 = vmatprep.subr.bf16.mxu0 0
    %3196 = vmatpush1.bf16.msra.mxu0 0
    %3197 = vmatprep.subr.bf16.mxu0 0
    %3198 = vmatpush1.bf16.msra.mxu0 0
    %3199 = vmatprep.subr.bf16.mxu0 0
    %3200 = vmatpush1.bf16.msra.mxu0 0
    %3201 = vmatprep.subr.bf16.mxu0 0
    %3202 = vmatpush1.bf16.msra.mxu0 0
    %3203 = vmatprep.subr.bf16.mxu0 0
    %3204 = vmatpush1.bf16.msra.mxu0 0
    %3205 = vmatprep.subr.bf16.mxu0 0
    %3206 = vmatpush1.bf16.msra.mxu0 0
    %3207 = vmatprep.subr.bf16.mxu0 0
    %3208 = vmatpush1.bf16.msra.mxu0 0
    %3209 = vmatprep.mubr.bf16.mxu0 0
    %3210 = vmatmul.mubr.bf16.gmra.mrb[0].mxu0 %v3176
    %v3211 = vpop.f32.mrb[0].mxu0
    %v3212 = vadd.f32 0.0, %v3211
    %v3213 = vpop.f32.mrb[0].mxu0
    %v3214 = vadd.f32 0.0, %v3213
    %v3215 = vpop.f32.mrb[0].mxu0
    %v3216 = vpop.f32.mrb[0].mxu0
    %3217 = vdwg.mxu0
    %3218 = vmatprep.subr.bf16.mxu0 %v2366
    %3219 = vmatpush1.bf16.msra.mxu0 %v2365
    %3220 = vmatprep.subr.bf16.mxu0 %v2370
    %3221 = vmatpush1.bf16.msra.mxu0 %v2369
    %3222 = vmatprep.subr.bf16.mxu0 %v2374
    %3223 = vmatpush1.bf16.msra.mxu0 %v2373
    %3224 = vmatprep.subr.bf16.mxu0 %v2378
    %3225 = vmatpush1.bf16.msra.mxu0 %v2377
    %3226 = vmatprep.subr.bf16.mxu0 %v2382
    %3227 = vmatpush1.bf16.msra.mxu0 %v2381
    %3228 = vmatprep.subr.bf16.mxu0 %v2386
    %3229 = vmatpush1.bf16.msra.mxu0 %v2385
    %3230 = vmatprep.subr.bf16.mxu0 %v2390
    %3231 = vmatpush1.bf16.msra.mxu0 %v2389
    %3232 = vmatprep.subr.bf16.mxu0 %v2394
    %3233 = vmatpush1.bf16.msra.mxu0 %v2393
    %3234 = vmatprep.subr.bf16.mxu0 0
    %3235 = vmatpush1.bf16.msra.mxu0 0
    %3236 = vmatprep.subr.bf16.mxu0 0
    %3237 = vmatpush1.bf16.msra.mxu0 0
    %3238 = vmatprep.subr.bf16.mxu0 0
    %3239 = vmatpush1.bf16.msra.mxu0 0
    %3240 = vmatprep.subr.bf16.mxu0 0
    %3241 = vmatpush1.bf16.msra.mxu0 0
    %3242 = vmatprep.subr.bf16.mxu0 0
    %3243 = vmatpush1.bf16.msra.mxu0 0
    %3244 = vmatprep.subr.bf16.mxu0 0
    %3245 = vmatpush1.bf16.msra.mxu0 0
    %3246 = vmatprep.subr.bf16.mxu0 0
    %3247 = vmatpush1.bf16.msra.mxu0 0
    %3248 = vmatprep.subr.bf16.mxu0 0
    %3249 = vmatpush1.bf16.msra.mxu0 0
    %3250 = vmatprep.mubr.bf16.mxu0 0
    %3251 = vmatmul.mubr.bf16.gmra.mrb[0].mxu0 %v3176
    %v3252 = vpop.f32.mrb[0].mxu0
    %v3253 = vadd.f32 0.0, %v3252
    %v3254 = vpop.f32.mrb[0].mxu0
    %v3255 = vadd.f32 0.0, %v3254
    %v3256 = vpop.f32.mrb[0].mxu0
    %v3257 = vpop.f32.mrb[0].mxu0
    %3258 = vdwg.mxu0
    %v3259 = vadd.f32 %v3172, %v3212
    %v3260 = vadd.f32 %v3173, %v3214
    %v3261 = vadd.f32 %v3174, %v3253
    %v3262 = vadd.f32 %v3175, %v3255
    %v3263 = vxor.u32 %v3259, 2147483648
    %v3264 = vmul.f32 %v3263, 1.442695
    %v3265 = vpow.pop %v3264
    %v3266 = vadd.f32 %v3265, 1.0
    %v3267 = vrcp.pop %v3266
    %v3268 = vmul.f32 1.0, %v3267
    %v3269 = vxor.u32 %v3260, 2147483648
    %v3270 = vmul.f32 %v3269, 1.442695
    %v3271 = vpow.pop %v3270
    %v3272 = vadd.f32 %v3271, 1.0
    %v3273 = vrcp.pop %v3272
    %v3274 = vmul.f32 1.0, %v3273
    %v3275 = vtanh.pop %v3261
    %v3276 = vxor.u32 %v3262, 2147483648
    %v3277 = vmul.f32 %v3276, 1.442695
    %v3278 = vpow.pop %v3277
    %v3279 = vadd.f32 %v3278, 1.0
    %v3280 = vrcp.pop %v3279
    %v3281 = vmul.f32 1.0, %v3280
    %v3282 = vmul.f32 %v3274, %v3165
    %v3283 = vmul.f32 %v3268, %v3275
    %v3284 = vadd.f32 %v3282, %v3283
    %v3285 = vtanh.pop %v3284
    %v3286 = vmul.f32 %v3281, %v3285
    %v3287 = vld [vmem:[#allocation4 + $0x60] sm:$0xf0]
    %v3288 = vld [vmem:[#allocation4 + $0x68] sm:$0xf0]
    %v3289 = vld [vmem:[#allocation4 + $0x70] sm:$0xf0]
    %v3290 = vld [vmem:[#allocation4 + $0x78] sm:$0xf0]
    %v3295 = vrot.slane %v3287, 4
    %v3296 = vrot.slane %v3288, 4
    %v3297 = vrot.slane %v3289, 4
    %v3298 = vrot.slane %v3290, 4
    %v3303 = vunpack.c.l.bf16 %v3295
    %v3304 = vunpack.c.l.bf16 %v3296
    %v3305 = vunpack.c.l.bf16 %v3297
    %v3306 = vunpack.c.l.bf16 %v3298
    %v3307 = vpack.c.bf16 %v3286, %v3286
    %3308 = vmatprep.subr.bf16.mxu0 %v2364
    %3309 = vmatpush1.bf16.msra.mxu0 %v2363
    %3310 = vmatprep.subr.bf16.mxu0 %v2368
    %3311 = vmatpush1.bf16.msra.mxu0 %v2367
    %3312 = vmatprep.subr.bf16.mxu0 %v2372
    %3313 = vmatpush1.bf16.msra.mxu0 %v2371
    %3314 = vmatprep.subr.bf16.mxu0 %v2376
    %3315 = vmatpush1.bf16.msra.mxu0 %v2375
    %3316 = vmatprep.subr.bf16.mxu0 %v2380
    %3317 = vmatpush1.bf16.msra.mxu0 %v2379
    %3318 = vmatprep.subr.bf16.mxu0 %v2384
    %3319 = vmatpush1.bf16.msra.mxu0 %v2383
    %3320 = vmatprep.subr.bf16.mxu0 %v2388
    %3321 = vmatpush1.bf16.msra.mxu0 %v2387
    %3322 = vmatprep.subr.bf16.mxu0 %v2392
    %3323 = vmatpush1.bf16.msra.mxu0 %v2391
    %3324 = vmatprep.subr.bf16.mxu0 0
    %3325 = vmatpush1.bf16.msra.mxu0 0
    %3326 = vmatprep.subr.bf16.mxu0 0
    %3327 = vmatpush1.bf16.msra.mxu0 0
    %3328 = vmatprep.subr.bf16.mxu0 0
    %3329 = vmatpush1.bf16.msra.mxu0 0
    %3330 = vmatprep.subr.bf16.mxu0 0
    %3331 = vmatpush1.bf16.msra.mxu0 0
    %3332 = vmatprep.subr.bf16.mxu0 0
    %3333 = vmatpush1.bf16.msra.mxu0 0
    %3334 = vmatprep.subr.bf16.mxu0 0
    %3335 = vmatpush1.bf16.msra.mxu0 0
    %3336 = vmatprep.subr.bf16.mxu0 0
    %3337 = vmatpush1.bf16.msra.mxu0 0
    %3338 = vmatprep.subr.bf16.mxu0 0
    %3339 = vmatpush1.bf16.msra.mxu0 0
    %3340 = vmatprep.mubr.bf16.mxu0 0
    %3341 = vmatmul.mubr.bf16.gmra.mrb[0].mxu0 %v3307
    %v3342 = vpop.f32.mrb[0].mxu0
    %v3343 = vadd.f32 0.0, %v3342
    %v3344 = vpop.f32.mrb[0].mxu0
    %v3345 = vadd.f32 0.0, %v3344
    %v3346 = vpop.f32.mrb[0].mxu0
    %v3347 = vpop.f32.mrb[0].mxu0
    %3348 = vdwg.mxu0
    %3349 = vmatprep.subr.bf16.mxu0 %v2366
    %3350 = vmatpush1.bf16.msra.mxu0 %v2365
    %3351 = vmatprep.subr.bf16.mxu0 %v2370
    %3352 = vmatpush1.bf16.msra.mxu0 %v2369
    %3353 = vmatprep.subr.bf16.mxu0 %v2374
    %3354 = vmatpush1.bf16.msra.mxu0 %v2373
    %3355 = vmatprep.subr.bf16.mxu0 %v2378
    %3356 = vmatpush1.bf16.msra.mxu0 %v2377
    %3357 = vmatprep.subr.bf16.mxu0 %v2382
    %3358 = vmatpush1.bf16.msra.mxu0 %v2381
    %3359 = vmatprep.subr.bf16.mxu0 %v2386
    %3360 = vmatpush1.bf16.msra.mxu0 %v2385
    %3361 = vmatprep.subr.bf16.mxu0 %v2390
    %3362 = vmatpush1.bf16.msra.mxu0 %v2389
    %3363 = vmatprep.subr.bf16.mxu0 %v2394
    %3364 = vmatpush1.bf16.msra.mxu0 %v2393
    %3365 = vmatprep.subr.bf16.mxu0 0
    %3366 = vmatpush1.bf16.msra.mxu0 0
    %3367 = vmatprep.subr.bf16.mxu0 0
    %3368 = vmatpush1.bf16.msra.mxu0 0
    %3369 = vmatprep.subr.bf16.mxu0 0
    %3370 = vmatpush1.bf16.msra.mxu0 0
    %3371 = vmatprep.subr.bf16.mxu0 0
    %3372 = vmatpush1.bf16.msra.mxu0 0
    %3373 = vmatprep.subr.bf16.mxu0 0
    %3374 = vmatpush1.bf16.msra.mxu0 0
    %3375 = vmatprep.subr.bf16.mxu0 0
    %3376 = vmatpush1.bf16.msra.mxu0 0
    %3377 = vmatprep.subr.bf16.mxu0 0
    %3378 = vmatpush1.bf16.msra.mxu0 0
    %3379 = vmatprep.subr.bf16.mxu0 0
    %3380 = vmatpush1.bf16.msra.mxu0 0
    %3381 = vmatprep.mubr.bf16.mxu0 0
    %3382 = vmatmul.mubr.bf16.gmra.mrb[0].mxu0 %v3307
    %v3383 = vpop.f32.mrb[0].mxu0
    %v3384 = vadd.f32 0.0, %v3383
    %v3385 = vpop.f32.mrb[0].mxu0
    %v3386 = vadd.f32 0.0, %v3385
    %v3387 = vpop.f32.mrb[0].mxu0
    %v3388 = vpop.f32.mrb[0].mxu0
    %3389 = vdwg.mxu0
    %v3390 = vadd.f32 %v3303, %v3343
    %v3391 = vadd.f32 %v3304, %v3345
    %v3392 = vadd.f32 %v3305, %v3384
    %v3393 = vadd.f32 %v3306, %v3386
    %v3394 = vxor.u32 %v3390, 2147483648
    %v3395 = vmul.f32 %v3394, 1.442695
    %v3396 = vpow.pop %v3395
    %v3397 = vadd.f32 %v3396, 1.0
    %v3398 = vrcp.pop %v3397
    %v3399 = vmul.f32 1.0, %v3398
    %v3400 = vxor.u32 %v3391, 2147483648
    %v3401 = vmul.f32 %v3400, 1.442695
    %v3402 = vpow.pop %v3401
    %v3403 = vadd.f32 %v3402, 1.0
    %v3404 = vrcp.pop %v3403
    %v3405 = vmul.f32 1.0, %v3404
    %v3406 = vtanh.pop %v3392
    %v3407 = vxor.u32 %v3393, 2147483648
    %v3408 = vmul.f32 %v3407, 1.442695
    %v3409 = vpow.pop %v3408
    %v3410 = vadd.f32 %v3409, 1.0
    %v3411 = vrcp.pop %v3410
    %v3412 = vmul.f32 1.0, %v3411
    %v3413 = vmul.f32 %v3405, %v3284
    %v3414 = vmul.f32 %v3399, %v3406
    %v3415 = vadd.f32 %v3413, %v3414
    %v3416 = vtanh.pop %v3415
    %v3417 = vmul.f32 %v3412, %v3416
    %3418 = vst [vmem:[#allocation11] sm:$0xff] %v3417
    // Predicated region
    $region42: #{tpu_custom_call.1} parent=1 // pred_check
      _
    $region43: #{tpu_custom_call.1} parent=1 // pred_check_branch
      %3420 = sbr.rel (0) target = $region45
    $region44: #{tpu_custom_call.1} parent=1 // pred_region
      %s3422 = ssub.s32 128, 128
      %3423 = vsyncadd [#allocation7], %s3422
      %s3425 = sshll.u32 [#allocation11], 4
      %s3426 = int_to_ptr.vmem [resolvable:$true] %s3425
      %3428 = dma.vmem_to_hbm [thread:$0]  %s3426, 128, %s7, [#allocation7]
    $region45: #{tpu_custom_call.1} parent=1 // pred_fallthru
      _
    // Predicated region
    $region46: #{tpu_custom_call.1} parent=1 // pred_check
      _
    $region47: #{tpu_custom_call.1} parent=1 // pred_check_branch
      %3430 = sbr.rel (0) target = $region49
    $region48: #{tpu_custom_call.1} parent=1 // pred_region
      %3431 = dma.done [#allocation7], 128
    $region49: #{tpu_custom_call.1} parent=1 // pred_fallthru
      _
    %3432 = vsyncpa [#allocation6], 1
    %3433 = vsyncpa [#allocation9], 1
    %3434 = vsyncpa [#allocation7], 1

</llo_original>
